<compile_context>
chip_gen: v5e
topology: v5e:2x2
jax: 0.10.0
libtpu: 0.0.40
codegen_flags: <defaults>
</compile_context>

<pallas_src>
import functools

import jax
import jax.numpy as jnp
from jax import lax
from jax.experimental import pallas as pl
from jax.experimental.pallas import tpu as pltpu


# ----------------------------- in-kernel helpers -----------------------------

def _mish(v):
    # mish(x) = x * tanh(softplus(x)) = x - 2x / (e^x*(e^x + 2) + 2)
    u = jnp.exp(v)
    return v - 2.0 * v / (u * (u + 2.0) + 2.0)


def _sigmoid(v):
    return 1.0 / (1.0 + jnp.exp(-v))


def _residual_group_kernel(nb, H, W, C, NP, S,
                           mask_ref, x_ref, w1_ref, b1_ref, w2_ref, b2_ref,
                           caw1_ref, cab1_ref, caw2_ref, cab2_ref,
                           saw_ref, tw_ref, tb_ref,
                           o_ref, pad_a_ref, pad_b_ref, sa_pad_ref):
    Wp = W + 2
    N = H * Wp                 # flat spatial extent carried on lanes
    base = S - Wp - 1          # tap-0 read offset into the padded slabs
    inv_hw = 1.0 / float(H * W)

    # Zero only the slab margins (everything outside [S, S+N)); the in-slab
    # padding columns are re-zeroed by the mask on every interior store.  Done
    # every grid step (a few hundred lanes, cheap) so it stays correct when the
    # "parallel" batch axis is split across TensorCores.
    for ref in (pad_a_ref, pad_b_ref, sa_pad_ref):
        ref[:, 0:S] = jnp.zeros((ref.shape[0], S), ref.dtype)
        ref[:, S + N:NP] = jnp.zeros((ref.shape[0], NP - S - N), ref.dtype)

    mask = mask_ref[...]       # (1, N): 1 at valid pixels, 0 at the 2 pad cols / row

    def store_slab(dst_ref, val):             # val: (C, N) f32
        dst_ref[:, S:S + N] = (val * mask).astype(dst_ref.dtype)

    def conv3x3(src_ref, w9, b_col):          # w9: (9, Cout, Cin); b_col: (C, 1)
        acc = jnp.dot(w9[0], src_ref[:, base:base + N],
                      preferred_element_type=jnp.float32)
        for k in range(1, 9):                 # unrolled taps: shifted-view matmuls
            off = base + (k // 3) * Wp + (k % 3)
            acc = acc + jnp.dot(w9[k], src_ref[:, off:off + N],
                                preferred_element_type=jnp.float32)
        return acc + b_col

    x0 = x_ref[0][:, S:S + N]                 # (C, N); pad columns already zero

    def rfab_block(blk, x):
        store_slab(pad_a_ref, x)                                     # padded input
        r = _mish(conv3x3(pad_a_ref, w1_ref[blk], b1_ref[blk]))
        store_slab(pad_b_ref, r)
        r = conv3x3(pad_b_ref, w2_ref[blk], b2_ref[blk]) * mask
        # ---- channel attention (tiny tensors, exact sigmoid) ----
        y = jnp.sum(r, axis=1, keepdims=True) * inv_hw               # (C, 1)
        z1 = jnp.maximum(
            jnp.sum(caw1_ref[blk] * y, axis=0, keepdims=True) + cab1_ref[blk],
            0.0)                                                     # (1, Cr)
        z2 = (jnp.sum(caw2_ref[blk] * z1, axis=1, keepdims=True)
              + cab2_ref[blk])                                       # (C, 1)
        r = r * _sigmoid(z2)
        # ---- spatial attention (channel-major planes, lane-dense) ----
        sa_pad_ref[0:1, S:S + N] = jnp.mean(r, axis=0, keepdims=True)
        sa_pad_ref[1:2, S:S + N] = jnp.max(r, axis=0, keepdims=True)
        sawb = saw_ref[blk]                                          # (9, 2, 1)
        sacc = sawb[0] * sa_pad_ref[:, base:base + N]
        for k in range(1, 9):
            off = base + (k // 3) * Wp + (k % 3)
            sacc = sacc + sawb[k] * sa_pad_ref[:, off:off + N]
        gate = _sigmoid(jnp.sum(sacc, axis=0, keepdims=True))        # (1, N)
        return r * gate + x                                          # RFAB residual

    x = lax.fori_loop(0, nb, rfab_block, x0)

    # tail ConvBlock (conv3x3 + Mish), then the ResidualGroup skip.
    store_slab(pad_a_ref, x)
    r = _mish(conv3x3(pad_a_ref, tw_ref[...], tb_ref[...]))
    o_ref[0] = ((r + x0) * mask).astype(o_ref.dtype)


# --------------------------------- wrapper -----------------------------------

def residual_group_pallas(x, params, use_bf16_matmul=False):
    """x: (B, C, H, W) float32 (NCHW, as in the PyTorch module)."""
    B, C, H, W = x.shape
    rfab = params["rfab"]
    nb = len(rfab)
    Cr = rfab[0]["ca_w1"].shape[-1]
    Hp, Wp = H + 2, W + 2
    N = H * Wp                                   # flat spatial extent (lanes)
    S = -(-(Wp + 1) // 128) * 128                # 128-aligned interior base
    NP = -(-(S + N + Wp + 1) // 128) * 128       # padded scratch lane extent
    mm_dtype = jnp.bfloat16 if use_bf16_matmul else jnp.float32

    def taps(w):  # HWIO (3,3,Ci,Co) -> (9, Co, Ci) per-tap matmul LHS
        return w.transpose(0, 1, 3, 2).reshape(9, w.shape[3], w.shape[2])

    w1 = jnp.stack([taps(p["conv1_w"]) for p in rfab]).astype(mm_dtype)
    b1 = jnp.stack([p["conv1_b"].reshape(C, 1) for p in rfab])
    w2 = jnp.stack([taps(p["conv2_w"]) for p in rfab]).astype(mm_dtype)
    b2 = jnp.stack([p["conv2_b"].reshape(C, 1) for p in rfab])
    caw1 = jnp.stack([p["ca_w1"] for p in rfab])                  # (nb, C, Cr)
    cab1 = jnp.stack([p["ca_b1"].reshape(1, Cr) for p in rfab])   # (nb, 1, Cr)
    caw2 = jnp.stack([p["ca_w2"].T for p in rfab])                # (nb, C, Cr)
    cab2 = jnp.stack([p["ca_b2"].reshape(C, 1) for p in rfab])    # (nb, C, 1)
    saw = jnp.stack([p["sa_w"].reshape(9, 2, 1) for p in rfab])   # (nb, 9, 2, 1)
    tw = taps(params["tail_w"]).astype(mm_dtype)
    tb = params["tail_b"].reshape(C, 1)

    # Valid-pixel lane mask over the row-strided flat layout.
    mask = (jnp.arange(N) % Wp < W).astype(jnp.float32).reshape(1, N)

    # Zero-pad spatially, flatten, and place so pixel (y, x) sits at S + y*Wp + x.
    xp = jnp.pad(x, ((0, 0), (0, 0), (1, 1), (1, 1))).reshape(B, C, Hp * Wp)
    xp = jnp.pad(xp, ((0, 0), (0, 0),
                      (S - Wp - 1, NP - (S - Wp - 1) - Hp * Wp)))

    def rep(shape):   # whole-array block, same block every grid step
        z = (0,) * len(shape)
        return pl.BlockSpec(shape, lambda b, z=z: z)

    kernel = functools.partial(_residual_group_kernel, nb, H, W, C, NP, S)

    out = pl.pallas_call(
        kernel,
        out_shape=jax.ShapeDtypeStruct((B, C, N), jnp.float32),
        grid_spec=pltpu.PrefetchScalarGridSpec(
            num_scalar_prefetch=0,
            grid=(B,),
            in_specs=[
                rep(mask.shape),
                pl.BlockSpec((1, C, NP), lambda b: (b, 0, 0)),    # padded-flat input
                rep(w1.shape), rep(b1.shape), rep(w2.shape), rep(b2.shape),
                rep(caw1.shape), rep(cab1.shape), rep(caw2.shape), rep(cab2.shape),
                rep(saw.shape), rep(tw.shape), rep(tb.shape),
            ],
            out_specs=pl.BlockSpec((1, C, N), lambda b: (b, 0, 0)),
            scratch_shapes=[
                pltpu.VMEM((C, NP), mm_dtype),      # padded block / tail-conv input
                pltpu.VMEM((C, NP), mm_dtype),      # padded mish(conv1) output
                pltpu.VMEM((2, NP), jnp.float32),   # padded [avg; max] SA planes
            ],
        ),
        compiler_params=pltpu.CompilerParams(
            dimension_semantics=("parallel",)),     # batch items independent
    )(mask, xp, w1, b1, w2, b2, caw1, cab1, caw2, cab2, saw, tw, tb)

    # Strip the 2 interleaved padding columns per row.
    return out.reshape(B, C, H, Wp)[:, :, :, :W]


# --------------------------- pure-JAX reference -------------------------------

def _mish_ref(v):
    sp = jnp.maximum(v, 0.0) + jnp.log1p(jnp.exp(-jnp.abs(v)))
    return v * jnp.tanh(sp)


def _conv2d_ref(x, w, b=None):
    y = lax.conv_general_dilated(
        x, w, window_strides=(1, 1), padding="SAME",
        dimension_numbers=("NCHW", "HWIO", "NCHW"))
    if b is not None:
        y = y + b.reshape(1, -1, 1, 1)
    return y


def residual_group_ref(x, params):
    out = x
    for p in params["rfab"]:
        r = _mish_ref(_conv2d_ref(out, p["conv1_w"], p["conv1_b"]))
        r = _conv2d_ref(r, p["conv2_w"], p["conv2_b"])
        # CALayer
        y = jnp.mean(r, axis=(2, 3), keepdims=True)
        z = jnp.maximum(
            jnp.einsum("bcij,cd->bdij", y, p["ca_w1"])
            + p["ca_b1"].reshape(1, -1, 1, 1), 0.0)
        z = jax.nn.sigmoid(
            jnp.einsum("bcij,cd->bdij", z, p["ca_w2"])
            + p["ca_b2"].reshape(1, -1, 1, 1))
        r = r * z
        # SALayer
        avg = jnp.mean(r, axis=1, keepdims=True)
        mx = jnp.max(r, axis=1, keepdims=True)
        s = _conv2d_ref(jnp.concatenate([avg, mx], axis=1), p["sa_w"])
        r = r * jax.nn.sigmoid(s)
        out = r + out
    r = _mish_ref(_conv2d_ref(out, params["tail_w"], params["tail_b"]))
    return r + x


# ------------------------------ parameter init --------------------------------

def init_params(key, n_feat, n_resblocks, reduction=16):
    C = n_feat
    Cr = max(C // reduction, 1)
    rfab = []
    for i in range(n_resblocks):
        ks = jax.random.split(jax.random.fold_in(key, i), 9)
        rfab.append(dict(
            conv1_w=0.1 * jax.random.normal(ks[0], (3, 3, C, C), jnp.float32),
            conv1_b=0.1 * jax.random.normal(ks[1], (C,), jnp.float32),
            conv2_w=0.1 * jax.random.normal(ks[2], (3, 3, C, C), jnp.float32),
            conv2_b=0.1 * jax.random.normal(ks[3], (C,), jnp.float32),
            ca_w1=0.1 * jax.random.normal(ks[4], (C, Cr), jnp.float32),
            ca_b1=0.1 * jax.random.normal(ks[5], (Cr,), jnp.float32),
            ca_w2=0.1 * jax.random.normal(ks[6], (Cr, C), jnp.float32),
            ca_b2=0.1 * jax.random.normal(ks[7], (C,), jnp.float32),
            sa_w=0.1 * jax.random.normal(ks[8], (3, 3, 2, 1), jnp.float32),
        ))
    kt = jax.random.split(jax.random.fold_in(key, 1000), 2)
    return dict(
        rfab=rfab,
        tail_w=0.1 * jax.random.normal(kt[0], (3, 3, C, C), jnp.float32),
        tail_b=0.1 * jax.random.normal(kt[1], (C,), jnp.float32),
    )


# ---------------------------------- main ---------------------------------------

if __name__ == "__main__":
    key = jax.random.PRNGKey(0)
    # n_feat=16 so that CALayer's reduction=16 gives a valid 16//16=1 bottleneck.
    B, C, H, W = 2, 16, 16, 16
    n_resblocks = 2

    kx, kp = jax.random.split(key)
    x = jax.random.normal(kx, (B, C, H, W), jnp.float32)   # NCHW, as in PyTorch
    params = init_params(kp, C, n_resblocks)

    out = jax.block_until_ready(residual_group_pallas(x, params))
    ref = jax.block_until_ready(residual_group_ref(x, params))

    assert out.shape == (B, C, H, W)
    err = float(jnp.max(jnp.abs(out - ref)))
    if not bool(jnp.allclose(out, ref, rtol=2e-3, atol=2e-3)):
        raise AssertionError(f"mismatch vs reference, max abs err = {err}")
    print("KERNEL_OK")
</pallas_src>

<mosaic_0001>
module attributes {stable_mosaic.version = 11 : i64} {
  func.func @_residual_group_kernel(%arg0: i32, %arg1: memref<1x288xf32, #tpu.memory_space<vmem>>, %arg2: memref<1x16x512xf32, #tpu.memory_space<vmem>>, %arg3: memref<2x9x16x16xf32, #tpu.memory_space<vmem>>, %arg4: memref<2x16x1xf32, #tpu.memory_space<vmem>>, %arg5: memref<2x9x16x16xf32, #tpu.memory_space<vmem>>, %arg6: memref<2x16x1xf32, #tpu.memory_space<vmem>>, %arg7: memref<2x16x1xf32, #tpu.memory_space<vmem>>, %arg8: memref<2x1x1xf32, #tpu.memory_space<vmem>>, %arg9: memref<2x16x1xf32, #tpu.memory_space<vmem>>, %arg10: memref<2x16x1xf32, #tpu.memory_space<vmem>>, %arg11: memref<2x9x2x1xf32, #tpu.memory_space<vmem>>, %arg12: memref<9x16x16xf32, #tpu.memory_space<vmem>>, %arg13: memref<16x1xf32, #tpu.memory_space<vmem>>, %arg14: memref<1x16x288xf32, #tpu.memory_space<vmem>>, %arg15: memref<16x512xf32, #tpu.memory_space<vmem>>, %arg16: memref<16x512xf32, #tpu.memory_space<vmem>>, %arg17: memref<2x512xf32, #tpu.memory_space<vmem>>) attributes {dimension_semantics = [#tpu.dimension_semantics<parallel>], iteration_bounds = array<i64: 2>, scalar_prefetch = 0 : i64, scratch_operands = 3 : i64, tpu.core_type = #tpu.core_type<tc>, window_params = [{pipeline_mode = #tpu.pipeline_mode<synchronous>, transform_indices = @transform_0, window_bounds = array<i64: 1, 288>}, {transform_indices = @transform_1, window_bounds = array<i64: 1, 16, 512>}, {pipeline_mode = #tpu.pipeline_mode<synchronous>, transform_indices = @transform_2, window_bounds = array<i64: 2, 9, 16, 16>}, {pipeline_mode = #tpu.pipeline_mode<synchronous>, transform_indices = @transform_3, window_bounds = array<i64: 2, 16, 1>}, {pipeline_mode = #tpu.pipeline_mode<synchronous>, transform_indices = @transform_4, window_bounds = array<i64: 2, 9, 16, 16>}, {pipeline_mode = #tpu.pipeline_mode<synchronous>, transform_indices = @transform_5, window_bounds = array<i64: 2, 16, 1>}, {pipeline_mode = #tpu.pipeline_mode<synchronous>, transform_indices = @transform_6, window_bounds = array<i64: 2, 16, 1>}, {pipeline_mode = #tpu.pipeline_mode<synchronous>, transform_indices = @transform_7, window_bounds = array<i64: 2, 1, 1>}, {pipeline_mode = #tpu.pipeline_mode<synchronous>, transform_indices = @transform_8, window_bounds = array<i64: 2, 16, 1>}, {pipeline_mode = #tpu.pipeline_mode<synchronous>, transform_indices = @transform_9, window_bounds = array<i64: 2, 16, 1>}, {pipeline_mode = #tpu.pipeline_mode<synchronous>, transform_indices = @transform_10, window_bounds = array<i64: 2, 9, 2, 1>}, {pipeline_mode = #tpu.pipeline_mode<synchronous>, transform_indices = @transform_11, window_bounds = array<i64: 9, 16, 16>}, {pipeline_mode = #tpu.pipeline_mode<synchronous>, transform_indices = @transform_12, window_bounds = array<i64: 16, 1>}, {transform_indices = @transform_13, window_bounds = array<i64: 1, 16, 288>}]} {
    %cst = arith.constant 0.000000e+00 : f32
    %0 = vector.broadcast %cst : f32 to vector<16x128xf32>
    %c0 = arith.constant 0 : index
    %c0_0 = arith.constant 0 : index
    %1 = vector.load %arg15[%c0, %c0_0] : memref<16x512xf32, #tpu.memory_space<vmem>>, vector<16x128xf32>
    tpu.vector_store %arg15[%c0, %c0_0], %0 {strides = array<i32>} : memref<16x512xf32, #tpu.memory_space<vmem>>, vector<16x128xf32>,
    %cst_1 = arith.constant 0.000000e+00 : f32
    %2 = vector.broadcast %cst_1 : f32 to vector<16x96xf32>
    %c0_2 = arith.constant 0 : index
    %c416 = arith.constant 416 : index
    %3 = vector.load %arg15[%c0_2, %c416] : memref<16x512xf32, #tpu.memory_space<vmem>>, vector<16x96xf32>
    tpu.vector_store %arg15[%c0_2, %c416], %2 {strides = array<i32>} : memref<16x512xf32, #tpu.memory_space<vmem>>, vector<16x96xf32>,
    %cst_3 = arith.constant 0.000000e+00 : f32
    %4 = vector.broadcast %cst_3 : f32 to vector<16x128xf32>
    %c0_4 = arith.constant 0 : index
    %c0_5 = arith.constant 0 : index
    %5 = vector.load %arg16[%c0_4, %c0_5] : memref<16x512xf32, #tpu.memory_space<vmem>>, vector<16x128xf32>
    tpu.vector_store %arg16[%c0_4, %c0_5], %4 {strides = array<i32>} : memref<16x512xf32, #tpu.memory_space<vmem>>, vector<16x128xf32>,
    %cst_6 = arith.constant 0.000000e+00 : f32
    %6 = vector.broadcast %cst_6 : f32 to vector<16x96xf32>
    %c0_7 = arith.constant 0 : index
    %c416_8 = arith.constant 416 : index
    %7 = vector.load %arg16[%c0_7, %c416_8] : memref<16x512xf32, #tpu.memory_space<vmem>>, vector<16x96xf32>
    tpu.vector_store %arg16[%c0_7, %c416_8], %6 {strides = array<i32>} : memref<16x512xf32, #tpu.memory_space<vmem>>, vector<16x96xf32>,
    %cst_9 = arith.constant 0.000000e+00 : f32
    %8 = vector.broadcast %cst_9 : f32 to vector<2x128xf32>
    %c0_10 = arith.constant 0 : index
    %c0_11 = arith.constant 0 : index
    %9 = vector.load %arg17[%c0_10, %c0_11] : memref<2x512xf32, #tpu.memory_space<vmem>>, vector<2x128xf32>
    tpu.vector_store %arg17[%c0_10, %c0_11], %8 {strides = array<i32>} : memref<2x512xf32, #tpu.memory_space<vmem>>, vector<2x128xf32>,
    %cst_12 = arith.constant 0.000000e+00 : f32
    %10 = vector.broadcast %cst_12 : f32 to vector<2x96xf32>
    %c0_13 = arith.constant 0 : index
    %c416_14 = arith.constant 416 : index
    %11 = vector.load %arg17[%c0_13, %c416_14] : memref<2x512xf32, #tpu.memory_space<vmem>>, vector<2x96xf32>
    tpu.vector_store %arg17[%c0_13, %c416_14], %10 {strides = array<i32>} : memref<2x512xf32, #tpu.memory_space<vmem>>, vector<2x96xf32>,
    %c0_15 = arith.constant 0 : index
    %c0_16 = arith.constant 0 : index
    %12 = vector.load %arg1[%c0_15, %c0_16] : memref<1x288xf32, #tpu.memory_space<vmem>>, vector<1x288xf32>
    %c0_17 = arith.constant 0 : index
    %c0_18 = arith.constant 0 : index
    %c0_19 = arith.constant 0 : index
    %13 = vector.load %arg2[%c0_17, %c0_18, %c0_19] : memref<1x16x512xf32, #tpu.memory_space<vmem>>, vector<1x16x512xf32>
    %14 = vector.shape_cast %13 : vector<1x16x512xf32> to vector<16x512xf32>
    %15 = vector.extract_strided_slice %14 {offsets = [0, 128], sizes = [16, 288], strides = [1, 1]} : vector<16x512xf32> to vector<16x288xf32>
    %c0_i32 = arith.constant 0 : i32
    %c2_i32 = arith.constant 2 : i32
    %16 = arith.addi %c0_i32, %c2_i32 : i32
    %c1_i32 = arith.constant 1 : i32
    %17 = scf.for %arg18 = %c0_i32 to %16 step %c1_i32 iter_args(%arg19 = %15) -> (vector<16x288xf32>)  : i32 {
      %85 = vector.broadcast %12 : vector<1x288xf32> to vector<16x288xf32>
      %86 = arith.mulf %arg19, %85 : vector<16x288xf32>
      %c0_52 = arith.constant 0 : index
      %c128_53 = arith.constant 128 : index
      %87 = vector.load %arg15[%c0_52, %c128_53] : memref<16x512xf32, #tpu.memory_space<vmem>>, vector<16x288xf32>
      tpu.vector_store %arg15[%c0_52, %c128_53], %86 {strides = array<i32>} : memref<16x512xf32, #tpu.memory_space<vmem>>, vector<16x288xf32>,
      %88 = arith.index_cast %arg18 : i32 to index
      %c0_54 = arith.constant 0 : index
      %c0_55 = arith.constant 0 : index
      %c0_56 = arith.constant 0 : index
      %89 = vector.load %arg3[%88, %c0_54, %c0_55, %c0_56] : memref<2x9x16x16xf32, #tpu.memory_space<vmem>>, vector<1x9x16x16xf32>
      %90 = vector.shape_cast %89 : vector<1x9x16x16xf32> to vector<9x16x16xf32>
      %91 = arith.index_cast %arg18 : i32 to index
      %c0_57 = arith.constant 0 : index
      %c0_58 = arith.constant 0 : index
      %92 = vector.load %arg4[%91, %c0_57, %c0_58] : memref<2x16x1xf32, #tpu.memory_space<vmem>>, vector<1x16x1xf32>
      %93 = vector.shape_cast %92 : vector<1x16x1xf32> to vector<16x1xf32>
      %94 = vector.extract_strided_slice %90 {offsets = [0, 0, 0], sizes = [1, 16, 16], strides = [1, 1, 1]} : vector<9x16x16xf32> to vector<1x16x16xf32>
      %95 = vector.shape_cast %94 : vector<1x16x16xf32> to vector<16x16xf32>
      %c0_59 = arith.constant 0 : index
      %c109_60 = arith.constant 109 : index
      %96 = vector.load %arg15[%c0_59, %c109_60] : memref<16x512xf32, #tpu.memory_space<vmem>>, vector<16x288xf32>
      %cst_61 = arith.constant dense<0.000000e+00> : vector<16x288xf32>
      %97 = tpu.matmul %95, %96, %cst_61 {dimension_numbers = #tpu.dot_dimension_numbers<[1], [0], [0], [1], [0, 0, 1, 1], [], []>} : vector<16x16xf32>, vector<16x288xf32>, vector<16x288xf32> -> vector<16x288xf32>
      %98 = vector.extract_strided_slice %90 {offsets = [1, 0, 0], sizes = [1, 16, 16], strides = [1, 1, 1]} : vector<9x16x16xf32> to vector<1x16x16xf32>
      %99 = vector.shape_cast %98 : vector<1x16x16xf32> to vector<16x16xf32>
      %c0_62 = arith.constant 0 : index
      %c110_63 = arith.constant 110 : index
      %100 = vector.load %arg15[%c0_62, %c110_63] : memref<16x512xf32, #tpu.memory_space<vmem>>, vector<16x288xf32>
      %cst_64 = arith.constant dense<0.000000e+00> : vector<16x288xf32>
      %101 = tpu.matmul %99, %100, %cst_64 {dimension_numbers = #tpu.dot_dimension_numbers<[1], [0], [0], [1], [0, 0, 1, 1], [], []>} : vector<16x16xf32>, vector<16x288xf32>, vector<16x288xf32> -> vector<16x288xf32>
      %102 = arith.addf %97, %101 : vector<16x288xf32>
      %103 = vector.extract_strided_slice %90 {offsets = [2, 0, 0], sizes = [1, 16, 16], strides = [1, 1, 1]} : vector<9x16x16xf32> to vector<1x16x16xf32>
      %104 = vector.shape_cast %103 : vector<1x16x16xf32> to vector<16x16xf32>
      %c0_65 = arith.constant 0 : index
      %c111_66 = arith.constant 111 : index
      %105 = vector.load %arg15[%c0_65, %c111_66] : memref<16x512xf32, #tpu.memory_space<vmem>>, vector<16x288xf32>
      %cst_67 = arith.constant dense<0.000000e+00> : vector<16x288xf32>
      %106 = tpu.matmul %104, %105, %cst_67 {dimension_numbers = #tpu.dot_dimension_numbers<[1], [0], [0], [1], [0, 0, 1, 1], [], []>} : vector<16x16xf32>, vector<16x288xf32>, vector<16x288xf32> -> vector<16x288xf32>
      %107 = arith.addf %102, %106 : vector<16x288xf32>
      %108 = vector.extract_strided_slice %90 {offsets = [3, 0, 0], sizes = [1, 16, 16], strides = [1, 1, 1]} : vector<9x16x16xf32> to vector<1x16x16xf32>
      %109 = vector.shape_cast %108 : vector<1x16x16xf32> to vector<16x16xf32>
      %c0_68 = arith.constant 0 : index
      %c127_69 = arith.constant 127 : index
      %110 = vector.load %arg15[%c0_68, %c127_69] : memref<16x512xf32, #tpu.memory_space<vmem>>, vector<16x288xf32>
      %cst_70 = arith.constant dense<0.000000e+00> : vector<16x288xf32>
      %111 = tpu.matmul %109, %110, %cst_70 {dimension_numbers = #tpu.dot_dimension_numbers<[1], [0], [0], [1], [0, 0, 1, 1], [], []>} : vector<16x16xf32>, vector<16x288xf32>, vector<16x288xf32> -> vector<16x288xf32>
      %112 = arith.addf %107, %111 : vector<16x288xf32>
      %113 = vector.extract_strided_slice %90 {offsets = [4, 0, 0], sizes = [1, 16, 16], strides = [1, 1, 1]} : vector<9x16x16xf32> to vector<1x16x16xf32>
      %114 = vector.shape_cast %113 : vector<1x16x16xf32> to vector<16x16xf32>
      %c0_71 = arith.constant 0 : index
      %c128_72 = arith.constant 128 : index
      %115 = vector.load %arg15[%c0_71, %c128_72] : memref<16x512xf32, #tpu.memory_space<vmem>>, vector<16x288xf32>
      %cst_73 = arith.constant dense<0.000000e+00> : vector<16x288xf32>
      %116 = tpu.matmul %114, %115, %cst_73 {dimension_numbers = #tpu.dot_dimension_numbers<[1], [0], [0], [1], [0, 0, 1, 1], [], []>} : vector<16x16xf32>, vector<16x288xf32>, vector<16x288xf32> -> vector<16x288xf32>
      %117 = arith.addf %112, %116 : vector<16x288xf32>
      %118 = vector.extract_strided_slice %90 {offsets = [5, 0, 0], sizes = [1, 16, 16], strides = [1, 1, 1]} : vector<9x16x16xf32> to vector<1x16x16xf32>
      %119 = vector.shape_cast %118 : vector<1x16x16xf32> to vector<16x16xf32>
      %c0_74 = arith.constant 0 : index
      %c129_75 = arith.constant 129 : index
      %120 = vector.load %arg15[%c0_74, %c129_75] : memref<16x512xf32, #tpu.memory_space<vmem>>, vector<16x288xf32>
      %cst_76 = arith.constant dense<0.000000e+00> : vector<16x288xf32>
      %121 = tpu.matmul %119, %120, %cst_76 {dimension_numbers = #tpu.dot_dimension_numbers<[1], [0], [0], [1], [0, 0, 1, 1], [], []>} : vector<16x16xf32>, vector<16x288xf32>, vector<16x288xf32> -> vector<16x288xf32>
      %122 = arith.addf %117, %121 : vector<16x288xf32>
      %123 = vector.extract_strided_slice %90 {offsets = [6, 0, 0], sizes = [1, 16, 16], strides = [1, 1, 1]} : vector<9x16x16xf32> to vector<1x16x16xf32>
      %124 = vector.shape_cast %123 : vector<1x16x16xf32> to vector<16x16xf32>
      %c0_77 = arith.constant 0 : index
      %c145_78 = arith.constant 145 : index
      %125 = vector.load %arg15[%c0_77, %c145_78] : memref<16x512xf32, #tpu.memory_space<vmem>>, vector<16x288xf32>
      %cst_79 = arith.constant dense<0.000000e+00> : vector<16x288xf32>
      %126 = tpu.matmul %124, %125, %cst_79 {dimension_numbers = #tpu.dot_dimension_numbers<[1], [0], [0], [1], [0, 0, 1, 1], [], []>} : vector<16x16xf32>, vector<16x288xf32>, vector<16x288xf32> -> vector<16x288xf32>
      %127 = arith.addf %122, %126 : vector<16x288xf32>
      %128 = vector.extract_strided_slice %90 {offsets = [7, 0, 0], sizes = [1, 16, 16], strides = [1, 1, 1]} : vector<9x16x16xf32> to vector<1x16x16xf32>
      %129 = vector.shape_cast %128 : vector<1x16x16xf32> to vector<16x16xf32>
      %c0_80 = arith.constant 0 : index
      %c146_81 = arith.constant 146 : index
      %130 = vector.load %arg15[%c0_80, %c146_81] : memref<16x512xf32, #tpu.memory_space<vmem>>, vector<16x288xf32>
      %cst_82 = arith.constant dense<0.000000e+00> : vector<16x288xf32>
      %131 = tpu.matmul %129, %130, %cst_82 {dimension_numbers = #tpu.dot_dimension_numbers<[1], [0], [0], [1], [0, 0, 1, 1], [], []>} : vector<16x16xf32>, vector<16x288xf32>, vector<16x288xf32> -> vector<16x288xf32>
      %132 = arith.addf %127, %131 : vector<16x288xf32>
      %133 = vector.extract_strided_slice %90 {offsets = [8, 0, 0], sizes = [1, 16, 16], strides = [1, 1, 1]} : vector<9x16x16xf32> to vector<1x16x16xf32>
      %134 = vector.shape_cast %133 : vector<1x16x16xf32> to vector<16x16xf32>
      %c0_83 = arith.constant 0 : index
      %c147_84 = arith.constant 147 : index
      %135 = vector.load %arg15[%c0_83, %c147_84] : memref<16x512xf32, #tpu.memory_space<vmem>>, vector<16x288xf32>
      %cst_85 = arith.constant dense<0.000000e+00> : vector<16x288xf32>
      %136 = tpu.matmul %134, %135, %cst_85 {dimension_numbers = #tpu.dot_dimension_numbers<[1], [0], [0], [1], [0, 0, 1, 1], [], []>} : vector<16x16xf32>, vector<16x288xf32>, vector<16x288xf32> -> vector<16x288xf32>
      %137 = arith.addf %132, %136 : vector<16x288xf32>
      %138 = vector.broadcast %93 : vector<16x1xf32> to vector<16x288xf32>
      %139 = arith.addf %137, %138 : vector<16x288xf32>
      %140 = math.exp %139 : vector<16x288xf32>
      %cst_86 = arith.constant 2.000000e+00 : f32
      %141 = vector.broadcast %cst_86 : f32 to vector<16x288xf32>
      %142 = arith.mulf %141, %139 : vector<16x288xf32>
      %cst_87 = arith.constant 2.000000e+00 : f32
      %143 = vector.broadcast %cst_87 : f32 to vector<16x288xf32>
      %144 = arith.addf %140, %143 : vector<16x288xf32>
      %145 = arith.mulf %140, %144 : vector<16x288xf32>
      %cst_88 = arith.constant 2.000000e+00 : f32
      %146 = vector.broadcast %cst_88 : f32 to vector<16x288xf32>
      %147 = arith.addf %145, %146 : vector<16x288xf32>
      %148 = arith.divf %142, %147 : vector<16x288xf32>
      %149 = arith.subf %139, %148 : vector<16x288xf32>
      %150 = vector.broadcast %12 : vector<1x288xf32> to vector<16x288xf32>
      %151 = arith.mulf %149, %150 : vector<16x288xf32>
      %c0_89 = arith.constant 0 : index
      %c128_90 = arith.constant 128 : index
      %152 = vector.load %arg16[%c0_89, %c128_90] : memref<16x512xf32, #tpu.memory_space<vmem>>, vector<16x288xf32>
      tpu.vector_store %arg16[%c0_89, %c128_90], %151 {strides = array<i32>} : memref<16x512xf32, #tpu.memory_space<vmem>>, vector<16x288xf32>,
      %153 = arith.index_cast %arg18 : i32 to index
      %c0_91 = arith.constant 0 : index
      %c0_92 = arith.constant 0 : index
      %c0_93 = arith.constant 0 : index
      %154 = vector.load %arg5[%153, %c0_91, %c0_92, %c0_93] : memref<2x9x16x16xf32, #tpu.memory_space<vmem>>, vector<1x9x16x16xf32>
      %155 = vector.shape_cast %154 : vector<1x9x16x16xf32> to vector<9x16x16xf32>
      %156 = arith.index_cast %arg18 : i32 to index
      %c0_94 = arith.constant 0 : index
      %c0_95 = arith.constant 0 : index
      %157 = vector.load %arg6[%156, %c0_94, %c0_95] : memref<2x16x1xf32, #tpu.memory_space<vmem>>, vector<1x16x1xf32>
      %158 = vector.shape_cast %157 : vector<1x16x1xf32> to vector<16x1xf32>
      %159 = vector.extract_strided_slice %155 {offsets = [0, 0, 0], sizes = [1, 16, 16], strides = [1, 1, 1]} : vector<9x16x16xf32> to vector<1x16x16xf32>
      %160 = vector.shape_cast %159 : vector<1x16x16xf32> to vector<16x16xf32>
      %c0_96 = arith.constant 0 : index
      %c109_97 = arith.constant 109 : index
      %161 = vector.load %arg16[%c0_96, %c109_97] : memref<16x512xf32, #tpu.memory_space<vmem>>, vector<16x288xf32>
      %cst_98 = arith.constant dense<0.000000e+00> : vector<16x288xf32>
      %162 = tpu.matmul %160, %161, %cst_98 {dimension_numbers = #tpu.dot_dimension_numbers<[1], [0], [0], [1], [0, 0, 1, 1], [], []>} : vector<16x16xf32>, vector<16x288xf32>, vector<16x288xf32> -> vector<16x288xf32>
      %163 = vector.extract_strided_slice %155 {offsets = [1, 0, 0], sizes = [1, 16, 16], strides = [1, 1, 1]} : vector<9x16x16xf32> to vector<1x16x16xf32>
      %164 = vector.shape_cast %163 : vector<1x16x16xf32> to vector<16x16xf32>
      %c0_99 = arith.constant 0 : index
      %c110_100 = arith.constant 110 : index
      %165 = vector.load %arg16[%c0_99, %c110_100] : memref<16x512xf32, #tpu.memory_space<vmem>>, vector<16x288xf32>
      %cst_101 = arith.constant dense<0.000000e+00> : vector<16x288xf32>
      %166 = tpu.matmul %164, %165, %cst_101 {dimension_numbers = #tpu.dot_dimension_numbers<[1], [0], [0], [1], [0, 0, 1, 1], [], []>} : vector<16x16xf32>, vector<16x288xf32>, vector<16x288xf32> -> vector<16x288xf32>
      %167 = arith.addf %162, %166 : vector<16x288xf32>
      %168 = vector.extract_strided_slice %155 {offsets = [2, 0, 0], sizes = [1, 16, 16], strides = [1, 1, 1]} : vector<9x16x16xf32> to vector<1x16x16xf32>
      %169 = vector.shape_cast %168 : vector<1x16x16xf32> to vector<16x16xf32>
      %c0_102 = arith.constant 0 : index
      %c111_103 = arith.constant 111 : index
      %170 = vector.load %arg16[%c0_102, %c111_103] : memref<16x512xf32, #tpu.memory_space<vmem>>, vector<16x288xf32>
      %cst_104 = arith.constant dense<0.000000e+00> : vector<16x288xf32>
      %171 = tpu.matmul %169, %170, %cst_104 {dimension_numbers = #tpu.dot_dimension_numbers<[1], [0], [0], [1], [0, 0, 1, 1], [], []>} : vector<16x16xf32>, vector<16x288xf32>, vector<16x288xf32> -> vector<16x288xf32>
      %172 = arith.addf %167, %171 : vector<16x288xf32>
      %173 = vector.extract_strided_slice %155 {offsets = [3, 0, 0], sizes = [1, 16, 16], strides = [1, 1, 1]} : vector<9x16x16xf32> to vector<1x16x16xf32>
      %174 = vector.shape_cast %173 : vector<1x16x16xf32> to vector<16x16xf32>
      %c0_105 = arith.constant 0 : index
      %c127_106 = arith.constant 127 : index
      %175 = vector.load %arg16[%c0_105, %c127_106] : memref<16x512xf32, #tpu.memory_space<vmem>>, vector<16x288xf32>
      %cst_107 = arith.constant dense<0.000000e+00> : vector<16x288xf32>
      %176 = tpu.matmul %174, %175, %cst_107 {dimension_numbers = #tpu.dot_dimension_numbers<[1], [0], [0], [1], [0, 0, 1, 1], [], []>} : vector<16x16xf32>, vector<16x288xf32>, vector<16x288xf32> -> vector<16x288xf32>
      %177 = arith.addf %172, %176 : vector<16x288xf32>
      %178 = vector.extract_strided_slice %155 {offsets = [4, 0, 0], sizes = [1, 16, 16], strides = [1, 1, 1]} : vector<9x16x16xf32> to vector<1x16x16xf32>
      %179 = vector.shape_cast %178 : vector<1x16x16xf32> to vector<16x16xf32>
      %c0_108 = arith.constant 0 : index
      %c128_109 = arith.constant 128 : index
      %180 = vector.load %arg16[%c0_108, %c128_109] : memref<16x512xf32, #tpu.memory_space<vmem>>, vector<16x288xf32>
      %cst_110 = arith.constant dense<0.000000e+00> : vector<16x288xf32>
      %181 = tpu.matmul %179, %180, %cst_110 {dimension_numbers = #tpu.dot_dimension_numbers<[1], [0], [0], [1], [0, 0, 1, 1], [], []>} : vector<16x16xf32>, vector<16x288xf32>, vector<16x288xf32> -> vector<16x288xf32>
      %182 = arith.addf %177, %181 : vector<16x288xf32>
      %183 = vector.extract_strided_slice %155 {offsets = [5, 0, 0], sizes = [1, 16, 16], strides = [1, 1, 1]} : vector<9x16x16xf32> to vector<1x16x16xf32>
      %184 = vector.shape_cast %183 : vector<1x16x16xf32> to vector<16x16xf32>
      %c0_111 = arith.constant 0 : index
      %c129_112 = arith.constant 129 : index
      %185 = vector.load %arg16[%c0_111, %c129_112] : memref<16x512xf32, #tpu.memory_space<vmem>>, vector<16x288xf32>
      %cst_113 = arith.constant dense<0.000000e+00> : vector<16x288xf32>
      %186 = tpu.matmul %184, %185, %cst_113 {dimension_numbers = #tpu.dot_dimension_numbers<[1], [0], [0], [1], [0, 0, 1, 1], [], []>} : vector<16x16xf32>, vector<16x288xf32>, vector<16x288xf32> -> vector<16x288xf32>
      %187 = arith.addf %182, %186 : vector<16x288xf32>
      %188 = vector.extract_strided_slice %155 {offsets = [6, 0, 0], sizes = [1, 16, 16], strides = [1, 1, 1]} : vector<9x16x16xf32> to vector<1x16x16xf32>
      %189 = vector.shape_cast %188 : vector<1x16x16xf32> to vector<16x16xf32>
      %c0_114 = arith.constant 0 : index
      %c145_115 = arith.constant 145 : index
      %190 = vector.load %arg16[%c0_114, %c145_115] : memref<16x512xf32, #tpu.memory_space<vmem>>, vector<16x288xf32>
      %cst_116 = arith.constant dense<0.000000e+00> : vector<16x288xf32>
      %191 = tpu.matmul %189, %190, %cst_116 {dimension_numbers = #tpu.dot_dimension_numbers<[1], [0], [0], [1], [0, 0, 1, 1], [], []>} : vector<16x16xf32>, vector<16x288xf32>, vector<16x288xf32> -> vector<16x288xf32>
      %192 = arith.addf %187, %191 : vector<16x288xf32>
      %193 = vector.extract_strided_slice %155 {offsets = [7, 0, 0], sizes = [1, 16, 16], strides = [1, 1, 1]} : vector<9x16x16xf32> to vector<1x16x16xf32>
      %194 = vector.shape_cast %193 : vector<1x16x16xf32> to vector<16x16xf32>
      %c0_117 = arith.constant 0 : index
      %c146_118 = arith.constant 146 : index
      %195 = vector.load %arg16[%c0_117, %c146_118] : memref<16x512xf32, #tpu.memory_space<vmem>>, vector<16x288xf32>
      %cst_119 = arith.constant dense<0.000000e+00> : vector<16x288xf32>
      %196 = tpu.matmul %194, %195, %cst_119 {dimension_numbers = #tpu.dot_dimension_numbers<[1], [0], [0], [1], [0, 0, 1, 1], [], []>} : vector<16x16xf32>, vector<16x288xf32>, vector<16x288xf32> -> vector<16x288xf32>
      %197 = arith.addf %192, %196 : vector<16x288xf32>
      %198 = vector.extract_strided_slice %155 {offsets = [8, 0, 0], sizes = [1, 16, 16], strides = [1, 1, 1]} : vector<9x16x16xf32> to vector<1x16x16xf32>
      %199 = vector.shape_cast %198 : vector<1x16x16xf32> to vector<16x16xf32>
      %c0_120 = arith.constant 0 : index
      %c147_121 = arith.constant 147 : index
      %200 = vector.load %arg16[%c0_120, %c147_121] : memref<16x512xf32, #tpu.memory_space<vmem>>, vector<16x288xf32>
      %cst_122 = arith.constant dense<0.000000e+00> : vector<16x288xf32>
      %201 = tpu.matmul %199, %200, %cst_122 {dimension_numbers = #tpu.dot_dimension_numbers<[1], [0], [0], [1], [0, 0, 1, 1], [], []>} : vector<16x16xf32>, vector<16x288xf32>, vector<16x288xf32> -> vector<16x288xf32>
      %202 = arith.addf %197, %201 : vector<16x288xf32>
      %203 = vector.broadcast %158 : vector<16x1xf32> to vector<16x288xf32>
      %204 = arith.addf %202, %203 : vector<16x288xf32>
      %205 = vector.broadcast %12 : vector<1x288xf32> to vector<16x288xf32>
      %206 = arith.mulf %204, %205 : vector<16x288xf32>
      %cst_123 = arith.constant dense<0.000000e+00> : vector<16xf32>
      %207 = vector.multi_reduction <add>, %206, %cst_123 [1] : vector<16x288xf32> to vector<16xf32>
      %208 = vector.shape_cast %207 : vector<16xf32> to vector<16x1xf32>
      %cst_124 = arith.constant 3.906250e-03 : f32
      %209 = vector.broadcast %cst_124 : f32 to vector<16x1xf32>
      %210 = arith.mulf %208, %209 : vector<16x1xf32>
      %211 = arith.index_cast %arg18 : i32 to index
      %c0_125 = arith.constant 0 : index
      %c0_126 = arith.constant 0 : index
      %212 = vector.load %arg7[%211, %c0_125, %c0_126] : memref<2x16x1xf32, #tpu.memory_space<vmem>>, vector<1x16x1xf32>
      %213 = vector.shape_cast %212 : vector<1x16x1xf32> to vector<16x1xf32>
      %214 = arith.mulf %213, %210 : vector<16x1xf32>
      %cst_127 = arith.constant dense<0.000000e+00> : vector<1xf32>
      %215 = vector.multi_reduction <add>, %214, %cst_127 [0] : vector<16x1xf32> to vector<1xf32>
      %216 = vector.shape_cast %215 : vector<1xf32> to vector<1x1xf32>
      %217 = arith.index_cast %arg18 : i32 to index
      %c0_128 = arith.constant 0 : index
      %c0_129 = arith.constant 0 : index
      %218 = vector.load %arg8[%217, %c0_128, %c0_129] : memref<2x1x1xf32, #tpu.memory_space<vmem>>, vector<1x1x1xf32>
      %219 = vector.shape_cast %218 : vector<1x1x1xf32> to vector<1x1xf32>
      %220 = arith.addf %216, %219 : vector<1x1xf32>
      %cst_130 = arith.constant 0.000000e+00 : f32
      %221 = vector.broadcast %cst_130 : f32 to vector<1x1xf32>
      %222 = arith.maximumf %220, %221 : vector<1x1xf32>
      %223 = arith.index_cast %arg18 : i32 to index
      %c0_131 = arith.constant 0 : index
      %c0_132 = arith.constant 0 : index
      %224 = vector.load %arg9[%223, %c0_131, %c0_132] : memref<2x16x1xf32, #tpu.memory_space<vmem>>, vector<1x16x1xf32>
      %225 = vector.shape_cast %224 : vector<1x16x1xf32> to vector<16x1xf32>
      %226 = vector.broadcast %222 : vector<1x1xf32> to vector<16x1xf32>
      %227 = arith.mulf %225, %226 : vector<16x1xf32>
      %cst_133 = arith.constant dense<0.000000e+00> : vector<16xf32>
      %228 = vector.multi_reduction <add>, %227, %cst_133 [1] : vector<16x1xf32> to vector<16xf32>
      %229 = vector.shape_cast %228 : vector<16xf32> to vector<16x1xf32>
      %230 = arith.index_cast %arg18 : i32 to index
      %c0_134 = arith.constant 0 : index
      %c0_135 = arith.constant 0 : index
      %231 = vector.load %arg10[%230, %c0_134, %c0_135] : memref<2x16x1xf32, #tpu.memory_space<vmem>>, vector<1x16x1xf32>
      %232 = vector.shape_cast %231 : vector<1x16x1xf32> to vector<16x1xf32>
      %233 = arith.addf %229, %232 : vector<16x1xf32>
      %cst_136 = arith.constant 0.000000e+00 : f32
      %234 = vector.broadcast %cst_136 : f32 to vector<16x1xf32>
      %235 = arith.subf %234, %233 : vector<16x1xf32>
      %236 = math.exp %235 : vector<16x1xf32>
      %cst_137 = arith.constant 1.000000e+00 : f32
      %237 = vector.broadcast %cst_137 : f32 to vector<16x1xf32>
      %238 = arith.addf %237, %236 : vector<16x1xf32>
      %cst_138 = arith.constant 1.000000e+00 : f32
      %239 = vector.broadcast %cst_138 : f32 to vector<16x1xf32>
      %240 = arith.divf %239, %238 : vector<16x1xf32>
      %241 = vector.broadcast %240 : vector<16x1xf32> to vector<16x288xf32>
      %242 = arith.mulf %206, %241 : vector<16x288xf32>
      %cst_139 = arith.constant dense<0.000000e+00> : vector<288xf32>
      %243 = vector.multi_reduction <add>, %242, %cst_139 [0] : vector<16x288xf32> to vector<288xf32>
      %244 = vector.shape_cast %243 : vector<288xf32> to vector<1x288xf32>
      %cst_140 = arith.constant 1.600000e+01 : f32
      %245 = vector.broadcast %cst_140 : f32 to vector<1x288xf32>
      %246 = arith.divf %244, %245 : vector<1x288xf32>
      %c0_141 = arith.constant 0 : index
      %c128_142 = arith.constant 128 : index
      %247 = vector.load %arg17[%c0_141, %c128_142] : memref<2x512xf32, #tpu.memory_space<vmem>>, vector<1x288xf32>
      tpu.vector_store %arg17[%c0_141, %c128_142], %246 {strides = array<i32>} : memref<2x512xf32, #tpu.memory_space<vmem>>, vector<1x288xf32>,
      %cst_143 = arith.constant dense<0xFF800000> : vector<288xf32>
      %248 = vector.multi_reduction <maximumf>, %242, %cst_143 [0] : vector<16x288xf32> to vector<288xf32>
      %249 = vector.shape_cast %248 : vector<288xf32> to vector<1x288xf32>
      %c1 = arith.constant 1 : index
      %c128_144 = arith.constant 128 : index
      %250 = vector.load %arg17[%c1, %c128_144] : memref<2x512xf32, #tpu.memory_space<vmem>>, vector<1x288xf32>
      tpu.vector_store %arg17[%c1, %c128_144], %249 {strides = array<i32>} : memref<2x512xf32, #tpu.memory_space<vmem>>, vector<1x288xf32>,
      %251 = arith.index_cast %arg18 : i32 to index
      %c0_145 = arith.constant 0 : index
      %c0_146 = arith.constant 0 : index
      %c0_147 = arith.constant 0 : index
      %252 = vector.load %arg11[%251, %c0_145, %c0_146, %c0_147] : memref<2x9x2x1xf32, #tpu.memory_space<vmem>>, vector<1x9x2x1xf32>
      %253 = vector.shape_cast %252 : vector<1x9x2x1xf32> to vector<9x2x1xf32>
      %254 = vector.extract_strided_slice %253 {offsets = [0, 0, 0], sizes = [1, 2, 1], strides = [1, 1, 1]} : vector<9x2x1xf32> to vector<1x2x1xf32>
      %255 = vector.shape_cast %254 : vector<1x2x1xf32> to vector<2x1xf32>
      %c0_148 = arith.constant 0 : index
      %c109_149 = arith.constant 109 : index
      %256 = vector.load %arg17[%c0_148, %c109_149] : memref<2x512xf32, #tpu.memory_space<vmem>>, vector<2x288xf32>
      %257 = vector.broadcast %255 : vector<2x1xf32> to vector<2x288xf32>
      %258 = arith.mulf %257, %256 : vector<2x288xf32>
      %259 = vector.extract_strided_slice %253 {offsets = [1, 0, 0], sizes = [1, 2, 1], strides = [1, 1, 1]} : vector<9x2x1xf32> to vector<1x2x1xf32>
      %260 = vector.shape_cast %259 : vector<1x2x1xf32> to vector<2x1xf32>
      %c0_150 = arith.constant 0 : index
      %c110_151 = arith.constant 110 : index
      %261 = vector.load %arg17[%c0_150, %c110_151] : memref<2x512xf32, #tpu.memory_space<vmem>>, vector<2x288xf32>
      %262 = vector.broadcast %260 : vector<2x1xf32> to vector<2x288xf32>
      %263 = arith.mulf %262, %261 : vector<2x288xf32>
      %264 = arith.addf %258, %263 : vector<2x288xf32>
      %265 = vector.extract_strided_slice %253 {offsets = [2, 0, 0], sizes = [1, 2, 1], strides = [1, 1, 1]} : vector<9x2x1xf32> to vector<1x2x1xf32>
      %266 = vector.shape_cast %265 : vector<1x2x1xf32> to vector<2x1xf32>
      %c0_152 = arith.constant 0 : index
      %c111_153 = arith.constant 111 : index
      %267 = vector.load %arg17[%c0_152, %c111_153] : memref<2x512xf32, #tpu.memory_space<vmem>>, vector<2x288xf32>
      %268 = vector.broadcast %266 : vector<2x1xf32> to vector<2x288xf32>
      %269 = arith.mulf %268, %267 : vector<2x288xf32>
      %270 = arith.addf %264, %269 : vector<2x288xf32>
      %271 = vector.extract_strided_slice %253 {offsets = [3, 0, 0], sizes = [1, 2, 1], strides = [1, 1, 1]} : vector<9x2x1xf32> to vector<1x2x1xf32>
      %272 = vector.shape_cast %271 : vector<1x2x1xf32> to vector<2x1xf32>
      %c0_154 = arith.constant 0 : index
      %c127_155 = arith.constant 127 : index
      %273 = vector.load %arg17[%c0_154, %c127_155] : memref<2x512xf32, #tpu.memory_space<vmem>>, vector<2x288xf32>
      %274 = vector.broadcast %272 : vector<2x1xf32> to vector<2x288xf32>
      %275 = arith.mulf %274, %273 : vector<2x288xf32>
      %276 = arith.addf %270, %275 : vector<2x288xf32>
      %277 = vector.extract_strided_slice %253 {offsets = [4, 0, 0], sizes = [1, 2, 1], strides = [1, 1, 1]} : vector<9x2x1xf32> to vector<1x2x1xf32>
      %278 = vector.shape_cast %277 : vector<1x2x1xf32> to vector<2x1xf32>
      %c0_156 = arith.constant 0 : index
      %c128_157 = arith.constant 128 : index
      %279 = vector.load %arg17[%c0_156, %c128_157] : memref<2x512xf32, #tpu.memory_space<vmem>>, vector<2x288xf32>
      %280 = vector.broadcast %278 : vector<2x1xf32> to vector<2x288xf32>
      %281 = arith.mulf %280, %279 : vector<2x288xf32>
      %282 = arith.addf %276, %281 : vector<2x288xf32>
      %283 = vector.extract_strided_slice %253 {offsets = [5, 0, 0], sizes = [1, 2, 1], strides = [1, 1, 1]} : vector<9x2x1xf32> to vector<1x2x1xf32>
      %284 = vector.shape_cast %283 : vector<1x2x1xf32> to vector<2x1xf32>
      %c0_158 = arith.constant 0 : index
      %c129_159 = arith.constant 129 : index
      %285 = vector.load %arg17[%c0_158, %c129_159] : memref<2x512xf32, #tpu.memory_space<vmem>>, vector<2x288xf32>
      %286 = vector.broadcast %284 : vector<2x1xf32> to vector<2x288xf32>
      %287 = arith.mulf %286, %285 : vector<2x288xf32>
      %288 = arith.addf %282, %287 : vector<2x288xf32>
      %289 = vector.extract_strided_slice %253 {offsets = [6, 0, 0], sizes = [1, 2, 1], strides = [1, 1, 1]} : vector<9x2x1xf32> to vector<1x2x1xf32>
      %290 = vector.shape_cast %289 : vector<1x2x1xf32> to vector<2x1xf32>
      %c0_160 = arith.constant 0 : index
      %c145_161 = arith.constant 145 : index
      %291 = vector.load %arg17[%c0_160, %c145_161] : memref<2x512xf32, #tpu.memory_space<vmem>>, vector<2x288xf32>
      %292 = vector.broadcast %290 : vector<2x1xf32> to vector<2x288xf32>
      %293 = arith.mulf %292, %291 : vector<2x288xf32>
      %294 = arith.addf %288, %293 : vector<2x288xf32>
      %295 = vector.extract_strided_slice %253 {offsets = [7, 0, 0], sizes = [1, 2, 1], strides = [1, 1, 1]} : vector<9x2x1xf32> to vector<1x2x1xf32>
      %296 = vector.shape_cast %295 : vector<1x2x1xf32> to vector<2x1xf32>
      %c0_162 = arith.constant 0 : index
      %c146_163 = arith.constant 146 : index
      %297 = vector.load %arg17[%c0_162, %c146_163] : memref<2x512xf32, #tpu.memory_space<vmem>>, vector<2x288xf32>
      %298 = vector.broadcast %296 : vector<2x1xf32> to vector<2x288xf32>
      %299 = arith.mulf %298, %297 : vector<2x288xf32>
      %300 = arith.addf %294, %299 : vector<2x288xf32>
      %301 = vector.extract_strided_slice %253 {offsets = [8, 0, 0], sizes = [1, 2, 1], strides = [1, 1, 1]} : vector<9x2x1xf32> to vector<1x2x1xf32>
      %302 = vector.shape_cast %301 : vector<1x2x1xf32> to vector<2x1xf32>
      %c0_164 = arith.constant 0 : index
      %c147_165 = arith.constant 147 : index
      %303 = vector.load %arg17[%c0_164, %c147_165] : memref<2x512xf32, #tpu.memory_space<vmem>>, vector<2x288xf32>
      %304 = vector.broadcast %302 : vector<2x1xf32> to vector<2x288xf32>
      %305 = arith.mulf %304, %303 : vector<2x288xf32>
      %306 = arith.addf %300, %305 : vector<2x288xf32>
      %cst_166 = arith.constant dense<0.000000e+00> : vector<288xf32>
      %307 = vector.multi_reduction <add>, %306, %cst_166 [0] : vector<2x288xf32> to vector<288xf32>
      %308 = vector.shape_cast %307 : vector<288xf32> to vector<1x288xf32>
      %cst_167 = arith.constant 0.000000e+00 : f32
      %309 = vector.broadcast %cst_167 : f32 to vector<1x288xf32>
      %310 = arith.subf %309, %308 : vector<1x288xf32>
      %311 = math.exp %310 : vector<1x288xf32>
      %cst_168 = arith.constant 1.000000e+00 : f32
      %312 = vector.broadcast %cst_168 : f32 to vector<1x288xf32>
      %313 = arith.addf %312, %311 : vector<1x288xf32>
      %cst_169 = arith.constant 1.000000e+00 : f32
      %314 = vector.broadcast %cst_169 : f32 to vector<1x288xf32>
      %315 = arith.divf %314, %313 : vector<1x288xf32>
      %316 = vector.broadcast %315 : vector<1x288xf32> to vector<16x288xf32>
      %317 = arith.mulf %242, %316 : vector<16x288xf32>
      %318 = arith.addf %317, %arg19 : vector<16x288xf32>
      scf.yield %318 : vector<16x288xf32>
    }
    %c2_i32_20 = arith.constant 2 : i32
    %18 = vector.broadcast %12 : vector<1x288xf32> to vector<16x288xf32>
    %19 = arith.mulf %17, %18 : vector<16x288xf32>
    %c0_21 = arith.constant 0 : index
    %c128 = arith.constant 128 : index
    %20 = vector.load %arg15[%c0_21, %c128] : memref<16x512xf32, #tpu.memory_space<vmem>>, vector<16x288xf32>
    tpu.vector_store %arg15[%c0_21, %c128], %19 {strides = array<i32>} : memref<16x512xf32, #tpu.memory_space<vmem>>, vector<16x288xf32>,
    %c0_22 = arith.constant 0 : index
    %c0_23 = arith.constant 0 : index
    %c0_24 = arith.constant 0 : index
    %21 = vector.load %arg12[%c0_22, %c0_23, %c0_24] : memref<9x16x16xf32, #tpu.memory_space<vmem>>, vector<9x16x16xf32>
    %c0_25 = arith.constant 0 : index
    %c0_26 = arith.constant 0 : index
    %22 = vector.load %arg13[%c0_25, %c0_26] : memref<16x1xf32, #tpu.memory_space<vmem>>, vector<16x1xf32>
    %23 = vector.extract_strided_slice %21 {offsets = [0, 0, 0], sizes = [1, 16, 16], strides = [1, 1, 1]} : vector<9x16x16xf32> to vector<1x16x16xf32>
    %24 = vector.shape_cast %23 : vector<1x16x16xf32> to vector<16x16xf32>
    %c0_27 = arith.constant 0 : index
    %c109 = arith.constant 109 : index
    %25 = vector.load %arg15[%c0_27, %c109] : memref<16x512xf32, #tpu.memory_space<vmem>>, vector<16x288xf32>
    %cst_28 = arith.constant dense<0.000000e+00> : vector<16x288xf32>
    %26 = tpu.matmul %24, %25, %cst_28 {dimension_numbers = #tpu.dot_dimension_numbers<[1], [0], [0], [1], [0, 0, 1, 1], [], []>} : vector<16x16xf32>, vector<16x288xf32>, vector<16x288xf32> -> vector<16x288xf32>
    %27 = vector.extract_strided_slice %21 {offsets = [1, 0, 0], sizes = [1, 16, 16], strides = [1, 1, 1]} : vector<9x16x16xf32> to vector<1x16x16xf32>
    %28 = vector.shape_cast %27 : vector<1x16x16xf32> to vector<16x16xf32>
    %c0_29 = arith.constant 0 : index
    %c110 = arith.constant 110 : index
    %29 = vector.load %arg15[%c0_29, %c110] : memref<16x512xf32, #tpu.memory_space<vmem>>, vector<16x288xf32>
    %cst_30 = arith.constant dense<0.000000e+00> : vector<16x288xf32>
    %30 = tpu.matmul %28, %29, %cst_30 {dimension_numbers = #tpu.dot_dimension_numbers<[1], [0], [0], [1], [0, 0, 1, 1], [], []>} : vector<16x16xf32>, vector<16x288xf32>, vector<16x288xf32> -> vector<16x288xf32>
    %31 = arith.addf %26, %30 : vector<16x288xf32>
    %32 = vector.extract_strided_slice %21 {offsets = [2, 0, 0], sizes = [1, 16, 16], strides = [1, 1, 1]} : vector<9x16x16xf32> to vector<1x16x16xf32>
    %33 = vector.shape_cast %32 : vector<1x16x16xf32> to vector<16x16xf32>
    %c0_31 = arith.constant 0 : index
    %c111 = arith.constant 111 : index
    %34 = vector.load %arg15[%c0_31, %c111] : memref<16x512xf32, #tpu.memory_space<vmem>>, vector<16x288xf32>
    %cst_32 = arith.constant dense<0.000000e+00> : vector<16x288xf32>
    %35 = tpu.matmul %33, %34, %cst_32 {dimension_numbers = #tpu.dot_dimension_numbers<[1], [0], [0], [1], [0, 0, 1, 1], [], []>} : vector<16x16xf32>, vector<16x288xf32>, vector<16x288xf32> -> vector<16x288xf32>
    %36 = arith.addf %31, %35 : vector<16x288xf32>
    %37 = vector.extract_strided_slice %21 {offsets = [3, 0, 0], sizes = [1, 16, 16], strides = [1, 1, 1]} : vector<9x16x16xf32> to vector<1x16x16xf32>
    %38 = vector.shape_cast %37 : vector<1x16x16xf32> to vector<16x16xf32>
    %c0_33 = arith.constant 0 : index
    %c127 = arith.constant 127 : index
    %39 = vector.load %arg15[%c0_33, %c127] : memref<16x512xf32, #tpu.memory_space<vmem>>, vector<16x288xf32>
    %cst_34 = arith.constant dense<0.000000e+00> : vector<16x288xf32>
    %40 = tpu.matmul %38, %39, %cst_34 {dimension_numbers = #tpu.dot_dimension_numbers<[1], [0], [0], [1], [0, 0, 1, 1], [], []>} : vector<16x16xf32>, vector<16x288xf32>, vector<16x288xf32> -> vector<16x288xf32>
    %41 = arith.addf %36, %40 : vector<16x288xf32>
    %42 = vector.extract_strided_slice %21 {offsets = [4, 0, 0], sizes = [1, 16, 16], strides = [1, 1, 1]} : vector<9x16x16xf32> to vector<1x16x16xf32>
    %43 = vector.shape_cast %42 : vector<1x16x16xf32> to vector<16x16xf32>
    %c0_35 = arith.constant 0 : index
    %c128_36 = arith.constant 128 : index
    %44 = vector.load %arg15[%c0_35, %c128_36] : memref<16x512xf32, #tpu.memory_space<vmem>>, vector<16x288xf32>
    %cst_37 = arith.constant dense<0.000000e+00> : vector<16x288xf32>
    %45 = tpu.matmul %43, %44, %cst_37 {dimension_numbers = #tpu.dot_dimension_numbers<[1], [0], [0], [1], [0, 0, 1, 1], [], []>} : vector<16x16xf32>, vector<16x288xf32>, vector<16x288xf32> -> vector<16x288xf32>
    %46 = arith.addf %41, %45 : vector<16x288xf32>
    %47 = vector.extract_strided_slice %21 {offsets = [5, 0, 0], sizes = [1, 16, 16], strides = [1, 1, 1]} : vector<9x16x16xf32> to vector<1x16x16xf32>
    %48 = vector.shape_cast %47 : vector<1x16x16xf32> to vector<16x16xf32>
    %c0_38 = arith.constant 0 : index
    %c129 = arith.constant 129 : index
    %49 = vector.load %arg15[%c0_38, %c129] : memref<16x512xf32, #tpu.memory_space<vmem>>, vector<16x288xf32>
    %cst_39 = arith.constant dense<0.000000e+00> : vector<16x288xf32>
    %50 = tpu.matmul %48, %49, %cst_39 {dimension_numbers = #tpu.dot_dimension_numbers<[1], [0], [0], [1], [0, 0, 1, 1], [], []>} : vector<16x16xf32>, vector<16x288xf32>, vector<16x288xf32> -> vector<16x288xf32>
    %51 = arith.addf %46, %50 : vector<16x288xf32>
    %52 = vector.extract_strided_slice %21 {offsets = [6, 0, 0], sizes = [1, 16, 16], strides = [1, 1, 1]} : vector<9x16x16xf32> to vector<1x16x16xf32>
    %53 = vector.shape_cast %52 : vector<1x16x16xf32> to vector<16x16xf32>
    %c0_40 = arith.constant 0 : index
    %c145 = arith.constant 145 : index
    %54 = vector.load %arg15[%c0_40, %c145] : memref<16x512xf32, #tpu.memory_space<vmem>>, vector<16x288xf32>
    %cst_41 = arith.constant dense<0.000000e+00> : vector<16x288xf32>
    %55 = tpu.matmul %53, %54, %cst_41 {dimension_numbers = #tpu.dot_dimension_numbers<[1], [0], [0], [1], [0, 0, 1, 1], [], []>} : vector<16x16xf32>, vector<16x288xf32>, vector<16x288xf32> -> vector<16x288xf32>
    %56 = arith.addf %51, %55 : vector<16x288xf32>
    %57 = vector.extract_strided_slice %21 {offsets = [7, 0, 0], sizes = [1, 16, 16], strides = [1, 1, 1]} : vector<9x16x16xf32> to vector<1x16x16xf32>
    %58 = vector.shape_cast %57 : vector<1x16x16xf32> to vector<16x16xf32>
    %c0_42 = arith.constant 0 : index
    %c146 = arith.constant 146 : index
    %59 = vector.load %arg15[%c0_42, %c146] : memref<16x512xf32, #tpu.memory_space<vmem>>, vector<16x288xf32>
    %cst_43 = arith.constant dense<0.000000e+00> : vector<16x288xf32>
    %60 = tpu.matmul %58, %59, %cst_43 {dimension_numbers = #tpu.dot_dimension_numbers<[1], [0], [0], [1], [0, 0, 1, 1], [], []>} : vector<16x16xf32>, vector<16x288xf32>, vector<16x288xf32> -> vector<16x288xf32>
    %61 = arith.addf %56, %60 : vector<16x288xf32>
    %62 = vector.extract_strided_slice %21 {offsets = [8, 0, 0], sizes = [1, 16, 16], strides = [1, 1, 1]} : vector<9x16x16xf32> to vector<1x16x16xf32>
    %63 = vector.shape_cast %62 : vector<1x16x16xf32> to vector<16x16xf32>
    %c0_44 = arith.constant 0 : index
    %c147 = arith.constant 147 : index
    %64 = vector.load %arg15[%c0_44, %c147] : memref<16x512xf32, #tpu.memory_space<vmem>>, vector<16x288xf32>
    %cst_45 = arith.constant dense<0.000000e+00> : vector<16x288xf32>
    %65 = tpu.matmul %63, %64, %cst_45 {dimension_numbers = #tpu.dot_dimension_numbers<[1], [0], [0], [1], [0, 0, 1, 1], [], []>} : vector<16x16xf32>, vector<16x288xf32>, vector<16x288xf32> -> vector<16x288xf32>
    %66 = arith.addf %61, %65 : vector<16x288xf32>
    %67 = vector.broadcast %22 : vector<16x1xf32> to vector<16x288xf32>
    %68 = arith.addf %66, %67 : vector<16x288xf32>
    %69 = math.exp %68 : vector<16x288xf32>
    %cst_46 = arith.constant 2.000000e+00 : f32
    %70 = vector.broadcast %cst_46 : f32 to vector<16x288xf32>
    %71 = arith.mulf %70, %68 : vector<16x288xf32>
    %cst_47 = arith.constant 2.000000e+00 : f32
    %72 = vector.broadcast %cst_47 : f32 to vector<16x288xf32>
    %73 = arith.addf %69, %72 : vector<16x288xf32>
    %74 = arith.mulf %69, %73 : vector<16x288xf32>
    %cst_48 = arith.constant 2.000000e+00 : f32
    %75 = vector.broadcast %cst_48 : f32 to vector<16x288xf32>
    %76 = arith.addf %74, %75 : vector<16x288xf32>
    %77 = arith.divf %71, %76 : vector<16x288xf32>
    %78 = arith.subf %68, %77 : vector<16x288xf32>
    %79 = arith.addf %78, %15 : vector<16x288xf32>
    %80 = vector.broadcast %12 : vector<1x288xf32> to vector<16x288xf32>
    %81 = arith.mulf %79, %80 : vector<16x288xf32>
    %c0_49 = arith.constant 0 : index
    %c0_50 = arith.constant 0 : index
    %c0_51 = arith.constant 0 : index
    %82 = vector.load %arg14[%c0_49, %c0_50, %c0_51] : memref<1x16x288xf32, #tpu.memory_space<vmem>>, vector<1x16x288xf32>
    %83 = vector.shape_cast %82 : vector<1x16x288xf32> to vector<16x288xf32>
    %84 = vector.shape_cast %81 : vector<16x288xf32> to vector<1x16x288xf32>
    tpu.vector_store %arg14[%c0_49, %c0_50, %c0_51], %84 {strides = array<i32>} : memref<1x16x288xf32, #tpu.memory_space<vmem>>, vector<1x16x288xf32>,
    return
  }
  func.func @transform_0(%arg0: i32) -> (i32, i32) {
    %c0_i32 = arith.constant 0 : i32
    %c0_i32_0 = arith.constant 0 : i32
    %c0_i32_1 = arith.constant 0 : i32
    return %c0_i32, %c0_i32_0 : i32, i32
  }
  func.func @transform_1(%arg0: i32) -> (i32, i32, i32) {
    %c0_i32 = arith.constant 0 : i32
    %c0_i32_0 = arith.constant 0 : i32
    %c0_i32_1 = arith.constant 0 : i32
    return %arg0, %c0_i32, %c0_i32_0 : i32, i32, i32
  }
  func.func @transform_2(%arg0: i32) -> (i32, i32, i32, i32) {
    %c0_i32 = arith.constant 0 : i32
    %c0_i32_0 = arith.constant 0 : i32
    %c0_i32_1 = arith.constant 0 : i32
    %c0_i32_2 = arith.constant 0 : i32
    %c0_i32_3 = arith.constant 0 : i32
    return %c0_i32, %c0_i32_0, %c0_i32_1, %c0_i32_2 : i32, i32, i32, i32
  }
  func.func @transform_3(%arg0: i32) -> (i32, i32, i32) {
    %c0_i32 = arith.constant 0 : i32
    %c0_i32_0 = arith.constant 0 : i32
    %c0_i32_1 = arith.constant 0 : i32
    %c0_i32_2 = arith.constant 0 : i32
    return %c0_i32, %c0_i32_0, %c0_i32_1 : i32, i32, i32
  }
  func.func @transform_4(%arg0: i32) -> (i32, i32, i32, i32) {
    %c0_i32 = arith.constant 0 : i32
    %c0_i32_0 = arith.constant 0 : i32
    %c0_i32_1 = arith.constant 0 : i32
    %c0_i32_2 = arith.constant 0 : i32
    %c0_i32_3 = arith.constant 0 : i32
    return %c0_i32, %c0_i32_0, %c0_i32_1, %c0_i32_2 : i32, i32, i32, i32
  }
  func.func @transform_5(%arg0: i32) -> (i32, i32, i32) {
    %c0_i32 = arith.constant 0 : i32
    %c0_i32_0 = arith.constant 0 : i32
    %c0_i32_1 = arith.constant 0 : i32
    %c0_i32_2 = arith.constant 0 : i32
    return %c0_i32, %c0_i32_0, %c0_i32_1 : i32, i32, i32
  }
  func.func @transform_6(%arg0: i32) -> (i32, i32, i32) {
    %c0_i32 = arith.constant 0 : i32
    %c0_i32_0 = arith.constant 0 : i32
    %c0_i32_1 = arith.constant 0 : i32
    %c0_i32_2 = arith.constant 0 : i32
    return %c0_i32, %c0_i32_0, %c0_i32_1 : i32, i32, i32
  }
  func.func @transform_7(%arg0: i32) -> (i32, i32, i32) {
    %c0_i32 = arith.constant 0 : i32
    %c0_i32_0 = arith.constant 0 : i32
    %c0_i32_1 = arith.constant 0 : i32
    %c0_i32_2 = arith.constant 0 : i32
    return %c0_i32, %c0_i32_0, %c0_i32_1 : i32, i32, i32
  }
  func.func @transform_8(%arg0: i32) -> (i32, i32, i32) {
    %c0_i32 = arith.constant 0 : i32
    %c0_i32_0 = arith.constant 0 : i32
    %c0_i32_1 = arith.constant 0 : i32
    %c0_i32_2 = arith.constant 0 : i32
    return %c0_i32, %c0_i32_0, %c0_i32_1 : i32, i32, i32
  }
  func.func @transform_9(%arg0: i32) -> (i32, i32, i32) {
    %c0_i32 = arith.constant 0 : i32
    %c0_i32_0 = arith.constant 0 : i32
    %c0_i32_1 = arith.constant 0 : i32
    %c0_i32_2 = arith.constant 0 : i32
    return %c0_i32, %c0_i32_0, %c0_i32_1 : i32, i32, i32
  }
  func.func @transform_10(%arg0: i32) -> (i32, i32, i32, i32) {
    %c0_i32 = arith.constant 0 : i32
    %c0_i32_0 = arith.constant 0 : i32
    %c0_i32_1 = arith.constant 0 : i32
    %c0_i32_2 = arith.constant 0 : i32
    %c0_i32_3 = arith.constant 0 : i32
    return %c0_i32, %c0_i32_0, %c0_i32_1, %c0_i32_2 : i32, i32, i32, i32
  }
  func.func @transform_11(%arg0: i32) -> (i32, i32, i32) {
    %c0_i32 = arith.constant 0 : i32
    %c0_i32_0 = arith.constant 0 : i32
    %c0_i32_1 = arith.constant 0 : i32
    %c0_i32_2 = arith.constant 0 : i32
    return %c0_i32, %c0_i32_0, %c0_i32_1 : i32, i32, i32
  }
  func.func @transform_12(%arg0: i32) -> (i32, i32) {
    %c0_i32 = arith.constant 0 : i32
    %c0_i32_0 = arith.constant 0 : i32
    %c0_i32_1 = arith.constant 0 : i32
    return %c0_i32, %c0_i32_0 : i32, i32
  }
  func.func @transform_13(%arg0: i32) -> (i32, i32, i32) {
    %c0_i32 = arith.constant 0 : i32
    %c0_i32_0 = arith.constant 0 : i32
    %c0_i32_1 = arith.constant 0 : i32
    return %arg0, %c0_i32, %c0_i32_0 : i32, i32, i32
  }
}

</mosaic_0001>

<llo_original>
// kernel: tpu_custom_call.1
$region0: #{tpu_custom_call.1}
  #allocation0 [shape = 'u32[]', space=smem, size = 0x4, offset = 0x4, fixed_abs, tag = 'smem constant byte address 0x4 - core index']
  #allocation1 [shape = 'u32[72,128]{1,0:T(1,128)}', space=vmem, size = 0x9000, scoped, tag = 'internal scratch']
  #allocation2 [shape = 'f32[16,512]{1,0:T(8,128)}', space=vmem, size = 0x8000, scoped, tag = 'scratch operand']
  #allocation3 [shape = 'f32[16,512]{1,0:T(8,128)}', space=vmem, size = 0x8000, scoped, tag = 'scratch operand']
  #allocation4 [shape = 'f32[2,512]{1,0:T(2,128)}', space=vmem, size = 0x1000, scoped, tag = 'scratch operand']
  %s0 = inlined_call_operand.vmem [shape: f32[1,288], index: 0, kind: input, shape index: {}]
  %s1 = inlined_call_operand.hbm [shape: f32[2,16,512], index: 1, kind: input, shape index: {}]
  %s2 = inlined_call_operand.hbm [shape: f32[2,9,16,16], index: 2, kind: input, shape index: {}]
  %s3 = inlined_call_operand.vmem [shape: f32[2,16,1], index: 3, kind: input, shape index: {}]
  %s4 = inlined_call_operand.hbm [shape: f32[2,9,16,16], index: 4, kind: input, shape index: {}]
  %s5 = inlined_call_operand.vmem [shape: f32[2,16,1], index: 5, kind: input, shape index: {}]
  %s6 = inlined_call_operand.vmem [shape: f32[2,16,1], index: 6, kind: input, shape index: {}]
  %s7 = inlined_call_operand.vmem [shape: f32[2,1,1], index: 7, kind: input, shape index: {}]
  %s8 = inlined_call_operand.vmem [shape: f32[2,16,1], index: 8, kind: input, shape index: {}]
  %s9 = inlined_call_operand.vmem [shape: f32[2,16,1], index: 9, kind: input, shape index: {}]
  %s10 = inlined_call_operand.vmem [shape: f32[2,9,2,1], index: 10, kind: input, shape index: {}]
  %s11 = inlined_call_operand.hbm [shape: f32[9,16,16], index: 11, kind: input, shape index: {}]
  %s12 = inlined_call_operand.vmem [shape: f32[16,1], index: 12, kind: input, shape index: {}]
  %s13 = inlined_call_operand.hbm [shape: f32[2,16,288], index: 13, kind: output, shape index: {}]
  %s14 = sld [smem:[#allocation0]]
  $region108: #{tpu_custom_call.1} parent=0
    _
  %s16 = ssub.s32 1, %s14
  %s17 = scalar_select 0, %s16, %s14
  $region1: #{tpu_custom_call.1} parent=0
    #allocation5 [shape = 'u8[65536]{0}', space=vmem, size = 0x10000, scoped, tag = 'input window, operand 1']
    #allocation6 [shape = 's32[2]{0}', space=sflag, size = 0x8, scoped, tag = 'scoped memory for tpu_custom_call.1']
    #allocation7 [shape = 's32[2]{0}', space=sflag, size = 0x8, scoped, tag = 'scoped memory for tpu_custom_call.1']
    #allocation8 [shape = 'u8[147456]{0}', space=vmem, size = 0x24000, scoped, tag = 'input window, operand 2, single buffered']
    #allocation9 [shape = 's32[1]{0}', space=sflag, size = 0x4, scoped, tag = 'scoped memory for tpu_custom_call.1']
    #allocation10 [shape = 'u8[147456]{0}', space=vmem, size = 0x24000, scoped, tag = 'input window, operand 4, single buffered']
    #allocation11 [shape = 'u8[73728]{0}', space=vmem, size = 0x12000, scoped, tag = 'input window, operand 11, single buffered']
    #allocation12 [shape = 's32[1]{0}', space=sflag, size = 0x4, scoped, tag = 'scoped memory for tpu_custom_call.1']
    #allocation13 [shape = 'u8[49152]{0}', space=vmem, size = 0xc000, scoped, tag = 'output window, operand 0']
    %18 = vsyncpa [#allocation6], 0
    %s19 = scalar_lea.sflag [#allocation6], 1
    %20 = vsyncpa %s19, 0
    %21 = vsyncpa [#allocation9], 0
    %22 = vsyncpa [#allocation12], 0
    %23 = vsyncpa [#allocation7], 0
    %s24 = scalar_lea.sflag [#allocation7], 1
    %25 = vsyncpa %s24, 0
    loop: start=0, step=1, limit=4
    $region2: #{tpu_custom_call.1} parent=1 // loop_pre_header
      _
    $region3: #{tpu_custom_call.1} parent=1 // loop_header
      %s27 = sphi 0, %s31
      %p28 = scmp.ge.s32.totalorder %s27, 4
      %s35 = sphi 0, %s35
      %s37 = sphi 0, %s35
      %s38 = sphi 0, %s37
      %s52 = sphi 0, %s38
      %s58 = sphi 0, %s60
      %s61 = sphi 0, %s58
      %s62 = sphi 0, %s61
      %s78 = sphi 0, %s62
      %s82 = sphi 0, %s82
      %s84 = sphi 0, %s82
      %s85 = sphi 0, %s84
      %s99 = sphi 0, %s85
      %s103 = sphi 0, %s103
      %s105 = sphi 0, %s103
      %s106 = sphi 0, %s105
      %s120 = sphi 0, %s106
      %s124 = sphi 0, %s124
      %s126 = sphi 0, %s124
      %s127 = sphi 0, %s126
      %s141 = sphi 0, %s127
      %s145 = sphi 0, %s145
      %s147 = sphi 0, %s145
      %s148 = sphi 0, %s147
      %s162 = sphi 0, %s148
      %s166 = sphi 0, %s166
      %s168 = sphi 0, %s166
      %s169 = sphi 0, %s168
      %s183 = sphi 0, %s169
      %s187 = sphi 0, %s187
      %s189 = sphi 0, %s187
      %s190 = sphi 0, %s189
      %s204 = sphi 0, %s190
      %s208 = sphi 0, %s208
      %s210 = sphi 0, %s208
      %s211 = sphi 0, %s210
      %s225 = sphi 0, %s211
      %s229 = sphi 0, %s229
      %s231 = sphi 0, %s229
      %s232 = sphi 0, %s231
      %s246 = sphi 0, %s232
      %s250 = sphi 0, %s250
      %s252 = sphi 0, %s250
      %s253 = sphi 0, %s252
      %s267 = sphi 0, %s253
      %s271 = sphi 0, %s271
      %s273 = sphi 0, %s271
      %s274 = sphi 0, %s273
      %s288 = sphi 0, %s274
      %s292 = sphi 0, %s292
      %s294 = sphi 0, %s292
      %s295 = sphi 0, %s294
      %s309 = sphi 0, %s295
      %s315 = sphi 0, %s317
      %s318 = sphi 0, %s315
      %s319 = sphi 0, %s318
      %s335 = sphi 0, %s319
    $region4: #{tpu_custom_call.1} parent=1 // loop_header_branch
      %30 = sbr.rel (%p28) target = $region8
    $region5: #{tpu_custom_call.1} parent=1 // loop_body
      %s32 = ssub.s32 %s27, 1
      %s33 = ssub.s32 %s27, 2
      %s34 = sadd.s32 %s27, 1
      %s36 = sadd.s32 %s35, 1
      %p39 = scmp.eq.s32.totalorder %s27, 1
      %p40 = scmp.ne.s32.totalorder %s35, %s37
      %p41 = scmp.eq.s32.totalorder %s27, 0
      %p42 = por %p40, %p41
      %p43 = scmp.ne.s32.totalorder %s35, %s37
      %p44 = scmp.eq.s32.totalorder %s32, 1
      %p45 = por %p43, %p44
      %p46 = scmp.ne.s32.totalorder %s37, %s38
      %p47 = scmp.eq.s32.totalorder %s32, 0
      %p48 = por %p46, %p47
      %p49 = scmp.ne.s32.totalorder %s37, %s38
      %p50 = scmp.eq.s32.totalorder %s33, 1
      %p51 = por %p49, %p50
      %p53 = scmp.ne.s32.totalorder %s38, %s52
      %p54 = scmp.eq.s32.totalorder %s33, 0
      %p55 = por %p53, %p54
      %s56 = ssub.s32 %s27, %s34
      %p57 = scmp.eq.s32.totalorder %s56, 0
      %s59 = sadd.s32 %s58, 1
      %s60 = scalar_select %p57, %s58, %s59
      %p63 = pneg %p57
      %p64 = scmp.eq.s32.totalorder %s27, 1
      %p65 = por %p63, %p64
      %p66 = scmp.ne.s32.totalorder %s58, %s61
      %p67 = scmp.eq.s32.totalorder %s27, 0
      %p68 = por %p66, %p67
      %p69 = scmp.ne.s32.totalorder %s58, %s61
      %p70 = scmp.eq.s32.totalorder %s32, 1
      %p71 = por %p69, %p70
      %p72 = scmp.ne.s32.totalorder %s61, %s62
      %p73 = scmp.eq.s32.totalorder %s32, 0
      %p74 = por %p72, %p73
      %p75 = scmp.ne.s32.totalorder %s61, %s62
      %p76 = scmp.eq.s32.totalorder %s33, 1
      %p77 = por %p75, %p76
      %p79 = scmp.ne.s32.totalorder %s62, %s78
      %p80 = scmp.eq.s32.totalorder %s33, 0
      %p81 = por %p79, %p80
      %s83 = sadd.s32 %s82, 1
      %p86 = scmp.eq.s32.totalorder %s27, 1
      %p87 = scmp.ne.s32.totalorder %s82, %s84
      %p88 = scmp.eq.s32.totalorder %s27, 0
      %p89 = por %p87, %p88
      %p90 = scmp.ne.s32.totalorder %s82, %s84
      %p91 = scmp.eq.s32.totalorder %s32, 1
      %p92 = por %p90, %p91
      %p93 = scmp.ne.s32.totalorder %s84, %s85
      %p94 = scmp.eq.s32.totalorder %s32, 0
      %p95 = por %p93, %p94
      %p96 = scmp.ne.s32.totalorder %s84, %s85
      %p97 = scmp.eq.s32.totalorder %s33, 1
      %p98 = por %p96, %p97
      %p100 = scmp.ne.s32.totalorder %s85, %s99
      %p101 = scmp.eq.s32.totalorder %s33, 0
      %p102 = por %p100, %p101
      %s104 = sadd.s32 %s103, 1
      %p107 = scmp.eq.s32.totalorder %s27, 1
      %p108 = scmp.ne.s32.totalorder %s103, %s105
      %p109 = scmp.eq.s32.totalorder %s27, 0
      %p110 = por %p108, %p109
      %p111 = scmp.ne.s32.totalorder %s103, %s105
      %p112 = scmp.eq.s32.totalorder %s32, 1
      %p113 = por %p111, %p112
      %p114 = scmp.ne.s32.totalorder %s105, %s106
      %p115 = scmp.eq.s32.totalorder %s32, 0
      %p116 = por %p114, %p115
      %p117 = scmp.ne.s32.totalorder %s105, %s106
      %p118 = scmp.eq.s32.totalorder %s33, 1
      %p119 = por %p117, %p118
      %p121 = scmp.ne.s32.totalorder %s106, %s120
      %p122 = scmp.eq.s32.totalorder %s33, 0
      %p123 = por %p121, %p122
      %s125 = sadd.s32 %s124, 1
      %p128 = scmp.eq.s32.totalorder %s27, 1
      %p129 = scmp.ne.s32.totalorder %s124, %s126
      %p130 = scmp.eq.s32.totalorder %s27, 0
      %p131 = por %p129, %p130
      %p132 = scmp.ne.s32.totalorder %s124, %s126
      %p133 = scmp.eq.s32.totalorder %s32, 1
      %p134 = por %p132, %p133
      %p135 = scmp.ne.s32.totalorder %s126, %s127
      %p136 = scmp.eq.s32.totalorder %s32, 0
      %p137 = por %p135, %p136
      %p138 = scmp.ne.s32.totalorder %s126, %s127
      %p139 = scmp.eq.s32.totalorder %s33, 1
      %p140 = por %p138, %p139
      %p142 = scmp.ne.s32.totalorder %s127, %s141
      %p143 = scmp.eq.s32.totalorder %s33, 0
      %p144 = por %p142, %p143
      %s146 = sadd.s32 %s145, 1
      %p149 = scmp.eq.s32.totalorder %s27, 1
      %p150 = scmp.ne.s32.totalorder %s145, %s147
      %p151 = scmp.eq.s32.totalorder %s27, 0
      %p152 = por %p150, %p151
      %p153 = scmp.ne.s32.totalorder %s145, %s147
      %p154 = scmp.eq.s32.totalorder %s32, 1
      %p155 = por %p153, %p154
      %p156 = scmp.ne.s32.totalorder %s147, %s148
      %p157 = scmp.eq.s32.totalorder %s32, 0
      %p158 = por %p156, %p157
      %p159 = scmp.ne.s32.totalorder %s147, %s148
      %p160 = scmp.eq.s32.totalorder %s33, 1
      %p161 = por %p159, %p160
      %p163 = scmp.ne.s32.totalorder %s148, %s162
      %p164 = scmp.eq.s32.totalorder %s33, 0
      %p165 = por %p163, %p164
      %s167 = sadd.s32 %s166, 1
      %p170 = scmp.eq.s32.totalorder %s27, 1
      %p171 = scmp.ne.s32.totalorder %s166, %s168
      %p172 = scmp.eq.s32.totalorder %s27, 0
      %p173 = por %p171, %p172
      %p174 = scmp.ne.s32.totalorder %s166, %s168
      %p175 = scmp.eq.s32.totalorder %s32, 1
      %p176 = por %p174, %p175
      %p177 = scmp.ne.s32.totalorder %s168, %s169
      %p178 = scmp.eq.s32.totalorder %s32, 0
      %p179 = por %p177, %p178
      %p180 = scmp.ne.s32.totalorder %s168, %s169
      %p181 = scmp.eq.s32.totalorder %s33, 1
      %p182 = por %p180, %p181
      %p184 = scmp.ne.s32.totalorder %s169, %s183
      %p185 = scmp.eq.s32.totalorder %s33, 0
      %p186 = por %p184, %p185
      %s188 = sadd.s32 %s187, 1
      %p191 = scmp.eq.s32.totalorder %s27, 1
      %p192 = scmp.ne.s32.totalorder %s187, %s189
      %p193 = scmp.eq.s32.totalorder %s27, 0
      %p194 = por %p192, %p193
      %p195 = scmp.ne.s32.totalorder %s187, %s189
      %p196 = scmp.eq.s32.totalorder %s32, 1
      %p197 = por %p195, %p196
      %p198 = scmp.ne.s32.totalorder %s189, %s190
      %p199 = scmp.eq.s32.totalorder %s32, 0
      %p200 = por %p198, %p199
      %p201 = scmp.ne.s32.totalorder %s189, %s190
      %p202 = scmp.eq.s32.totalorder %s33, 1
      %p203 = por %p201, %p202
      %p205 = scmp.ne.s32.totalorder %s190, %s204
      %p206 = scmp.eq.s32.totalorder %s33, 0
      %p207 = por %p205, %p206
      %s209 = sadd.s32 %s208, 1
      %p212 = scmp.eq.s32.totalorder %s27, 1
      %p213 = scmp.ne.s32.totalorder %s208, %s210
      %p214 = scmp.eq.s32.totalorder %s27, 0
      %p215 = por %p213, %p214
      %p216 = scmp.ne.s32.totalorder %s208, %s210
      %p217 = scmp.eq.s32.totalorder %s32, 1
      %p218 = por %p216, %p217
      %p219 = scmp.ne.s32.totalorder %s210, %s211
      %p220 = scmp.eq.s32.totalorder %s32, 0
      %p221 = por %p219, %p220
      %p222 = scmp.ne.s32.totalorder %s210, %s211
      %p223 = scmp.eq.s32.totalorder %s33, 1
      %p224 = por %p222, %p223
      %p226 = scmp.ne.s32.totalorder %s211, %s225
      %p227 = scmp.eq.s32.totalorder %s33, 0
      %p228 = por %p226, %p227
      %s230 = sadd.s32 %s229, 1
      %p233 = scmp.eq.s32.totalorder %s27, 1
      %p234 = scmp.ne.s32.totalorder %s229, %s231
      %p235 = scmp.eq.s32.totalorder %s27, 0
      %p236 = por %p234, %p235
      %p237 = scmp.ne.s32.totalorder %s229, %s231
      %p238 = scmp.eq.s32.totalorder %s32, 1
      %p239 = por %p237, %p238
      %p240 = scmp.ne.s32.totalorder %s231, %s232
      %p241 = scmp.eq.s32.totalorder %s32, 0
      %p242 = por %p240, %p241
      %p243 = scmp.ne.s32.totalorder %s231, %s232
      %p244 = scmp.eq.s32.totalorder %s33, 1
      %p245 = por %p243, %p244
      %p247 = scmp.ne.s32.totalorder %s232, %s246
      %p248 = scmp.eq.s32.totalorder %s33, 0
      %p249 = por %p247, %p248
      %s251 = sadd.s32 %s250, 1
      %p254 = scmp.eq.s32.totalorder %s27, 1
      %p255 = scmp.ne.s32.totalorder %s250, %s252
      %p256 = scmp.eq.s32.totalorder %s27, 0
      %p257 = por %p255, %p256
      %p258 = scmp.ne.s32.totalorder %s250, %s252
      %p259 = scmp.eq.s32.totalorder %s32, 1
      %p260 = por %p258, %p259
      %p261 = scmp.ne.s32.totalorder %s252, %s253
      %p262 = scmp.eq.s32.totalorder %s32, 0
      %p263 = por %p261, %p262
      %p264 = scmp.ne.s32.totalorder %s252, %s253
      %p265 = scmp.eq.s32.totalorder %s33, 1
      %p266 = por %p264, %p265
      %p268 = scmp.ne.s32.totalorder %s253, %s267
      %p269 = scmp.eq.s32.totalorder %s33, 0
      %p270 = por %p268, %p269
      %s272 = sadd.s32 %s271, 1
      %p275 = scmp.eq.s32.totalorder %s27, 1
      %p276 = scmp.ne.s32.totalorder %s271, %s273
      %p277 = scmp.eq.s32.totalorder %s27, 0
      %p278 = por %p276, %p277
      %p279 = scmp.ne.s32.totalorder %s271, %s273
      %p280 = scmp.eq.s32.totalorder %s32, 1
      %p281 = por %p279, %p280
      %p282 = scmp.ne.s32.totalorder %s273, %s274
      %p283 = scmp.eq.s32.totalorder %s32, 0
      %p284 = por %p282, %p283
      %p285 = scmp.ne.s32.totalorder %s273, %s274
      %p286 = scmp.eq.s32.totalorder %s33, 1
      %p287 = por %p285, %p286
      %p289 = scmp.ne.s32.totalorder %s274, %s288
      %p290 = scmp.eq.s32.totalorder %s33, 0
      %p291 = por %p289, %p290
      %s293 = sadd.s32 %s292, 1
      %p296 = scmp.eq.s32.totalorder %s27, 1
      %p297 = scmp.ne.s32.totalorder %s292, %s294
      %p298 = scmp.eq.s32.totalorder %s27, 0
      %p299 = por %p297, %p298
      %p300 = scmp.ne.s32.totalorder %s292, %s294
      %p301 = scmp.eq.s32.totalorder %s32, 1
      %p302 = por %p300, %p301
      %p303 = scmp.ne.s32.totalorder %s294, %s295
      %p304 = scmp.eq.s32.totalorder %s32, 0
      %p305 = por %p303, %p304
      %p306 = scmp.ne.s32.totalorder %s294, %s295
      %p307 = scmp.eq.s32.totalorder %s33, 1
      %p308 = por %p306, %p307
      %p310 = scmp.ne.s32.totalorder %s295, %s309
      %p311 = scmp.eq.s32.totalorder %s33, 0
      %p312 = por %p310, %p311
      %s313 = ssub.s32 %s27, %s34
      %p314 = scmp.eq.s32.totalorder %s313, 0
      %s316 = sadd.s32 %s315, 1
      %s317 = scalar_select %p314, %s315, %s316
      %p320 = pneg %p314
      %p321 = scmp.eq.s32.totalorder %s27, 1
      %p322 = por %p320, %p321
      %p323 = scmp.ne.s32.totalorder %s315, %s318
      %p324 = scmp.eq.s32.totalorder %s27, 0
      %p325 = por %p323, %p324
      %p326 = scmp.ne.s32.totalorder %s315, %s318
      %p327 = scmp.eq.s32.totalorder %s32, 1
      %p328 = por %p326, %p327
      %p329 = scmp.ne.s32.totalorder %s318, %s319
      %p330 = scmp.eq.s32.totalorder %s32, 0
      %p331 = por %p329, %p330
      %p332 = scmp.ne.s32.totalorder %s318, %s319
      %p333 = scmp.eq.s32.totalorder %s33, 1
      %p334 = por %p332, %p333
      %p336 = scmp.ne.s32.totalorder %s319, %s335
      %p337 = scmp.eq.s32.totalorder %s33, 0
      %p338 = por %p336, %p337
      %p339 = scmp.le.s32.totalorder 1, %s27
      %p340 = scmp.lt.s32.totalorder %s27, 3
      %p341 = pnand %p339, %p340
      %p342 = pneg %p341
      // Predicated region
      $region9: #{tpu_custom_call.1} parent=5 // pred_check
        _
      $region10: #{tpu_custom_call.1} parent=5 // pred_check_branch
        %344 = sbr.rel (%p341) target = $region12
      $region11: #{tpu_custom_call.1} parent=5 // pred_region
        %s345 = ssub.s32 %s27, 1
        // Predicated region
        $region13: #{tpu_custom_call.1} parent=11 // pred_check
          %p346 = pneg %p48
        $region14: #{tpu_custom_call.1} parent=11 // pred_check_branch
          %348 = sbr.rel (%p346) target = $region16
        $region15: #{tpu_custom_call.1} parent=11 // pred_region
          _
        $region16: #{tpu_custom_call.1} parent=11 // pred_fallthru
          _
        // Predicated region
        $region17: #{tpu_custom_call.1} parent=11 // pred_check
          %p349 = pneg %p95
        $region18: #{tpu_custom_call.1} parent=11 // pred_check_branch
          %351 = sbr.rel (%p349) target = $region20
        $region19: #{tpu_custom_call.1} parent=11 // pred_region
          %353 = vsyncadd [#allocation9], 0
          %s354 = sshll.u32 %s2, 4
          %s355 = int_to_ptr.hbm [resolvable:$true] %s354
          %s356 = sshll.u32 [#allocation8], 4
          %s357 = int_to_ptr.vmem [resolvable:$true] %s356
          %362 = dma.hbm_to_vmem [thread:$0]  %s355, 4608, %s357, [#allocation9], 128, 128, 8
        $region20: #{tpu_custom_call.1} parent=11 // pred_fallthru
          _
        // Predicated region
        $region21: #{tpu_custom_call.1} parent=11 // pred_check
          %p363 = pneg %p116
        $region22: #{tpu_custom_call.1} parent=11 // pred_check_branch
          %365 = sbr.rel (%p363) target = $region24
        $region23: #{tpu_custom_call.1} parent=11 // pred_region
          _
        $region24: #{tpu_custom_call.1} parent=11 // pred_fallthru
          _
        // Predicated region
        $region25: #{tpu_custom_call.1} parent=11 // pred_check
          %p366 = pneg %p137
        $region26: #{tpu_custom_call.1} parent=11 // pred_check_branch
          %368 = sbr.rel (%p366) target = $region28
        $region27: #{tpu_custom_call.1} parent=11 // pred_region
          %370 = vsyncadd [#allocation9], 0
          %s371 = sshll.u32 %s4, 4
          %s372 = int_to_ptr.hbm [resolvable:$true] %s371
          %s373 = sshll.u32 [#allocation10], 4
          %s374 = int_to_ptr.vmem [resolvable:$true] %s373
          %379 = dma.hbm_to_vmem [thread:$0]  %s372, 4608, %s374, [#allocation9], 128, 128, 8
        $region28: #{tpu_custom_call.1} parent=11 // pred_fallthru
          _
        // Predicated region
        $region29: #{tpu_custom_call.1} parent=11 // pred_check
          %p380 = pneg %p158
        $region30: #{tpu_custom_call.1} parent=11 // pred_check_branch
          %382 = sbr.rel (%p380) target = $region32
        $region31: #{tpu_custom_call.1} parent=11 // pred_region
          _
        $region32: #{tpu_custom_call.1} parent=11 // pred_fallthru
          _
        // Predicated region
        $region33: #{tpu_custom_call.1} parent=11 // pred_check
          %p383 = pneg %p179
        $region34: #{tpu_custom_call.1} parent=11 // pred_check_branch
          %385 = sbr.rel (%p383) target = $region36
        $region35: #{tpu_custom_call.1} parent=11 // pred_region
          _
        $region36: #{tpu_custom_call.1} parent=11 // pred_fallthru
          _
        // Predicated region
        $region37: #{tpu_custom_call.1} parent=11 // pred_check
          %p386 = pneg %p200
        $region38: #{tpu_custom_call.1} parent=11 // pred_check_branch
          %388 = sbr.rel (%p386) target = $region40
        $region39: #{tpu_custom_call.1} parent=11 // pred_region
          _
        $region40: #{tpu_custom_call.1} parent=11 // pred_fallthru
          _
        // Predicated region
        $region41: #{tpu_custom_call.1} parent=11 // pred_check
          %p389 = pneg %p221
        $region42: #{tpu_custom_call.1} parent=11 // pred_check_branch
          %391 = sbr.rel (%p389) target = $region44
        $region43: #{tpu_custom_call.1} parent=11 // pred_region
          _
        $region44: #{tpu_custom_call.1} parent=11 // pred_fallthru
          _
        // Predicated region
        $region45: #{tpu_custom_call.1} parent=11 // pred_check
          %p392 = pneg %p242
        $region46: #{tpu_custom_call.1} parent=11 // pred_check_branch
          %394 = sbr.rel (%p392) target = $region48
        $region47: #{tpu_custom_call.1} parent=11 // pred_region
          _
        $region48: #{tpu_custom_call.1} parent=11 // pred_fallthru
          _
        // Predicated region
        $region49: #{tpu_custom_call.1} parent=11 // pred_check
          %p395 = pneg %p263
        $region50: #{tpu_custom_call.1} parent=11 // pred_check_branch
          %397 = sbr.rel (%p395) target = $region52
        $region51: #{tpu_custom_call.1} parent=11 // pred_region
          _
        $region52: #{tpu_custom_call.1} parent=11 // pred_fallthru
          _
        // Predicated region
        $region53: #{tpu_custom_call.1} parent=11 // pred_check
          %p398 = pneg %p284
        $region54: #{tpu_custom_call.1} parent=11 // pred_check_branch
          %400 = sbr.rel (%p398) target = $region56
        $region55: #{tpu_custom_call.1} parent=11 // pred_region
          %402 = vsyncadd [#allocation12], 0
          %s403 = sshll.u32 %s11, 4
          %s404 = int_to_ptr.hbm [resolvable:$true] %s403
          %s405 = sshll.u32 [#allocation11], 4
          %s406 = int_to_ptr.vmem [resolvable:$true] %s405
          %411 = dma.hbm_to_vmem [thread:$0]  %s404, 2304, %s406, [#allocation12], 128, 128, 8
        $region56: #{tpu_custom_call.1} parent=11 // pred_fallthru
          _
        // Predicated region
        $region57: #{tpu_custom_call.1} parent=11 // pred_check
          %p412 = pneg %p305
        $region58: #{tpu_custom_call.1} parent=11 // pred_check_branch
          %414 = sbr.rel (%p412) target = $region60
        $region59: #{tpu_custom_call.1} parent=11 // pred_region
          _
        $region60: #{tpu_custom_call.1} parent=11 // pred_fallthru
          _
      $region12: #{tpu_custom_call.1} parent=5 // pred_fallthru
        _
      %p415 = scmp.lt.s32.totalorder %s27, 2
      // Predicated region
      $region61: #{tpu_custom_call.1} parent=5 // pred_check
        %p416 = pneg %p415
      $region62: #{tpu_custom_call.1} parent=5 // pred_check_branch
        %418 = sbr.rel (%p416) target = $region64
      $region63: #{tpu_custom_call.1} parent=5 // pred_region
        // Predicated region
        $region65: #{tpu_custom_call.1} parent=63 // pred_check
          %p419 = pneg %p68
        $region66: #{tpu_custom_call.1} parent=63 // pred_check_branch
          %421 = sbr.rel (%p419) target = $region68
        $region67: #{tpu_custom_call.1} parent=63 // pred_region
          %s422 = sand.u32 %s58, 1
          %s423 = scalar_lea.sflag [#allocation6], %s422
          %s424 = sand.u32 %s58, 1
          %s425 = smul.addr %s424, 64
          %s426 = scalar_lea.vmem [#allocation5], %s425
          %428 = vsyncadd %s423, 0
          %s429 = smul.addr %s27, 8
          %s430 = smul.addr %s429, 8
          %s431 = scalar_lea.hbm %s1, %s430
          %s432 = sshll.u32 %s431, 4
          %s433 = int_to_ptr.hbm [resolvable:$true] %s432
          %s434 = sshll.u32 %s426, 4
          %s435 = int_to_ptr.vmem [resolvable:$true] %s434
          %440 = dma.hbm_to_vmem [thread:$0]  %s433, 1024, %s435, %s423, 512, 512, 32
        $region68: #{tpu_custom_call.1} parent=63 // pred_fallthru
          _
      $region64: #{tpu_custom_call.1} parent=5 // pred_fallthru
        _
      %p441 = scmp.le.s32.totalorder 1, %s27
      %p442 = scmp.lt.s32.totalorder %s27, 3
      %p443 = pnand %p441, %p442
      %p444 = pneg %p443
      // Predicated region
      $region69: #{tpu_custom_call.1} parent=5 // pred_check
        _
      $region70: #{tpu_custom_call.1} parent=5 // pred_check_branch
        %446 = sbr.rel (%p443) target = $region72
      $region71: #{tpu_custom_call.1} parent=5 // pred_region
        %s447 = ssub.s32 %s27, 1
        %s448 = sand.u32 %s61, 1
        %s449 = scalar_lea.sflag [#allocation6], %s448
        %s450 = sand.u32 %s61, 1
        %s451 = smul.addr %s450, 64
        %s452 = scalar_lea.vmem [#allocation5], %s451
        // Predicated region
        $region73: #{tpu_custom_call.1} parent=71 // pred_check
          %p453 = pneg %p74
        $region74: #{tpu_custom_call.1} parent=71 // pred_check_branch
          %455 = sbr.rel (%p453) target = $region76
        $region75: #{tpu_custom_call.1} parent=71 // pred_region
          %457 = dma.done %s449, 1024
        $region76: #{tpu_custom_call.1} parent=71 // pred_fallthru
          _
        // Predicated region
        $region77: #{tpu_custom_call.1} parent=71 // pred_check
          %p458 = pneg %p95
        $region78: #{tpu_custom_call.1} parent=71 // pred_check_branch
          %460 = sbr.rel (%p458) target = $region80
        $region79: #{tpu_custom_call.1} parent=71 // pred_region
          %462 = dma.done [#allocation9], 4608
        $region80: #{tpu_custom_call.1} parent=71 // pred_fallthru
          _
        // Predicated region
        $region81: #{tpu_custom_call.1} parent=71 // pred_check
          %p463 = pneg %p137
        $region82: #{tpu_custom_call.1} parent=71 // pred_check_branch
          %465 = sbr.rel (%p463) target = $region84
        $region83: #{tpu_custom_call.1} parent=71 // pred_region
          %467 = dma.done [#allocation9], 4608
        $region84: #{tpu_custom_call.1} parent=71 // pred_fallthru
          _
        // Predicated region
        $region85: #{tpu_custom_call.1} parent=71 // pred_check
          %p468 = pneg %p284
        $region86: #{tpu_custom_call.1} parent=71 // pred_check_branch
          %470 = sbr.rel (%p468) target = $region88
        $region87: #{tpu_custom_call.1} parent=71 // pred_region
          %472 = dma.done [#allocation12], 2304
        $region88: #{tpu_custom_call.1} parent=71 // pred_fallthru
          _
        %p473 = pneg %p48
        %p474 = pneg %p45
        %s475 = sand.u32 %s61, 1
        %s476 = scalar_lea.sflag [#allocation6], %s475
        %s477 = sand.u32 %s61, 1
        %s478 = smul.addr %s477, 64
        %s479 = scalar_lea.vmem [#allocation5], %s478
        %p480 = pneg %p74
        %p481 = pneg %p71
        %p482 = pneg %p95
        %p483 = pneg %p92
        %p484 = pneg %p116
        %p485 = pneg %p113
        %p486 = pneg %p137
        %p487 = pneg %p134
        %p488 = pneg %p158
        %p489 = pneg %p155
        %p490 = pneg %p179
        %p491 = pneg %p176
        %p492 = pneg %p200
        %p493 = pneg %p197
        %p494 = pneg %p221
        %p495 = pneg %p218
        %p496 = pneg %p242
        %p497 = pneg %p239
        %p498 = pneg %p263
        %p499 = pneg %p260
        %p500 = pneg %p284
        %p501 = pneg %p281
        %p502 = pneg %p305
        %p503 = pneg %p302
        %p504 = pneg %p331
        %p505 = pneg %p328
        %s506 = sand.u32 %s318, 1
        %s507 = scalar_lea.sflag [#allocation7], %s506
        %s508 = sand.u32 %s318, 1
        %s509 = smul.addr %s508, 48
        %s510 = scalar_lea.vmem [#allocation13], %s509
        %511 = vst [vmem:[#allocation2] sm:$0xff] 0.0
        %512 = vst [vmem:[#allocation2 + $0x20] sm:$0xff] 0.0
        %vm513 = vcmask 1047808
        %514 = vst.msk [vmem:[#allocation2 + $0x18] sm:$0xff] %vm513, 0.0
        %515 = vst.msk [vmem:[#allocation2 + $0x38] sm:$0xff] %vm513, 0.0
        %516 = vst [vmem:[#allocation3] sm:$0xff] 0.0
        %517 = vst [vmem:[#allocation3 + $0x20] sm:$0xff] 0.0
        %518 = vst.msk [vmem:[#allocation3 + $0x18] sm:$0xff] %vm513, 0.0
        %519 = vst.msk [vmem:[#allocation3 + $0x38] sm:$0xff] %vm513, 0.0
        %520 = vst [vmem:[#allocation4] sm:$0x3] 0.0
        %vm521 = vcmask 1041664
        %522 = vst.msk [vmem:[#allocation4 + $0x6] sm:$0x3] %vm521, 0.0
        %v523 = vld [vmem:[%s0] sm:$0x7]
        %v524 = vld [vmem:[%s452 + $0x8] sm:$0xff]
        %v525 = vld [vmem:[%s452 + $0x10] sm:$0xff]
        %v526 = vld [vmem:[%s452 + $0x18] sm:$0xff]
        %v527 = vld [vmem:[%s452 + $0x28] sm:$0xff]
        %v528 = vld [vmem:[%s452 + $0x30] sm:$0xff]
        %v529 = vld [vmem:[%s452 + $0x38] sm:$0xff]
        loop: start=0, step=1, limit=2
        $region89: #{tpu_custom_call.1} parent=71 // loop_pre_header
          _
        $region90: #{tpu_custom_call.1} parent=71 // loop_header
          %s531 = sphi 0, %s535
          %p532 = scmp.ge.s32.totalorder %s531, 2
          %v536 = vphi %v524, %v3197
          %v537 = vphi %v525, %v3198
          %v538 = vphi %v526, %v3199
          %v539 = vphi %v527, %v3200
          %v540 = vphi %v528, %v3201
          %v541 = vphi %v529, %v3202
        $region91: #{tpu_custom_call.1} parent=71 // loop_header_branch
          %534 = sbr.rel (%p532) target = $region95
        $region92: #{tpu_custom_call.1} parent=71 // loop_body
          %v543 = vperm.slane %v523, 0
          %v544 = vperm.slane %v523, 1
          %v545 = vperm.slane %v523, 2
          %v549 = vmul.f32 %v536, %v543
          %v550 = vmul.f32 %v537, %v544
          %v551 = vmul.f32 %v538, %v545
          %v552 = vmul.f32 %v539, %v543
          %v553 = vmul.f32 %v540, %v544
          %v554 = vmul.f32 %v541, %v545
          %555 = vst [vmem:[#allocation2 + $0x8] sm:$0xff] %v549
          %556 = vst [vmem:[#allocation2 + $0x10] sm:$0xff] %v550
          %vm557 = vcmask 261120
          %558 = vst.msk [vmem:[#allocation2 + $0x18] sm:$0xff] %vm557, %v551
          %559 = vst [vmem:[#allocation2 + $0x28] sm:$0xff] %v552
          %560 = vst [vmem:[#allocation2 + $0x30] sm:$0xff] %v553
          %561 = vst.msk [vmem:[#allocation2 + $0x38] sm:$0xff] %vm557, %v554
          %s562 = smul.u32 %s531, 144
          %s563 = scalar_lea.vmem [#allocation8], %s562
          %v564 = vld [vmem:[%s563] sm:$0xff]
          %v565 = vld [vmem:[%s563 + $0x8] sm:$0xff]
          %v566 = vld [vmem:[%s563 + $0x10] sm:$0xff]
          %v567 = vld [vmem:[%s563 + $0x18] sm:$0xff]
          %v568 = vld [vmem:[%s563 + $0x20] sm:$0xff]
          %v569 = vld [vmem:[%s563 + $0x28] sm:$0xff]
          %v570 = vld [vmem:[%s563 + $0x30] sm:$0xff]
          %v571 = vld [vmem:[%s563 + $0x38] sm:$0xff]
          %v572 = vld [vmem:[%s563 + $0x40] sm:$0xff]
          %v573 = vld [vmem:[%s563 + $0x48] sm:$0xff]
          %v574 = vld [vmem:[%s563 + $0x50] sm:$0xff]
          %v575 = vld [vmem:[%s563 + $0x58] sm:$0xff]
          %v576 = vld [vmem:[%s563 + $0x60] sm:$0xff]
          %v577 = vld [vmem:[%s563 + $0x68] sm:$0xff]
          %v578 = vld [vmem:[%s563 + $0x70] sm:$0xff]
          %v579 = vld [vmem:[%s563 + $0x78] sm:$0xff]
          %v580 = vld [vmem:[%s563 + $0x80] sm:$0xff]
          %v581 = vld [vmem:[%s563 + $0x88] sm:$0xff]
          %s582 = smul.u32 %s531, 16
          %s583 = scalar_lea.vmem %s3, %s582
          %v584 = vld [vmem:[%s583] sm:$0xff]
          %v585 = vld [vmem:[%s583 + $0x8] sm:$0xff]
          %v586 = vld [vmem:[#allocation2] sm:$0xff]
          %v587 = vld [vmem:[#allocation2 + $0x8] sm:$0xff]
          %v588 = vld [vmem:[#allocation2 + $0x10] sm:$0xff]
          %v589 = vld [vmem:[#allocation2 + $0x18] sm:$0xff]
          %v590 = vld [vmem:[#allocation2 + $0x20] sm:$0xff]
          %v591 = vld [vmem:[#allocation2 + $0x28] sm:$0xff]
          %v592 = vld [vmem:[#allocation2 + $0x30] sm:$0xff]
          %v593 = vld [vmem:[#allocation2 + $0x38] sm:$0xff]
          %602 = vrot.lane.b32.xlu0 %v586, 18
          %v603 = vpop.permute.xlu0 %602
          %604 = vrot.lane.b32.xlu0 %v587, 18
          %v605 = vpop.permute.xlu0 %604
          %606 = vrot.lane.b32.xlu0 %v588, 18
          %v607 = vpop.permute.xlu0 %606
          %608 = vrot.lane.b32.xlu0 %v589, 18
          %v609 = vpop.permute.xlu0 %608
          %610 = vrot.lane.b32.xlu0 %v590, 18
          %v611 = vpop.permute.xlu0 %610
          %612 = vrot.lane.b32.xlu0 %v591, 18
          %v613 = vpop.permute.xlu0 %612
          %614 = vrot.lane.b32.xlu0 %v592, 18
          %v615 = vpop.permute.xlu0 %614
          %616 = vrot.lane.b32.xlu0 %v593, 18
          %v617 = vpop.permute.xlu0 %616
          %vm618 = vcmask 146432
          %v619 = vsel %vm618, %v603, %v605
          %v620 = vsel %vm618, %v605, %v607
          %v621 = vsel %vm618, %v607, %v609
          %v622 = vsel %vm618, %v611, %v613
          %v623 = vsel %vm618, %v613, %v615
          %v624 = vsel %vm618, %v615, %v617
          %vm631 = vcmask 130048
          %v633 = vsel %vm631, %v566, 0
          %v636 = vsel %vm631, %v567, 0
          %638 = vmatpush.msra.mxu0 0.0
          %639 = vmatpush.msra.mxu0 0.0
          %640 = vmatpush.msra.mxu0 0.0
          %641 = vmatpush.msra.mxu0 0.0
          %642 = vmatpush.msra.mxu0 0.0
          %643 = vmatpush.msra.mxu0 0.0
          %644 = vmatpush.msra.mxu0 0.0
          %645 = vmatpush.msra.mxu0 0.0
          %646 = vmatpush.msra.mxu0 0.0
          %647 = vmatpush.msra.mxu0 0.0
          %648 = vmatpush.msra.mxu0 0.0
          %649 = vmatpush.msra.mxu0 0.0
          %650 = vmatpush.msra.mxu0 0.0
          %651 = vmatpush.msra.mxu0 0.0
          %652 = vmatpush.msra.mxu0 %v622
          %653 = vmatpush.msra.mxu0 %v619
          %654 = vmatmul.f32.gmra.mxu0 %v633
          %v655 = vpop.f32.mrf.mxu0
          %v656 = vadd.f32 0.0, %v655
          %657 = vmatmul.f32.gmra.mxu0 %v636
          %v658 = vpop.f32.mrf.mxu0
          %v659 = vadd.f32 0.0, %v658
          %660 = vdwg.mxu0
          %661 = vmatpush.msra.mxu0 0.0
          %662 = vmatpush.msra.mxu0 0.0
          %663 = vmatpush.msra.mxu0 0.0
          %664 = vmatpush.msra.mxu0 0.0
          %665 = vmatpush.msra.mxu0 0.0
          %666 = vmatpush.msra.mxu0 0.0
          %667 = vmatpush.msra.mxu0 0.0
          %668 = vmatpush.msra.mxu0 0.0
          %669 = vmatpush.msra.mxu0 0.0
          %670 = vmatpush.msra.mxu0 0.0
          %671 = vmatpush.msra.mxu0 0.0
          %672 = vmatpush.msra.mxu0 0.0
          %673 = vmatpush.msra.mxu0 0.0
          %674 = vmatpush.msra.mxu0 0.0
          %675 = vmatpush.msra.mxu0 %v623
          %676 = vmatpush.msra.mxu0 %v620
          %677 = vmatmul.f32.gmra.mxu0 %v633
          %v678 = vpop.f32.mrf.mxu0
          %v679 = vadd.f32 0.0, %v678
          %680 = vmatmul.f32.gmra.mxu0 %v636
          %v681 = vpop.f32.mrf.mxu0
          %v682 = vadd.f32 0.0, %v681
          %683 = vdwg.mxu0
          %684 = vmatpush.msra.mxu0 0.0
          %685 = vmatpush.msra.mxu0 0.0
          %686 = vmatpush.msra.mxu0 0.0
          %687 = vmatpush.msra.mxu0 0.0
          %688 = vmatpush.msra.mxu0 0.0
          %689 = vmatpush.msra.mxu0 0.0
          %690 = vmatpush.msra.mxu0 0.0
          %691 = vmatpush.msra.mxu0 0.0
          %692 = vmatpush.msra.mxu0 0.0
          %693 = vmatpush.msra.mxu0 0.0
          %694 = vmatpush.msra.mxu0 0.0
          %695 = vmatpush.msra.mxu0 0.0
          %696 = vmatpush.msra.mxu0 0.0
          %697 = vmatpush.msra.mxu0 0.0
          %698 = vmatpush.msra.mxu0 %v624
          %699 = vmatpush.msra.mxu0 %v621
          %700 = vmatmul.f32.gmra.mxu0 %v633
          %v701 = vpop.f32.mrf.mxu0
          %v702 = vadd.f32 0.0, %v701
          %703 = vmatmul.f32.gmra.mxu0 %v636
          %v704 = vpop.f32.mrf.mxu0
          %v705 = vadd.f32 0.0, %v704
          %706 = vdwg.mxu0
          %707 = vrot.lane.b32.xlu0 %v586, 19
          %v708 = vpop.permute.xlu0 %707
          %709 = vrot.lane.b32.xlu0 %v587, 19
          %v710 = vpop.permute.xlu0 %709
          %711 = vrot.lane.b32.xlu0 %v588, 19
          %v712 = vpop.permute.xlu0 %711
          %713 = vrot.lane.b32.xlu0 %v589, 19
          %v714 = vpop.permute.xlu0 %713
          %715 = vrot.lane.b32.xlu0 %v590, 19
          %v716 = vpop.permute.xlu0 %715
          %717 = vrot.lane.b32.xlu0 %v591, 19
          %v718 = vpop.permute.xlu0 %717
          %719 = vrot.lane.b32.xlu0 %v592, 19
          %v720 = vpop.permute.xlu0 %719
          %721 = vrot.lane.b32.xlu0 %v593, 19
          %v722 = vpop.permute.xlu0 %721
          %vm723 = vcmask 154624
          %v724 = vsel %vm723, %v708, %v710
          %v725 = vsel %vm723, %v710, %v712
          %v726 = vsel %vm723, %v712, %v714
          %v727 = vsel %vm723, %v716, %v718
          %v728 = vsel %vm723, %v718, %v720
          %v729 = vsel %vm723, %v720, %v722
          %v737 = vsel %vm631, %v564, 0
          %v740 = vsel %vm631, %v565, 0
          %742 = vmatpush.msra.mxu0 0.0
          %743 = vmatpush.msra.mxu0 0.0
          %744 = vmatpush.msra.mxu0 0.0
          %745 = vmatpush.msra.mxu0 0.0
          %746 = vmatpush.msra.mxu0 0.0
          %747 = vmatpush.msra.mxu0 0.0
          %748 = vmatpush.msra.mxu0 0.0
          %749 = vmatpush.msra.mxu0 0.0
          %750 = vmatpush.msra.mxu0 0.0
          %751 = vmatpush.msra.mxu0 0.0
          %752 = vmatpush.msra.mxu0 0.0
          %753 = vmatpush.msra.mxu0 0.0
          %754 = vmatpush.msra.mxu0 0.0
          %755 = vmatpush.msra.mxu0 0.0
          %756 = vmatpush.msra.mxu0 %v727
          %757 = vmatpush.msra.mxu0 %v724
          %758 = vmatmul.f32.gmra.mxu0 %v737
          %v759 = vpop.f32.mrf.mxu0
          %v760 = vadd.f32 %v656, %v759
          %761 = vmatmul.f32.gmra.mxu0 %v740
          %v762 = vpop.f32.mrf.mxu0
          %v763 = vadd.f32 %v659, %v762
          %764 = vdwg.mxu0
          %765 = vmatpush.msra.mxu0 0.0
          %766 = vmatpush.msra.mxu0 0.0
          %767 = vmatpush.msra.mxu0 0.0
          %768 = vmatpush.msra.mxu0 0.0
          %769 = vmatpush.msra.mxu0 0.0
          %770 = vmatpush.msra.mxu0 0.0
          %771 = vmatpush.msra.mxu0 0.0
          %772 = vmatpush.msra.mxu0 0.0
          %773 = vmatpush.msra.mxu0 0.0
          %774 = vmatpush.msra.mxu0 0.0
          %775 = vmatpush.msra.mxu0 0.0
          %776 = vmatpush.msra.mxu0 0.0
          %777 = vmatpush.msra.mxu0 0.0
          %778 = vmatpush.msra.mxu0 0.0
          %779 = vmatpush.msra.mxu0 %v728
          %780 = vmatpush.msra.mxu0 %v725
          %781 = vmatmul.f32.gmra.mxu0 %v737
          %v782 = vpop.f32.mrf.mxu0
          %v783 = vadd.f32 %v679, %v782
          %784 = vmatmul.f32.gmra.mxu0 %v740
          %v785 = vpop.f32.mrf.mxu0
          %v786 = vadd.f32 %v682, %v785
          %787 = vdwg.mxu0
          %788 = vmatpush.msra.mxu0 0.0
          %789 = vmatpush.msra.mxu0 0.0
          %790 = vmatpush.msra.mxu0 0.0
          %791 = vmatpush.msra.mxu0 0.0
          %792 = vmatpush.msra.mxu0 0.0
          %793 = vmatpush.msra.mxu0 0.0
          %794 = vmatpush.msra.mxu0 0.0
          %795 = vmatpush.msra.mxu0 0.0
          %796 = vmatpush.msra.mxu0 0.0
          %797 = vmatpush.msra.mxu0 0.0
          %798 = vmatpush.msra.mxu0 0.0
          %799 = vmatpush.msra.mxu0 0.0
          %800 = vmatpush.msra.mxu0 0.0
          %801 = vmatpush.msra.mxu0 0.0
          %802 = vmatpush.msra.mxu0 %v729
          %803 = vmatpush.msra.mxu0 %v726
          %804 = vmatmul.f32.gmra.mxu0 %v737
          %v805 = vpop.f32.mrf.mxu0
          %v806 = vadd.f32 %v702, %v805
          %807 = vmatmul.f32.gmra.mxu0 %v740
          %v808 = vpop.f32.mrf.mxu0
          %v809 = vadd.f32 %v705, %v808
          %810 = vdwg.mxu0
          %811 = vrot.lane.b32.xlu0 %v586, 17
          %v812 = vpop.permute.xlu0 %811
          %813 = vrot.lane.b32.xlu0 %v587, 17
          %v814 = vpop.permute.xlu0 %813
          %815 = vrot.lane.b32.xlu0 %v588, 17
          %v816 = vpop.permute.xlu0 %815
          %817 = vrot.lane.b32.xlu0 %v589, 17
          %v818 = vpop.permute.xlu0 %817
          %819 = vrot.lane.b32.xlu0 %v590, 17
          %v820 = vpop.permute.xlu0 %819
          %821 = vrot.lane.b32.xlu0 %v591, 17
          %v822 = vpop.permute.xlu0 %821
          %823 = vrot.lane.b32.xlu0 %v592, 17
          %v824 = vpop.permute.xlu0 %823
          %825 = vrot.lane.b32.xlu0 %v593, 17
          %v826 = vpop.permute.xlu0 %825
          %vm827 = vcmask 138240
          %v828 = vsel %vm827, %v812, %v814
          %v829 = vsel %vm827, %v814, %v816
          %v830 = vsel %vm827, %v816, %v818
          %v831 = vsel %vm827, %v820, %v822
          %v832 = vsel %vm827, %v822, %v824
          %v833 = vsel %vm827, %v824, %v826
          %v841 = vsel %vm631, %v568, 0
          %v844 = vsel %vm631, %v569, 0
          %846 = vmatpush.msra.mxu0 0.0
          %847 = vmatpush.msra.mxu0 0.0
          %848 = vmatpush.msra.mxu0 0.0
          %849 = vmatpush.msra.mxu0 0.0
          %850 = vmatpush.msra.mxu0 0.0
          %851 = vmatpush.msra.mxu0 0.0
          %852 = vmatpush.msra.mxu0 0.0
          %853 = vmatpush.msra.mxu0 0.0
          %854 = vmatpush.msra.mxu0 0.0
          %855 = vmatpush.msra.mxu0 0.0
          %856 = vmatpush.msra.mxu0 0.0
          %857 = vmatpush.msra.mxu0 0.0
          %858 = vmatpush.msra.mxu0 0.0
          %859 = vmatpush.msra.mxu0 0.0
          %860 = vmatpush.msra.mxu0 %v831
          %861 = vmatpush.msra.mxu0 %v828
          %862 = vmatmul.f32.gmra.mxu0 %v841
          %v863 = vpop.f32.mrf.mxu0
          %v864 = vadd.f32 0.0, %v863
          %865 = vmatmul.f32.gmra.mxu0 %v844
          %v866 = vpop.f32.mrf.mxu0
          %v867 = vadd.f32 0.0, %v866
          %868 = vdwg.mxu0
          %869 = vmatpush.msra.mxu0 0.0
          %870 = vmatpush.msra.mxu0 0.0
          %871 = vmatpush.msra.mxu0 0.0
          %872 = vmatpush.msra.mxu0 0.0
          %873 = vmatpush.msra.mxu0 0.0
          %874 = vmatpush.msra.mxu0 0.0
          %875 = vmatpush.msra.mxu0 0.0
          %876 = vmatpush.msra.mxu0 0.0
          %877 = vmatpush.msra.mxu0 0.0
          %878 = vmatpush.msra.mxu0 0.0
          %879 = vmatpush.msra.mxu0 0.0
          %880 = vmatpush.msra.mxu0 0.0
          %881 = vmatpush.msra.mxu0 0.0
          %882 = vmatpush.msra.mxu0 0.0
          %883 = vmatpush.msra.mxu0 %v832
          %884 = vmatpush.msra.mxu0 %v829
          %885 = vmatmul.f32.gmra.mxu0 %v841
          %v886 = vpop.f32.mrf.mxu0
          %v887 = vadd.f32 0.0, %v886
          %888 = vmatmul.f32.gmra.mxu0 %v844
          %v889 = vpop.f32.mrf.mxu0
          %v890 = vadd.f32 0.0, %v889
          %891 = vdwg.mxu0
          %892 = vmatpush.msra.mxu0 0.0
          %893 = vmatpush.msra.mxu0 0.0
          %894 = vmatpush.msra.mxu0 0.0
          %895 = vmatpush.msra.mxu0 0.0
          %896 = vmatpush.msra.mxu0 0.0
          %897 = vmatpush.msra.mxu0 0.0
          %898 = vmatpush.msra.mxu0 0.0
          %899 = vmatpush.msra.mxu0 0.0
          %900 = vmatpush.msra.mxu0 0.0
          %901 = vmatpush.msra.mxu0 0.0
          %902 = vmatpush.msra.mxu0 0.0
          %903 = vmatpush.msra.mxu0 0.0
          %904 = vmatpush.msra.mxu0 0.0
          %905 = vmatpush.msra.mxu0 0.0
          %906 = vmatpush.msra.mxu0 %v833
          %907 = vmatpush.msra.mxu0 %v830
          %908 = vmatmul.f32.gmra.mxu0 %v841
          %v909 = vpop.f32.mrf.mxu0
          %v910 = vadd.f32 0.0, %v909
          %911 = vmatmul.f32.gmra.mxu0 %v844
          %v912 = vpop.f32.mrf.mxu0
          %v913 = vadd.f32 0.0, %v912
          %914 = vdwg.mxu0
          %v915 = vadd.f32 %v760, %v864
          %v916 = vadd.f32 %v783, %v887
          %v917 = vadd.f32 %v806, %v910
          %v918 = vadd.f32 %v763, %v867
          %v919 = vadd.f32 %v786, %v890
          %v920 = vadd.f32 %v809, %v913
          %921 = vrot.lane.b32.xlu0 %v586, 1
          %v922 = vpop.permute.xlu0 %921
          %923 = vrot.lane.b32.xlu0 %v587, 1
          %v924 = vpop.permute.xlu0 %923
          %925 = vrot.lane.b32.xlu0 %v588, 1
          %v926 = vpop.permute.xlu0 %925
          %927 = vrot.lane.b32.xlu0 %v589, 1
          %v928 = vpop.permute.xlu0 %927
          %929 = vrot.lane.b32.xlu0 %v590, 1
          %v930 = vpop.permute.xlu0 %929
          %931 = vrot.lane.b32.xlu0 %v591, 1
          %v932 = vpop.permute.xlu0 %931
          %933 = vrot.lane.b32.xlu0 %v592, 1
          %v934 = vpop.permute.xlu0 %933
          %935 = vrot.lane.b32.xlu0 %v593, 1
          %v936 = vpop.permute.xlu0 %935
          %vm937 = vcmask 7168
          %v938 = vsel %vm937, %v922, %v924
          %v939 = vsel %vm937, %v924, %v926
          %v940 = vsel %vm937, %v926, %v928
          %v941 = vsel %vm937, %v930, %v932
          %v942 = vsel %vm937, %v932, %v934
          %v943 = vsel %vm937, %v934, %v936
          %v951 = vsel %vm631, %v570, 0
          %v954 = vsel %vm631, %v571, 0
          %956 = vmatpush.msra.mxu0 0.0
          %957 = vmatpush.msra.mxu0 0.0
          %958 = vmatpush.msra.mxu0 0.0
          %959 = vmatpush.msra.mxu0 0.0
          %960 = vmatpush.msra.mxu0 0.0
          %961 = vmatpush.msra.mxu0 0.0
          %962 = vmatpush.msra.mxu0 0.0
          %963 = vmatpush.msra.mxu0 0.0
          %964 = vmatpush.msra.mxu0 0.0
          %965 = vmatpush.msra.mxu0 0.0
          %966 = vmatpush.msra.mxu0 0.0
          %967 = vmatpush.msra.mxu0 0.0
          %968 = vmatpush.msra.mxu0 0.0
          %969 = vmatpush.msra.mxu0 0.0
          %970 = vmatpush.msra.mxu0 %v941
          %971 = vmatpush.msra.mxu0 %v938
          %972 = vmatmul.f32.gmra.mxu0 %v951
          %v973 = vpop.f32.mrf.mxu0
          %v974 = vadd.f32 0.0, %v973
          %975 = vmatmul.f32.gmra.mxu0 %v954
          %v976 = vpop.f32.mrf.mxu0
          %v977 = vadd.f32 0.0, %v976
          %978 = vdwg.mxu0
          %979 = vmatpush.msra.mxu0 0.0
          %980 = vmatpush.msra.mxu0 0.0
          %981 = vmatpush.msra.mxu0 0.0
          %982 = vmatpush.msra.mxu0 0.0
          %983 = vmatpush.msra.mxu0 0.0
          %984 = vmatpush.msra.mxu0 0.0
          %985 = vmatpush.msra.mxu0 0.0
          %986 = vmatpush.msra.mxu0 0.0
          %987 = vmatpush.msra.mxu0 0.0
          %988 = vmatpush.msra.mxu0 0.0
          %989 = vmatpush.msra.mxu0 0.0
          %990 = vmatpush.msra.mxu0 0.0
          %991 = vmatpush.msra.mxu0 0.0
          %992 = vmatpush.msra.mxu0 0.0
          %993 = vmatpush.msra.mxu0 %v942
          %994 = vmatpush.msra.mxu0 %v939
          %995 = vmatmul.f32.gmra.mxu0 %v951
          %v996 = vpop.f32.mrf.mxu0
          %v997 = vadd.f32 0.0, %v996
          %998 = vmatmul.f32.gmra.mxu0 %v954
          %v999 = vpop.f32.mrf.mxu0
          %v1000 = vadd.f32 0.0, %v999
          %1001 = vdwg.mxu0
          %1002 = vmatpush.msra.mxu0 0.0
          %1003 = vmatpush.msra.mxu0 0.0
          %1004 = vmatpush.msra.mxu0 0.0
          %1005 = vmatpush.msra.mxu0 0.0
          %1006 = vmatpush.msra.mxu0 0.0
          %1007 = vmatpush.msra.mxu0 0.0
          %1008 = vmatpush.msra.mxu0 0.0
          %1009 = vmatpush.msra.mxu0 0.0
          %1010 = vmatpush.msra.mxu0 0.0
          %1011 = vmatpush.msra.mxu0 0.0
          %1012 = vmatpush.msra.mxu0 0.0
          %1013 = vmatpush.msra.mxu0 0.0
          %1014 = vmatpush.msra.mxu0 0.0
          %1015 = vmatpush.msra.mxu0 0.0
          %1016 = vmatpush.msra.mxu0 %v943
          %1017 = vmatpush.msra.mxu0 %v940
          %1018 = vmatmul.f32.gmra.mxu0 %v951
          %v1019 = vpop.f32.mrf.mxu0
          %v1020 = vadd.f32 0.0, %v1019
          %1021 = vmatmul.f32.gmra.mxu0 %v954
          %v1022 = vpop.f32.mrf.mxu0
          %v1023 = vadd.f32 0.0, %v1022
          %1024 = vdwg.mxu0
          %v1025 = vadd.f32 %v915, %v974
          %v1026 = vadd.f32 %v916, %v997
          %v1027 = vadd.f32 %v917, %v1020
          %v1028 = vadd.f32 %v918, %v977
          %v1029 = vadd.f32 %v919, %v1000
          %v1030 = vadd.f32 %v920, %v1023
          %v1032 = vsel %vm631, %v572, 0
          %v1035 = vsel %vm631, %v573, 0
          %1037 = vmatpush.msra.mxu0 0.0
          %1038 = vmatpush.msra.mxu0 0.0
          %1039 = vmatpush.msra.mxu0 0.0
          %1040 = vmatpush.msra.mxu0 0.0
          %1041 = vmatpush.msra.mxu0 0.0
          %1042 = vmatpush.msra.mxu0 0.0
          %1043 = vmatpush.msra.mxu0 0.0
          %1044 = vmatpush.msra.mxu0 0.0
          %1045 = vmatpush.msra.mxu0 0.0
          %1046 = vmatpush.msra.mxu0 0.0
          %1047 = vmatpush.msra.mxu0 0.0
          %1048 = vmatpush.msra.mxu0 0.0
          %1049 = vmatpush.msra.mxu0 0.0
          %1050 = vmatpush.msra.mxu0 0.0
          %1051 = vmatpush.msra.mxu0 %v591
          %1052 = vmatpush.msra.mxu0 %v587
          %1053 = vmatmul.f32.gmra.mxu0 %v1032
          %v1054 = vpop.f32.mrf.mxu0
          %v1055 = vadd.f32 0.0, %v1054
          %1056 = vmatmul.f32.gmra.mxu0 %v1035
          %v1057 = vpop.f32.mrf.mxu0
          %v1058 = vadd.f32 0.0, %v1057
          %1059 = vdwg.mxu0
          %1060 = vmatpush.msra.mxu0 0.0
          %1061 = vmatpush.msra.mxu0 0.0
          %1062 = vmatpush.msra.mxu0 0.0
          %1063 = vmatpush.msra.mxu0 0.0
          %1064 = vmatpush.msra.mxu0 0.0
          %1065 = vmatpush.msra.mxu0 0.0
          %1066 = vmatpush.msra.mxu0 0.0
          %1067 = vmatpush.msra.mxu0 0.0
          %1068 = vmatpush.msra.mxu0 0.0
          %1069 = vmatpush.msra.mxu0 0.0
          %1070 = vmatpush.msra.mxu0 0.0
          %1071 = vmatpush.msra.mxu0 0.0
          %1072 = vmatpush.msra.mxu0 0.0
          %1073 = vmatpush.msra.mxu0 0.0
          %1074 = vmatpush.msra.mxu0 %v592
          %1075 = vmatpush.msra.mxu0 %v588
          %1076 = vmatmul.f32.gmra.mxu0 %v1032
          %v1077 = vpop.f32.mrf.mxu0
          %v1078 = vadd.f32 0.0, %v1077
          %1079 = vmatmul.f32.gmra.mxu0 %v1035
          %v1080 = vpop.f32.mrf.mxu0
          %v1081 = vadd.f32 0.0, %v1080
          %1082 = vdwg.mxu0
          %1083 = vmatpush.msra.mxu0 0.0
          %1084 = vmatpush.msra.mxu0 0.0
          %1085 = vmatpush.msra.mxu0 0.0
          %1086 = vmatpush.msra.mxu0 0.0
          %1087 = vmatpush.msra.mxu0 0.0
          %1088 = vmatpush.msra.mxu0 0.0
          %1089 = vmatpush.msra.mxu0 0.0
          %1090 = vmatpush.msra.mxu0 0.0
          %1091 = vmatpush.msra.mxu0 0.0
          %1092 = vmatpush.msra.mxu0 0.0
          %1093 = vmatpush.msra.mxu0 0.0
          %1094 = vmatpush.msra.mxu0 0.0
          %1095 = vmatpush.msra.mxu0 0.0
          %1096 = vmatpush.msra.mxu0 0.0
          %1097 = vmatpush.msra.mxu0 %v593
          %1098 = vmatpush.msra.mxu0 %v589
          %1099 = vmatmul.f32.gmra.mxu0 %v1032
          %v1100 = vpop.f32.mrf.mxu0
          %v1101 = vadd.f32 0.0, %v1100
          %1102 = vmatmul.f32.gmra.mxu0 %v1035
          %v1103 = vpop.f32.mrf.mxu0
          %v1104 = vadd.f32 0.0, %v1103
          %1105 = vdwg.mxu0
          %v1106 = vadd.f32 %v1025, %v1055
          %v1107 = vadd.f32 %v1026, %v1078
          %v1108 = vadd.f32 %v1027, %v1101
          %v1109 = vadd.f32 %v1028, %v1058
          %v1110 = vadd.f32 %v1029, %v1081
          %v1111 = vadd.f32 %v1030, %v1104
          %1112 = vrot.lane.b32.xlu0 %v587, 127
          %v1113 = vpop.permute.xlu0 %1112
          %1114 = vrot.lane.b32.xlu0 %v588, 127
          %v1115 = vpop.permute.xlu0 %1114
          %1116 = vrot.lane.b32.xlu0 %v589, 127
          %v1117 = vpop.permute.xlu0 %1116
          %1118 = vrot.lane.b32.xlu0 %v591, 127
          %v1119 = vpop.permute.xlu0 %1118
          %1120 = vrot.lane.b32.xlu0 %v592, 127
          %v1121 = vpop.permute.xlu0 %1120
          %1122 = vrot.lane.b32.xlu0 %v593, 127
          %v1123 = vpop.permute.xlu0 %1122
          %vm1124 = vcmask 1039360
          %v1125 = vsel %vm1124, %v1113, %v1115
          %v1126 = vsel %vm1124, %v1115, %v1117
          %v1127 = vsel %vm1124, %v1119, %v1121
          %v1128 = vsel %vm1124, %v1121, %v1123
          %v1136 = vsel %vm631, %v574, 0
          %v1139 = vsel %vm631, %v575, 0
          %1141 = vmatpush.msra.mxu0 0.0
          %1142 = vmatpush.msra.mxu0 0.0
          %1143 = vmatpush.msra.mxu0 0.0
          %1144 = vmatpush.msra.mxu0 0.0
          %1145 = vmatpush.msra.mxu0 0.0
          %1146 = vmatpush.msra.mxu0 0.0
          %1147 = vmatpush.msra.mxu0 0.0
          %1148 = vmatpush.msra.mxu0 0.0
          %1149 = vmatpush.msra.mxu0 0.0
          %1150 = vmatpush.msra.mxu0 0.0
          %1151 = vmatpush.msra.mxu0 0.0
          %1152 = vmatpush.msra.mxu0 0.0
          %1153 = vmatpush.msra.mxu0 0.0
          %1154 = vmatpush.msra.mxu0 0.0
          %1155 = vmatpush.msra.mxu0 %v1127
          %1156 = vmatpush.msra.mxu0 %v1125
          %1157 = vmatmul.f32.gmra.mxu0 %v1136
          %v1158 = vpop.f32.mrf.mxu0
          %v1159 = vadd.f32 0.0, %v1158
          %1160 = vmatmul.f32.gmra.mxu0 %v1139
          %v1161 = vpop.f32.mrf.mxu0
          %v1162 = vadd.f32 0.0, %v1161
          %1163 = vdwg.mxu0
          %1164 = vmatpush.msra.mxu0 0.0
          %1165 = vmatpush.msra.mxu0 0.0
          %1166 = vmatpush.msra.mxu0 0.0
          %1167 = vmatpush.msra.mxu0 0.0
          %1168 = vmatpush.msra.mxu0 0.0
          %1169 = vmatpush.msra.mxu0 0.0
          %1170 = vmatpush.msra.mxu0 0.0
          %1171 = vmatpush.msra.mxu0 0.0
          %1172 = vmatpush.msra.mxu0 0.0
          %1173 = vmatpush.msra.mxu0 0.0
          %1174 = vmatpush.msra.mxu0 0.0
          %1175 = vmatpush.msra.mxu0 0.0
          %1176 = vmatpush.msra.mxu0 0.0
          %1177 = vmatpush.msra.mxu0 0.0
          %1178 = vmatpush.msra.mxu0 %v1128
          %1179 = vmatpush.msra.mxu0 %v1126
          %1180 = vmatmul.f32.gmra.mxu0 %v1136
          %v1181 = vpop.f32.mrf.mxu0
          %v1182 = vadd.f32 0.0, %v1181
          %1183 = vmatmul.f32.gmra.mxu0 %v1139
          %v1184 = vpop.f32.mrf.mxu0
          %v1185 = vadd.f32 0.0, %v1184
          %1186 = vdwg.mxu0
          %1187 = vmatpush.msra.mxu0 0.0
          %1188 = vmatpush.msra.mxu0 0.0
          %1189 = vmatpush.msra.mxu0 0.0
          %1190 = vmatpush.msra.mxu0 0.0
          %1191 = vmatpush.msra.mxu0 0.0
          %1192 = vmatpush.msra.mxu0 0.0
          %1193 = vmatpush.msra.mxu0 0.0
          %1194 = vmatpush.msra.mxu0 0.0
          %1195 = vmatpush.msra.mxu0 0.0
          %1196 = vmatpush.msra.mxu0 0.0
          %1197 = vmatpush.msra.mxu0 0.0
          %1198 = vmatpush.msra.mxu0 0.0
          %1199 = vmatpush.msra.mxu0 0.0
          %1200 = vmatpush.msra.mxu0 0.0
          %1201 = vmatpush.msra.mxu0 %v1123
          %1202 = vmatpush.msra.mxu0 %v1117
          %1203 = vmatmul.f32.gmra.mxu0 %v1136
          %v1204 = vpop.f32.mrf.mxu0
          %v1205 = vadd.f32 0.0, %v1204
          %1206 = vmatmul.f32.gmra.mxu0 %v1139
          %v1207 = vpop.f32.mrf.mxu0
          %v1208 = vadd.f32 0.0, %v1207
          %1209 = vdwg.mxu0
          %v1210 = vadd.f32 %v1106, %v1159
          %v1211 = vadd.f32 %v1107, %v1182
          %v1212 = vadd.f32 %v1108, %v1205
          %v1213 = vadd.f32 %v1109, %v1162
          %v1214 = vadd.f32 %v1110, %v1185
          %v1215 = vadd.f32 %v1111, %v1208
          %1216 = vrot.lane.b32.xlu0 %v587, 111
          %v1217 = vpop.permute.xlu0 %1216
          %1218 = vrot.lane.b32.xlu0 %v588, 111
          %v1219 = vpop.permute.xlu0 %1218
          %1220 = vrot.lane.b32.xlu0 %v589, 111
          %v1221 = vpop.permute.xlu0 %1220
          %1222 = vrot.lane.b32.xlu0 %v591, 111
          %v1223 = vpop.permute.xlu0 %1222
          %1224 = vrot.lane.b32.xlu0 %v592, 111
          %v1225 = vpop.permute.xlu0 %1224
          %1226 = vrot.lane.b32.xlu0 %v593, 111
          %v1227 = vpop.permute.xlu0 %1226
          %vm1228 = vcmask 908288
          %v1229 = vsel %vm1228, %v1217, %v1219
          %v1230 = vsel %vm1228, %v1219, %v1221
          %v1231 = vsel %vm1228, %v1223, %v1225
          %v1232 = vsel %vm1228, %v1225, %v1227
          %v1240 = vsel %vm631, %v576, 0
          %v1243 = vsel %vm631, %v577, 0
          %1245 = vmatpush.msra.mxu0 0.0
          %1246 = vmatpush.msra.mxu0 0.0
          %1247 = vmatpush.msra.mxu0 0.0
          %1248 = vmatpush.msra.mxu0 0.0
          %1249 = vmatpush.msra.mxu0 0.0
          %1250 = vmatpush.msra.mxu0 0.0
          %1251 = vmatpush.msra.mxu0 0.0
          %1252 = vmatpush.msra.mxu0 0.0
          %1253 = vmatpush.msra.mxu0 0.0
          %1254 = vmatpush.msra.mxu0 0.0
          %1255 = vmatpush.msra.mxu0 0.0
          %1256 = vmatpush.msra.mxu0 0.0
          %1257 = vmatpush.msra.mxu0 0.0
          %1258 = vmatpush.msra.mxu0 0.0
          %1259 = vmatpush.msra.mxu0 %v1231
          %1260 = vmatpush.msra.mxu0 %v1229
          %1261 = vmatmul.f32.gmra.mxu0 %v1240
          %v1262 = vpop.f32.mrf.mxu0
          %v1263 = vadd.f32 0.0, %v1262
          %1264 = vmatmul.f32.gmra.mxu0 %v1243
          %v1265 = vpop.f32.mrf.mxu0
          %v1266 = vadd.f32 0.0, %v1265
          %1267 = vdwg.mxu0
          %1268 = vmatpush.msra.mxu0 0.0
          %1269 = vmatpush.msra.mxu0 0.0
          %1270 = vmatpush.msra.mxu0 0.0
          %1271 = vmatpush.msra.mxu0 0.0
          %1272 = vmatpush.msra.mxu0 0.0
          %1273 = vmatpush.msra.mxu0 0.0
          %1274 = vmatpush.msra.mxu0 0.0
          %1275 = vmatpush.msra.mxu0 0.0
          %1276 = vmatpush.msra.mxu0 0.0
          %1277 = vmatpush.msra.mxu0 0.0
          %1278 = vmatpush.msra.mxu0 0.0
          %1279 = vmatpush.msra.mxu0 0.0
          %1280 = vmatpush.msra.mxu0 0.0
          %1281 = vmatpush.msra.mxu0 0.0
          %1282 = vmatpush.msra.mxu0 %v1232
          %1283 = vmatpush.msra.mxu0 %v1230
          %1284 = vmatmul.f32.gmra.mxu0 %v1240
          %v1285 = vpop.f32.mrf.mxu0
          %v1286 = vadd.f32 0.0, %v1285
          %1287 = vmatmul.f32.gmra.mxu0 %v1243
          %v1288 = vpop.f32.mrf.mxu0
          %v1289 = vadd.f32 0.0, %v1288
          %1290 = vdwg.mxu0
          %1291 = vmatpush.msra.mxu0 0.0
          %1292 = vmatpush.msra.mxu0 0.0
          %1293 = vmatpush.msra.mxu0 0.0
          %1294 = vmatpush.msra.mxu0 0.0
          %1295 = vmatpush.msra.mxu0 0.0
          %1296 = vmatpush.msra.mxu0 0.0
          %1297 = vmatpush.msra.mxu0 0.0
          %1298 = vmatpush.msra.mxu0 0.0
          %1299 = vmatpush.msra.mxu0 0.0
          %1300 = vmatpush.msra.mxu0 0.0
          %1301 = vmatpush.msra.mxu0 0.0
          %1302 = vmatpush.msra.mxu0 0.0
          %1303 = vmatpush.msra.mxu0 0.0
          %1304 = vmatpush.msra.mxu0 0.0
          %1305 = vmatpush.msra.mxu0 %v1227
          %1306 = vmatpush.msra.mxu0 %v1221
          %1307 = vmatmul.f32.gmra.mxu0 %v1240
          %v1308 = vpop.f32.mrf.mxu0
          %v1309 = vadd.f32 0.0, %v1308
          %1310 = vmatmul.f32.gmra.mxu0 %v1243
          %v1311 = vpop.f32.mrf.mxu0
          %v1312 = vadd.f32 0.0, %v1311
          %1313 = vdwg.mxu0
          %v1314 = vadd.f32 %v1210, %v1263
          %v1315 = vadd.f32 %v1211, %v1286
          %v1316 = vadd.f32 %v1212, %v1309
          %v1317 = vadd.f32 %v1213, %v1266
          %v1318 = vadd.f32 %v1214, %v1289
          %v1319 = vadd.f32 %v1215, %v1312
          %1320 = vrot.lane.b32.xlu0 %v587, 110
          %v1321 = vpop.permute.xlu0 %1320
          %1322 = vrot.lane.b32.xlu0 %v588, 110
          %v1323 = vpop.permute.xlu0 %1322
          %1324 = vrot.lane.b32.xlu0 %v589, 110
          %v1325 = vpop.permute.xlu0 %1324
          %1326 = vrot.lane.b32.xlu0 %v591, 110
          %v1327 = vpop.permute.xlu0 %1326
          %1328 = vrot.lane.b32.xlu0 %v592, 110
          %v1329 = vpop.permute.xlu0 %1328
          %1330 = vrot.lane.b32.xlu0 %v593, 110
          %v1331 = vpop.permute.xlu0 %1330
          %vm1332 = vcmask 900096
          %v1333 = vsel %vm1332, %v1321, %v1323
          %v1334 = vsel %vm1332, %v1323, %v1325
          %v1335 = vsel %vm1332, %v1327, %v1329
          %v1336 = vsel %vm1332, %v1329, %v1331
          %v1344 = vsel %vm631, %v578, 0
          %v1347 = vsel %vm631, %v579, 0
          %1349 = vmatpush.msra.mxu0 0.0
          %1350 = vmatpush.msra.mxu0 0.0
          %1351 = vmatpush.msra.mxu0 0.0
          %1352 = vmatpush.msra.mxu0 0.0
          %1353 = vmatpush.msra.mxu0 0.0
          %1354 = vmatpush.msra.mxu0 0.0
          %1355 = vmatpush.msra.mxu0 0.0
          %1356 = vmatpush.msra.mxu0 0.0
          %1357 = vmatpush.msra.mxu0 0.0
          %1358 = vmatpush.msra.mxu0 0.0
          %1359 = vmatpush.msra.mxu0 0.0
          %1360 = vmatpush.msra.mxu0 0.0
          %1361 = vmatpush.msra.mxu0 0.0
          %1362 = vmatpush.msra.mxu0 0.0
          %1363 = vmatpush.msra.mxu0 %v1335
          %1364 = vmatpush.msra.mxu0 %v1333
          %1365 = vmatmul.f32.gmra.mxu0 %v1344
          %v1366 = vpop.f32.mrf.mxu0
          %v1367 = vadd.f32 0.0, %v1366
          %1368 = vmatmul.f32.gmra.mxu0 %v1347
          %v1369 = vpop.f32.mrf.mxu0
          %v1370 = vadd.f32 0.0, %v1369
          %1371 = vdwg.mxu0
          %1372 = vmatpush.msra.mxu0 0.0
          %1373 = vmatpush.msra.mxu0 0.0
          %1374 = vmatpush.msra.mxu0 0.0
          %1375 = vmatpush.msra.mxu0 0.0
          %1376 = vmatpush.msra.mxu0 0.0
          %1377 = vmatpush.msra.mxu0 0.0
          %1378 = vmatpush.msra.mxu0 0.0
          %1379 = vmatpush.msra.mxu0 0.0
          %1380 = vmatpush.msra.mxu0 0.0
          %1381 = vmatpush.msra.mxu0 0.0
          %1382 = vmatpush.msra.mxu0 0.0
          %1383 = vmatpush.msra.mxu0 0.0
          %1384 = vmatpush.msra.mxu0 0.0
          %1385 = vmatpush.msra.mxu0 0.0
          %1386 = vmatpush.msra.mxu0 %v1336
          %1387 = vmatpush.msra.mxu0 %v1334
          %1388 = vmatmul.f32.gmra.mxu0 %v1344
          %v1389 = vpop.f32.mrf.mxu0
          %v1390 = vadd.f32 0.0, %v1389
          %1391 = vmatmul.f32.gmra.mxu0 %v1347
          %v1392 = vpop.f32.mrf.mxu0
          %v1393 = vadd.f32 0.0, %v1392
          %1394 = vdwg.mxu0
          %1395 = vmatpush.msra.mxu0 0.0
          %1396 = vmatpush.msra.mxu0 0.0
          %1397 = vmatpush.msra.mxu0 0.0
          %1398 = vmatpush.msra.mxu0 0.0
          %1399 = vmatpush.msra.mxu0 0.0
          %1400 = vmatpush.msra.mxu0 0.0
          %1401 = vmatpush.msra.mxu0 0.0
          %1402 = vmatpush.msra.mxu0 0.0
          %1403 = vmatpush.msra.mxu0 0.0
          %1404 = vmatpush.msra.mxu0 0.0
          %1405 = vmatpush.msra.mxu0 0.0
          %1406 = vmatpush.msra.mxu0 0.0
          %1407 = vmatpush.msra.mxu0 0.0
          %1408 = vmatpush.msra.mxu0 0.0
          %1409 = vmatpush.msra.mxu0 %v1331
          %1410 = vmatpush.msra.mxu0 %v1325
          %1411 = vmatmul.f32.gmra.mxu0 %v1344
          %v1412 = vpop.f32.mrf.mxu0
          %v1413 = vadd.f32 0.0, %v1412
          %1414 = vmatmul.f32.gmra.mxu0 %v1347
          %v1415 = vpop.f32.mrf.mxu0
          %v1416 = vadd.f32 0.0, %v1415
          %1417 = vdwg.mxu0
          %v1418 = vadd.f32 %v1314, %v1367
          %v1419 = vadd.f32 %v1315, %v1390
          %v1420 = vadd.f32 %v1316, %v1413
          %v1421 = vadd.f32 %v1317, %v1370
          %v1422 = vadd.f32 %v1318, %v1393
          %v1423 = vadd.f32 %v1319, %v1416
          %1424 = vrot.lane.b32.xlu0 %v587, 109
          %v1425 = vpop.permute.xlu0 %1424
          %1426 = vrot.lane.b32.xlu0 %v588, 109
          %v1427 = vpop.permute.xlu0 %1426
          %1428 = vrot.lane.b32.xlu0 %v589, 109
          %v1429 = vpop.permute.xlu0 %1428
          %1430 = vrot.lane.b32.xlu0 %v591, 109
          %v1431 = vpop.permute.xlu0 %1430
          %1432 = vrot.lane.b32.xlu0 %v592, 109
          %v1433 = vpop.permute.xlu0 %1432
          %1434 = vrot.lane.b32.xlu0 %v593, 109
          %v1435 = vpop.permute.xlu0 %1434
          %vm1436 = vcmask 891904
          %v1437 = vsel %vm1436, %v1425, %v1427
          %v1438 = vsel %vm1436, %v1427, %v1429
          %v1439 = vsel %vm1436, %v1431, %v1433
          %v1440 = vsel %vm1436, %v1433, %v1435
          %v1448 = vsel %vm631, %v580, 0
          %v1451 = vsel %vm631, %v581, 0
          %1453 = vmatpush.msra.mxu0 0.0
          %1454 = vmatpush.msra.mxu0 0.0
          %1455 = vmatpush.msra.mxu0 0.0
          %1456 = vmatpush.msra.mxu0 0.0
          %1457 = vmatpush.msra.mxu0 0.0
          %1458 = vmatpush.msra.mxu0 0.0
          %1459 = vmatpush.msra.mxu0 0.0
          %1460 = vmatpush.msra.mxu0 0.0
          %1461 = vmatpush.msra.mxu0 0.0
          %1462 = vmatpush.msra.mxu0 0.0
          %1463 = vmatpush.msra.mxu0 0.0
          %1464 = vmatpush.msra.mxu0 0.0
          %1465 = vmatpush.msra.mxu0 0.0
          %1466 = vmatpush.msra.mxu0 0.0
          %1467 = vmatpush.msra.mxu0 %v1439
          %1468 = vmatpush.msra.mxu0 %v1437
          %1469 = vmatmul.f32.gmra.mxu0 %v1448
          %v1470 = vpop.f32.mrf.mxu0
          %v1471 = vadd.f32 0.0, %v1470
          %1472 = vmatmul.f32.gmra.mxu0 %v1451
          %v1473 = vpop.f32.mrf.mxu0
          %v1474 = vadd.f32 0.0, %v1473
          %1475 = vdwg.mxu0
          %1476 = vmatpush.msra.mxu0 0.0
          %1477 = vmatpush.msra.mxu0 0.0
          %1478 = vmatpush.msra.mxu0 0.0
          %1479 = vmatpush.msra.mxu0 0.0
          %1480 = vmatpush.msra.mxu0 0.0
          %1481 = vmatpush.msra.mxu0 0.0
          %1482 = vmatpush.msra.mxu0 0.0
          %1483 = vmatpush.msra.mxu0 0.0
          %1484 = vmatpush.msra.mxu0 0.0
          %1485 = vmatpush.msra.mxu0 0.0
          %1486 = vmatpush.msra.mxu0 0.0
          %1487 = vmatpush.msra.mxu0 0.0
          %1488 = vmatpush.msra.mxu0 0.0
          %1489 = vmatpush.msra.mxu0 0.0
          %1490 = vmatpush.msra.mxu0 %v1440
          %1491 = vmatpush.msra.mxu0 %v1438
          %1492 = vmatmul.f32.gmra.mxu0 %v1448
          %v1493 = vpop.f32.mrf.mxu0
          %v1494 = vadd.f32 0.0, %v1493
          %1495 = vmatmul.f32.gmra.mxu0 %v1451
          %v1496 = vpop.f32.mrf.mxu0
          %v1497 = vadd.f32 0.0, %v1496
          %1498 = vdwg.mxu0
          %1499 = vmatpush.msra.mxu0 0.0
          %1500 = vmatpush.msra.mxu0 0.0
          %1501 = vmatpush.msra.mxu0 0.0
          %1502 = vmatpush.msra.mxu0 0.0
          %1503 = vmatpush.msra.mxu0 0.0
          %1504 = vmatpush.msra.mxu0 0.0
          %1505 = vmatpush.msra.mxu0 0.0
          %1506 = vmatpush.msra.mxu0 0.0
          %1507 = vmatpush.msra.mxu0 0.0
          %1508 = vmatpush.msra.mxu0 0.0
          %1509 = vmatpush.msra.mxu0 0.0
          %1510 = vmatpush.msra.mxu0 0.0
          %1511 = vmatpush.msra.mxu0 0.0
          %1512 = vmatpush.msra.mxu0 0.0
          %1513 = vmatpush.msra.mxu0 %v1435
          %1514 = vmatpush.msra.mxu0 %v1429
          %1515 = vmatmul.f32.gmra.mxu0 %v1448
          %v1516 = vpop.f32.mrf.mxu0
          %v1517 = vadd.f32 0.0, %v1516
          %1518 = vmatmul.f32.gmra.mxu0 %v1451
          %v1519 = vpop.f32.mrf.mxu0
          %v1520 = vadd.f32 0.0, %v1519
          %1521 = vdwg.mxu0
          %v1522 = vadd.f32 %v1418, %v1471
          %v1523 = vadd.f32 %v1419, %v1494
          %v1524 = vadd.f32 %v1420, %v1517
          %v1525 = vadd.f32 %v1421, %v1474
          %v1526 = vadd.f32 %v1422, %v1497
          %v1527 = vadd.f32 %v1423, %v1520
          %1529 = vset.pattern.permute.xlu0 0
          %1530 = vperm.xlu0 %1529, %v584
          %v1531 = vpop.permute.xlu0 %1530
          %1534 = vset.pattern.permute.xlu0 0
          %1535 = vperm.xlu0 %1534, %v585
          %v1536 = vpop.permute.xlu0 %1535
          %v1538 = vadd.f32 %v1522, %v1531
          %v1539 = vadd.f32 %v1523, %v1531
          %v1540 = vadd.f32 %v1524, %v1531
          %v1541 = vadd.f32 %v1525, %v1536
          %v1542 = vadd.f32 %v1526, %v1536
          %v1543 = vadd.f32 %v1527, %v1536
          %v1544 = vmul.f32 %v1538, 1.442695
          %v1545 = vpow.pop %v1544
          %v1546 = vmul.f32 %v1539, 1.442695
          %v1547 = vpow.pop %v1546
          %v1548 = vmul.f32 %v1540, 1.442695
          %v1549 = vpow.pop %v1548
          %v1550 = vmul.f32 %v1541, 1.442695
          %v1551 = vpow.pop %v1550
          %v1552 = vmul.f32 %v1542, 1.442695
          %v1553 = vpow.pop %v1552
          %v1554 = vmul.f32 %v1543, 1.442695
          %v1555 = vpow.pop %v1554
          %v1556 = vmul.f32 %v1538, 2.0
          %v1557 = vmul.f32 %v1539, 2.0
          %v1558 = vmul.f32 %v1540, 2.0
          %v1559 = vmul.f32 %v1541, 2.0
          %v1560 = vmul.f32 %v1542, 2.0
          %v1561 = vmul.f32 %v1543, 2.0
          %v1562 = vadd.f32 %v1545, 2.0
          %v1563 = vadd.f32 %v1547, 2.0
          %v1564 = vadd.f32 %v1549, 2.0
          %v1565 = vadd.f32 %v1551, 2.0
          %v1566 = vadd.f32 %v1553, 2.0
          %v1567 = vadd.f32 %v1555, 2.0
          %v1568 = vmul.f32 %v1545, %v1562
          %v1569 = vmul.f32 %v1547, %v1563
          %v1570 = vmul.f32 %v1549, %v1564
          %v1571 = vmul.f32 %v1551, %v1565
          %v1572 = vmul.f32 %v1553, %v1566
          %v1573 = vmul.f32 %v1555, %v1567
          %v1574 = vadd.f32 %v1568, 2.0
          %v1575 = vadd.f32 %v1569, 2.0
          %v1576 = vadd.f32 %v1570, 2.0
          %v1577 = vadd.f32 %v1571, 2.0
          %v1578 = vadd.f32 %v1572, 2.0
          %v1579 = vadd.f32 %v1573, 2.0
          %v1580 = vrcp.pop %v1574
          %v1581 = vmul.f32 %v1574, %v1580
          %v1582 = vsub.f32 1.0, %v1581
          %v1583 = vmul.f32 %v1580, %v1582
          %v1584 = vadd.f32 %v1580, %v1583
          %vm1585 = vweird.f32 %v1574
          %vm1586 = vweird.f32 %v1580
          %vm1587 = vmor %vm1585, %vm1586
          %v1588 = vsel %vm1587, %v1580, %v1584
          %v1589 = vand.u32 2147483647, %v1574
          %vm1590 = vcmp.eq.f32.partialorder %v1589, 8.507059e+37
          %v1591 = vand.u32 %v1574, 2147483648
          %v1592 = vor.u32 1.1754944e-38, %v1591
          %v1593 = vsel %vm1590, %v1592, %v1588
          %v1594 = vmul.f32 %v1556, %v1593
          %v1595 = vrcp.pop %v1575
          %v1596 = vmul.f32 %v1575, %v1595
          %v1597 = vsub.f32 1.0, %v1596
          %v1598 = vmul.f32 %v1595, %v1597
          %v1599 = vadd.f32 %v1595, %v1598
          %vm1600 = vweird.f32 %v1575
          %vm1601 = vweird.f32 %v1595
          %vm1602 = vmor %vm1600, %vm1601
          %v1603 = vsel %vm1602, %v1595, %v1599
          %v1604 = vand.u32 2147483647, %v1575
          %vm1605 = vcmp.eq.f32.partialorder %v1604, 8.507059e+37
          %v1606 = vand.u32 %v1575, 2147483648
          %v1607 = vor.u32 1.1754944e-38, %v1606
          %v1608 = vsel %vm1605, %v1607, %v1603
          %v1609 = vmul.f32 %v1557, %v1608
          %v1610 = vrcp.pop %v1576
          %v1611 = vmul.f32 %v1576, %v1610
          %v1612 = vsub.f32 1.0, %v1611
          %v1613 = vmul.f32 %v1610, %v1612
          %v1614 = vadd.f32 %v1610, %v1613
          %vm1615 = vweird.f32 %v1576
          %vm1616 = vweird.f32 %v1610
          %vm1617 = vmor %vm1615, %vm1616
          %v1618 = vsel %vm1617, %v1610, %v1614
          %v1619 = vand.u32 2147483647, %v1576
          %vm1620 = vcmp.eq.f32.partialorder %v1619, 8.507059e+37
          %v1621 = vand.u32 %v1576, 2147483648
          %v1622 = vor.u32 1.1754944e-38, %v1621
          %v1623 = vsel %vm1620, %v1622, %v1618
          %v1624 = vmul.f32 %v1558, %v1623
          %v1625 = vrcp.pop %v1577
          %v1626 = vmul.f32 %v1577, %v1625
          %v1627 = vsub.f32 1.0, %v1626
          %v1628 = vmul.f32 %v1625, %v1627
          %v1629 = vadd.f32 %v1625, %v1628
          %vm1630 = vweird.f32 %v1577
          %vm1631 = vweird.f32 %v1625
          %vm1632 = vmor %vm1630, %vm1631
          %v1633 = vsel %vm1632, %v1625, %v1629
          %v1634 = vand.u32 2147483647, %v1577
          %vm1635 = vcmp.eq.f32.partialorder %v1634, 8.507059e+37
          %v1636 = vand.u32 %v1577, 2147483648
          %v1637 = vor.u32 1.1754944e-38, %v1636
          %v1638 = vsel %vm1635, %v1637, %v1633
          %v1639 = vmul.f32 %v1559, %v1638
          %v1640 = vrcp.pop %v1578
          %v1641 = vmul.f32 %v1578, %v1640
          %v1642 = vsub.f32 1.0, %v1641
          %v1643 = vmul.f32 %v1640, %v1642
          %v1644 = vadd.f32 %v1640, %v1643
          %vm1645 = vweird.f32 %v1578
          %vm1646 = vweird.f32 %v1640
          %vm1647 = vmor %vm1645, %vm1646
          %v1648 = vsel %vm1647, %v1640, %v1644
          %v1649 = vand.u32 2147483647, %v1578
          %vm1650 = vcmp.eq.f32.partialorder %v1649, 8.507059e+37
          %v1651 = vand.u32 %v1578, 2147483648
          %v1652 = vor.u32 1.1754944e-38, %v1651
          %v1653 = vsel %vm1650, %v1652, %v1648
          %v1654 = vmul.f32 %v1560, %v1653
          %v1655 = vrcp.pop %v1579
          %v1656 = vmul.f32 %v1579, %v1655
          %v1657 = vsub.f32 1.0, %v1656
          %v1658 = vmul.f32 %v1655, %v1657
          %v1659 = vadd.f32 %v1655, %v1658
          %vm1660 = vweird.f32 %v1579
          %vm1661 = vweird.f32 %v1655
          %vm1662 = vmor %vm1660, %vm1661
          %v1663 = vsel %vm1662, %v1655, %v1659
          %v1664 = vand.u32 2147483647, %v1579
          %vm1665 = vcmp.eq.f32.partialorder %v1664, 8.507059e+37
          %v1666 = vand.u32 %v1579, 2147483648
          %v1667 = vor.u32 1.1754944e-38, %v1666
          %v1668 = vsel %vm1665, %v1667, %v1663
          %v1669 = vmul.f32 %v1561, %v1668
          %v1670 = vsub.f32 %v1538, %v1594
          %v1671 = vsub.f32 %v1539, %v1609
          %v1672 = vsub.f32 %v1540, %v1624
          %v1673 = vsub.f32 %v1541, %v1639
          %v1674 = vsub.f32 %v1542, %v1654
          %v1675 = vsub.f32 %v1543, %v1669
          %v1676 = vmul.f32 %v1670, %v543
          %v1677 = vmul.f32 %v1671, %v544
          %v1678 = vmul.f32 %v1672, %v545
          %v1679 = vmul.f32 %v1673, %v543
          %v1680 = vmul.f32 %v1674, %v544
          %v1681 = vmul.f32 %v1675, %v545
          %1682 = vst [vmem:[#allocation3 + $0x8] sm:$0xff] %v1676
          %1683 = vst [vmem:[#allocation3 + $0x10] sm:$0xff] %v1677
          %1684 = vst.msk [vmem:[#allocation3 + $0x18] sm:$0xff] %vm557, %v1678
          %1685 = vst [vmem:[#allocation3 + $0x28] sm:$0xff] %v1679
          %1686 = vst [vmem:[#allocation3 + $0x30] sm:$0xff] %v1680
          %1687 = vst.msk [vmem:[#allocation3 + $0x38] sm:$0xff] %vm557, %v1681
          %s1688 = scalar_lea.vmem [#allocation10], %s562
          %v1689 = vld [vmem:[%s1688] sm:$0xff]
          %v1690 = vld [vmem:[%s1688 + $0x8] sm:$0xff]
          %v1691 = vld [vmem:[%s1688 + $0x10] sm:$0xff]
          %v1692 = vld [vmem:[%s1688 + $0x18] sm:$0xff]
          %v1693 = vld [vmem:[%s1688 + $0x20] sm:$0xff]
          %v1694 = vld [vmem:[%s1688 + $0x28] sm:$0xff]
          %v1695 = vld [vmem:[%s1688 + $0x30] sm:$0xff]
          %v1696 = vld [vmem:[%s1688 + $0x38] sm:$0xff]
          %v1697 = vld [vmem:[%s1688 + $0x40] sm:$0xff]
          %v1698 = vld [vmem:[%s1688 + $0x48] sm:$0xff]
          %v1699 = vld [vmem:[%s1688 + $0x50] sm:$0xff]
          %v1700 = vld [vmem:[%s1688 + $0x58] sm:$0xff]
          %v1701 = vld [vmem:[%s1688 + $0x60] sm:$0xff]
          %v1702 = vld [vmem:[%s1688 + $0x68] sm:$0xff]
          %v1703 = vld [vmem:[%s1688 + $0x70] sm:$0xff]
          %v1704 = vld [vmem:[%s1688 + $0x78] sm:$0xff]
          %v1705 = vld [vmem:[%s1688 + $0x80] sm:$0xff]
          %v1706 = vld [vmem:[%s1688 + $0x88] sm:$0xff]
          %s1707 = scalar_lea.vmem %s5, %s582
          %v1708 = vld [vmem:[%s1707] sm:$0xff]
          %v1709 = vld [vmem:[%s1707 + $0x8] sm:$0xff]
          %v1710 = vld [vmem:[#allocation3] sm:$0xff]
          %v1711 = vld [vmem:[#allocation3 + $0x8] sm:$0xff]
          %v1712 = vld [vmem:[#allocation3 + $0x10] sm:$0xff]
          %v1713 = vld [vmem:[#allocation3 + $0x18] sm:$0xff]
          %v1714 = vld [vmem:[#allocation3 + $0x20] sm:$0xff]
          %v1715 = vld [vmem:[#allocation3 + $0x28] sm:$0xff]
          %v1716 = vld [vmem:[#allocation3 + $0x30] sm:$0xff]
          %v1717 = vld [vmem:[#allocation3 + $0x38] sm:$0xff]
          %1726 = vrot.lane.b32.xlu0 %v1710, 18
          %v1727 = vpop.permute.xlu0 %1726
          %1728 = vrot.lane.b32.xlu0 %v1711, 18
          %v1729 = vpop.permute.xlu0 %1728
          %1730 = vrot.lane.b32.xlu0 %v1712, 18
          %v1731 = vpop.permute.xlu0 %1730
          %1732 = vrot.lane.b32.xlu0 %v1713, 18
          %v1733 = vpop.permute.xlu0 %1732
          %1734 = vrot.lane.b32.xlu0 %v1714, 18
          %v1735 = vpop.permute.xlu0 %1734
          %1736 = vrot.lane.b32.xlu0 %v1715, 18
          %v1737 = vpop.permute.xlu0 %1736
          %1738 = vrot.lane.b32.xlu0 %v1716, 18
          %v1739 = vpop.permute.xlu0 %1738
          %1740 = vrot.lane.b32.xlu0 %v1717, 18
          %v1741 = vpop.permute.xlu0 %1740
          %v1742 = vsel %vm618, %v1727, %v1729
          %v1743 = vsel %vm618, %v1729, %v1731
          %v1744 = vsel %vm618, %v1731, %v1733
          %v1745 = vsel %vm618, %v1735, %v1737
          %v1746 = vsel %vm618, %v1737, %v1739
          %v1747 = vsel %vm618, %v1739, %v1741
          %v1755 = vsel %vm631, %v1691, 0
          %v1758 = vsel %vm631, %v1692, 0
          %1760 = vmatpush.msra.mxu0 0.0
          %1761 = vmatpush.msra.mxu0 0.0
          %1762 = vmatpush.msra.mxu0 0.0
          %1763 = vmatpush.msra.mxu0 0.0
          %1764 = vmatpush.msra.mxu0 0.0
          %1765 = vmatpush.msra.mxu0 0.0
          %1766 = vmatpush.msra.mxu0 0.0
          %1767 = vmatpush.msra.mxu0 0.0
          %1768 = vmatpush.msra.mxu0 0.0
          %1769 = vmatpush.msra.mxu0 0.0
          %1770 = vmatpush.msra.mxu0 0.0
          %1771 = vmatpush.msra.mxu0 0.0
          %1772 = vmatpush.msra.mxu0 0.0
          %1773 = vmatpush.msra.mxu0 0.0
          %1774 = vmatpush.msra.mxu0 %v1745
          %1775 = vmatpush.msra.mxu0 %v1742
          %1776 = vmatmul.f32.gmra.mxu0 %v1755
          %v1777 = vpop.f32.mrf.mxu0
          %v1778 = vadd.f32 0.0, %v1777
          %1779 = vmatmul.f32.gmra.mxu0 %v1758
          %v1780 = vpop.f32.mrf.mxu0
          %v1781 = vadd.f32 0.0, %v1780
          %1782 = vdwg.mxu0
          %1783 = vmatpush.msra.mxu0 0.0
          %1784 = vmatpush.msra.mxu0 0.0
          %1785 = vmatpush.msra.mxu0 0.0
          %1786 = vmatpush.msra.mxu0 0.0
          %1787 = vmatpush.msra.mxu0 0.0
          %1788 = vmatpush.msra.mxu0 0.0
          %1789 = vmatpush.msra.mxu0 0.0
          %1790 = vmatpush.msra.mxu0 0.0
          %1791 = vmatpush.msra.mxu0 0.0
          %1792 = vmatpush.msra.mxu0 0.0
          %1793 = vmatpush.msra.mxu0 0.0
          %1794 = vmatpush.msra.mxu0 0.0
          %1795 = vmatpush.msra.mxu0 0.0
          %1796 = vmatpush.msra.mxu0 0.0
          %1797 = vmatpush.msra.mxu0 %v1746
          %1798 = vmatpush.msra.mxu0 %v1743
          %1799 = vmatmul.f32.gmra.mxu0 %v1755
          %v1800 = vpop.f32.mrf.mxu0
          %v1801 = vadd.f32 0.0, %v1800
          %1802 = vmatmul.f32.gmra.mxu0 %v1758
          %v1803 = vpop.f32.mrf.mxu0
          %v1804 = vadd.f32 0.0, %v1803
          %1805 = vdwg.mxu0
          %1806 = vmatpush.msra.mxu0 0.0
          %1807 = vmatpush.msra.mxu0 0.0
          %1808 = vmatpush.msra.mxu0 0.0
          %1809 = vmatpush.msra.mxu0 0.0
          %1810 = vmatpush.msra.mxu0 0.0
          %1811 = vmatpush.msra.mxu0 0.0
          %1812 = vmatpush.msra.mxu0 0.0
          %1813 = vmatpush.msra.mxu0 0.0
          %1814 = vmatpush.msra.mxu0 0.0
          %1815 = vmatpush.msra.mxu0 0.0
          %1816 = vmatpush.msra.mxu0 0.0
          %1817 = vmatpush.msra.mxu0 0.0
          %1818 = vmatpush.msra.mxu0 0.0
          %1819 = vmatpush.msra.mxu0 0.0
          %1820 = vmatpush.msra.mxu0 %v1747
          %1821 = vmatpush.msra.mxu0 %v1744
          %1822 = vmatmul.f32.gmra.mxu0 %v1755
          %v1823 = vpop.f32.mrf.mxu0
          %v1824 = vadd.f32 0.0, %v1823
          %1825 = vmatmul.f32.gmra.mxu0 %v1758
          %v1826 = vpop.f32.mrf.mxu0
          %v1827 = vadd.f32 0.0, %v1826
          %1828 = vdwg.mxu0
          %1829 = vrot.lane.b32.xlu0 %v1710, 19
          %v1830 = vpop.permute.xlu0 %1829
          %1831 = vrot.lane.b32.xlu0 %v1711, 19
          %v1832 = vpop.permute.xlu0 %1831
          %1833 = vrot.lane.b32.xlu0 %v1712, 19
          %v1834 = vpop.permute.xlu0 %1833
          %1835 = vrot.lane.b32.xlu0 %v1713, 19
          %v1836 = vpop.permute.xlu0 %1835
          %1837 = vrot.lane.b32.xlu0 %v1714, 19
          %v1838 = vpop.permute.xlu0 %1837
          %1839 = vrot.lane.b32.xlu0 %v1715, 19
          %v1840 = vpop.permute.xlu0 %1839
          %1841 = vrot.lane.b32.xlu0 %v1716, 19
          %v1842 = vpop.permute.xlu0 %1841
          %1843 = vrot.lane.b32.xlu0 %v1717, 19
          %v1844 = vpop.permute.xlu0 %1843
          %v1845 = vsel %vm723, %v1830, %v1832
          %v1846 = vsel %vm723, %v1832, %v1834
          %v1847 = vsel %vm723, %v1834, %v1836
          %v1848 = vsel %vm723, %v1838, %v1840
          %v1849 = vsel %vm723, %v1840, %v1842
          %v1850 = vsel %vm723, %v1842, %v1844
          %v1858 = vsel %vm631, %v1689, 0
          %v1861 = vsel %vm631, %v1690, 0
          %1863 = vmatpush.msra.mxu0 0.0
          %1864 = vmatpush.msra.mxu0 0.0
          %1865 = vmatpush.msra.mxu0 0.0
          %1866 = vmatpush.msra.mxu0 0.0
          %1867 = vmatpush.msra.mxu0 0.0
          %1868 = vmatpush.msra.mxu0 0.0
          %1869 = vmatpush.msra.mxu0 0.0
          %1870 = vmatpush.msra.mxu0 0.0
          %1871 = vmatpush.msra.mxu0 0.0
          %1872 = vmatpush.msra.mxu0 0.0
          %1873 = vmatpush.msra.mxu0 0.0
          %1874 = vmatpush.msra.mxu0 0.0
          %1875 = vmatpush.msra.mxu0 0.0
          %1876 = vmatpush.msra.mxu0 0.0
          %1877 = vmatpush.msra.mxu0 %v1848
          %1878 = vmatpush.msra.mxu0 %v1845
          %1879 = vmatmul.f32.gmra.mxu0 %v1858
          %v1880 = vpop.f32.mrf.mxu0
          %v1881 = vadd.f32 %v1778, %v1880
          %1882 = vmatmul.f32.gmra.mxu0 %v1861
          %v1883 = vpop.f32.mrf.mxu0
          %v1884 = vadd.f32 %v1781, %v1883
          %1885 = vdwg.mxu0
          %1886 = vmatpush.msra.mxu0 0.0
          %1887 = vmatpush.msra.mxu0 0.0
          %1888 = vmatpush.msra.mxu0 0.0
          %1889 = vmatpush.msra.mxu0 0.0
          %1890 = vmatpush.msra.mxu0 0.0
          %1891 = vmatpush.msra.mxu0 0.0
          %1892 = vmatpush.msra.mxu0 0.0
          %1893 = vmatpush.msra.mxu0 0.0
          %1894 = vmatpush.msra.mxu0 0.0
          %1895 = vmatpush.msra.mxu0 0.0
          %1896 = vmatpush.msra.mxu0 0.0
          %1897 = vmatpush.msra.mxu0 0.0
          %1898 = vmatpush.msra.mxu0 0.0
          %1899 = vmatpush.msra.mxu0 0.0
          %1900 = vmatpush.msra.mxu0 %v1849
          %1901 = vmatpush.msra.mxu0 %v1846
          %1902 = vmatmul.f32.gmra.mxu0 %v1858
          %v1903 = vpop.f32.mrf.mxu0
          %v1904 = vadd.f32 %v1801, %v1903
          %1905 = vmatmul.f32.gmra.mxu0 %v1861
          %v1906 = vpop.f32.mrf.mxu0
          %v1907 = vadd.f32 %v1804, %v1906
          %1908 = vdwg.mxu0
          %1909 = vmatpush.msra.mxu0 0.0
          %1910 = vmatpush.msra.mxu0 0.0
          %1911 = vmatpush.msra.mxu0 0.0
          %1912 = vmatpush.msra.mxu0 0.0
          %1913 = vmatpush.msra.mxu0 0.0
          %1914 = vmatpush.msra.mxu0 0.0
          %1915 = vmatpush.msra.mxu0 0.0
          %1916 = vmatpush.msra.mxu0 0.0
          %1917 = vmatpush.msra.mxu0 0.0
          %1918 = vmatpush.msra.mxu0 0.0
          %1919 = vmatpush.msra.mxu0 0.0
          %1920 = vmatpush.msra.mxu0 0.0
          %1921 = vmatpush.msra.mxu0 0.0
          %1922 = vmatpush.msra.mxu0 0.0
          %1923 = vmatpush.msra.mxu0 %v1850
          %1924 = vmatpush.msra.mxu0 %v1847
          %1925 = vmatmul.f32.gmra.mxu0 %v1858
          %v1926 = vpop.f32.mrf.mxu0
          %v1927 = vadd.f32 %v1824, %v1926
          %1928 = vmatmul.f32.gmra.mxu0 %v1861
          %v1929 = vpop.f32.mrf.mxu0
          %v1930 = vadd.f32 %v1827, %v1929
          %1931 = vdwg.mxu0
          %1932 = vrot.lane.b32.xlu0 %v1710, 17
          %v1933 = vpop.permute.xlu0 %1932
          %1934 = vrot.lane.b32.xlu0 %v1711, 17
          %v1935 = vpop.permute.xlu0 %1934
          %1936 = vrot.lane.b32.xlu0 %v1712, 17
          %v1937 = vpop.permute.xlu0 %1936
          %1938 = vrot.lane.b32.xlu0 %v1713, 17
          %v1939 = vpop.permute.xlu0 %1938
          %1940 = vrot.lane.b32.xlu0 %v1714, 17
          %v1941 = vpop.permute.xlu0 %1940
          %1942 = vrot.lane.b32.xlu0 %v1715, 17
          %v1943 = vpop.permute.xlu0 %1942
          %1944 = vrot.lane.b32.xlu0 %v1716, 17
          %v1945 = vpop.permute.xlu0 %1944
          %1946 = vrot.lane.b32.xlu0 %v1717, 17
          %v1947 = vpop.permute.xlu0 %1946
          %v1948 = vsel %vm827, %v1933, %v1935
          %v1949 = vsel %vm827, %v1935, %v1937
          %v1950 = vsel %vm827, %v1937, %v1939
          %v1951 = vsel %vm827, %v1941, %v1943
          %v1952 = vsel %vm827, %v1943, %v1945
          %v1953 = vsel %vm827, %v1945, %v1947
          %v1961 = vsel %vm631, %v1693, 0
          %v1964 = vsel %vm631, %v1694, 0
          %1966 = vmatpush.msra.mxu0 0.0
          %1967 = vmatpush.msra.mxu0 0.0
          %1968 = vmatpush.msra.mxu0 0.0
          %1969 = vmatpush.msra.mxu0 0.0
          %1970 = vmatpush.msra.mxu0 0.0
          %1971 = vmatpush.msra.mxu0 0.0
          %1972 = vmatpush.msra.mxu0 0.0
          %1973 = vmatpush.msra.mxu0 0.0
          %1974 = vmatpush.msra.mxu0 0.0
          %1975 = vmatpush.msra.mxu0 0.0
          %1976 = vmatpush.msra.mxu0 0.0
          %1977 = vmatpush.msra.mxu0 0.0
          %1978 = vmatpush.msra.mxu0 0.0
          %1979 = vmatpush.msra.mxu0 0.0
          %1980 = vmatpush.msra.mxu0 %v1951
          %1981 = vmatpush.msra.mxu0 %v1948
          %1982 = vmatmul.f32.gmra.mxu0 %v1961
          %v1983 = vpop.f32.mrf.mxu0
          %v1984 = vadd.f32 0.0, %v1983
          %1985 = vmatmul.f32.gmra.mxu0 %v1964
          %v1986 = vpop.f32.mrf.mxu0
          %v1987 = vadd.f32 0.0, %v1986
          %1988 = vdwg.mxu0
          %1989 = vmatpush.msra.mxu0 0.0
          %1990 = vmatpush.msra.mxu0 0.0
          %1991 = vmatpush.msra.mxu0 0.0
          %1992 = vmatpush.msra.mxu0 0.0
          %1993 = vmatpush.msra.mxu0 0.0
          %1994 = vmatpush.msra.mxu0 0.0
          %1995 = vmatpush.msra.mxu0 0.0
          %1996 = vmatpush.msra.mxu0 0.0
          %1997 = vmatpush.msra.mxu0 0.0
          %1998 = vmatpush.msra.mxu0 0.0
          %1999 = vmatpush.msra.mxu0 0.0
          %2000 = vmatpush.msra.mxu0 0.0
          %2001 = vmatpush.msra.mxu0 0.0
          %2002 = vmatpush.msra.mxu0 0.0
          %2003 = vmatpush.msra.mxu0 %v1952
          %2004 = vmatpush.msra.mxu0 %v1949
          %2005 = vmatmul.f32.gmra.mxu0 %v1961
          %v2006 = vpop.f32.mrf.mxu0
          %v2007 = vadd.f32 0.0, %v2006
          %2008 = vmatmul.f32.gmra.mxu0 %v1964
          %v2009 = vpop.f32.mrf.mxu0
          %v2010 = vadd.f32 0.0, %v2009
          %2011 = vdwg.mxu0
          %2012 = vmatpush.msra.mxu0 0.0
          %2013 = vmatpush.msra.mxu0 0.0
          %2014 = vmatpush.msra.mxu0 0.0
          %2015 = vmatpush.msra.mxu0 0.0
          %2016 = vmatpush.msra.mxu0 0.0
          %2017 = vmatpush.msra.mxu0 0.0
          %2018 = vmatpush.msra.mxu0 0.0
          %2019 = vmatpush.msra.mxu0 0.0
          %2020 = vmatpush.msra.mxu0 0.0
          %2021 = vmatpush.msra.mxu0 0.0
          %2022 = vmatpush.msra.mxu0 0.0
          %2023 = vmatpush.msra.mxu0 0.0
          %2024 = vmatpush.msra.mxu0 0.0
          %2025 = vmatpush.msra.mxu0 0.0
          %2026 = vmatpush.msra.mxu0 %v1953
          %2027 = vmatpush.msra.mxu0 %v1950
          %2028 = vmatmul.f32.gmra.mxu0 %v1961
          %v2029 = vpop.f32.mrf.mxu0
          %v2030 = vadd.f32 0.0, %v2029
          %2031 = vmatmul.f32.gmra.mxu0 %v1964
          %v2032 = vpop.f32.mrf.mxu0
          %v2033 = vadd.f32 0.0, %v2032
          %2034 = vdwg.mxu0
          %v2035 = vadd.f32 %v1881, %v1984
          %v2036 = vadd.f32 %v1904, %v2007
          %v2037 = vadd.f32 %v1927, %v2030
          %v2038 = vadd.f32 %v1884, %v1987
          %v2039 = vadd.f32 %v1907, %v2010
          %v2040 = vadd.f32 %v1930, %v2033
          %2041 = vrot.lane.b32.xlu0 %v1710, 1
          %v2042 = vpop.permute.xlu0 %2041
          %2043 = vrot.lane.b32.xlu0 %v1711, 1
          %v2044 = vpop.permute.xlu0 %2043
          %2045 = vrot.lane.b32.xlu0 %v1712, 1
          %v2046 = vpop.permute.xlu0 %2045
          %2047 = vrot.lane.b32.xlu0 %v1713, 1
          %v2048 = vpop.permute.xlu0 %2047
          %2049 = vrot.lane.b32.xlu0 %v1714, 1
          %v2050 = vpop.permute.xlu0 %2049
          %2051 = vrot.lane.b32.xlu0 %v1715, 1
          %v2052 = vpop.permute.xlu0 %2051
          %2053 = vrot.lane.b32.xlu0 %v1716, 1
          %v2054 = vpop.permute.xlu0 %2053
          %2055 = vrot.lane.b32.xlu0 %v1717, 1
          %v2056 = vpop.permute.xlu0 %2055
          %v2057 = vsel %vm937, %v2042, %v2044
          %v2058 = vsel %vm937, %v2044, %v2046
          %v2059 = vsel %vm937, %v2046, %v2048
          %v2060 = vsel %vm937, %v2050, %v2052
          %v2061 = vsel %vm937, %v2052, %v2054
          %v2062 = vsel %vm937, %v2054, %v2056
          %v2070 = vsel %vm631, %v1695, 0
          %v2073 = vsel %vm631, %v1696, 0
          %2075 = vmatpush.msra.mxu0 0.0
          %2076 = vmatpush.msra.mxu0 0.0
          %2077 = vmatpush.msra.mxu0 0.0
          %2078 = vmatpush.msra.mxu0 0.0
          %2079 = vmatpush.msra.mxu0 0.0
          %2080 = vmatpush.msra.mxu0 0.0
          %2081 = vmatpush.msra.mxu0 0.0
          %2082 = vmatpush.msra.mxu0 0.0
          %2083 = vmatpush.msra.mxu0 0.0
          %2084 = vmatpush.msra.mxu0 0.0
          %2085 = vmatpush.msra.mxu0 0.0
          %2086 = vmatpush.msra.mxu0 0.0
          %2087 = vmatpush.msra.mxu0 0.0
          %2088 = vmatpush.msra.mxu0 0.0
          %2089 = vmatpush.msra.mxu0 %v2060
          %2090 = vmatpush.msra.mxu0 %v2057
          %2091 = vmatmul.f32.gmra.mxu0 %v2070
          %v2092 = vpop.f32.mrf.mxu0
          %v2093 = vadd.f32 0.0, %v2092
          %2094 = vmatmul.f32.gmra.mxu0 %v2073
          %v2095 = vpop.f32.mrf.mxu0
          %v2096 = vadd.f32 0.0, %v2095
          %2097 = vdwg.mxu0
          %2098 = vmatpush.msra.mxu0 0.0
          %2099 = vmatpush.msra.mxu0 0.0
          %2100 = vmatpush.msra.mxu0 0.0
          %2101 = vmatpush.msra.mxu0 0.0
          %2102 = vmatpush.msra.mxu0 0.0
          %2103 = vmatpush.msra.mxu0 0.0
          %2104 = vmatpush.msra.mxu0 0.0
          %2105 = vmatpush.msra.mxu0 0.0
          %2106 = vmatpush.msra.mxu0 0.0
          %2107 = vmatpush.msra.mxu0 0.0
          %2108 = vmatpush.msra.mxu0 0.0
          %2109 = vmatpush.msra.mxu0 0.0
          %2110 = vmatpush.msra.mxu0 0.0
          %2111 = vmatpush.msra.mxu0 0.0
          %2112 = vmatpush.msra.mxu0 %v2061
          %2113 = vmatpush.msra.mxu0 %v2058
          %2114 = vmatmul.f32.gmra.mxu0 %v2070
          %v2115 = vpop.f32.mrf.mxu0
          %v2116 = vadd.f32 0.0, %v2115
          %2117 = vmatmul.f32.gmra.mxu0 %v2073
          %v2118 = vpop.f32.mrf.mxu0
          %v2119 = vadd.f32 0.0, %v2118
          %2120 = vdwg.mxu0
          %2121 = vmatpush.msra.mxu0 0.0
          %2122 = vmatpush.msra.mxu0 0.0
          %2123 = vmatpush.msra.mxu0 0.0
          %2124 = vmatpush.msra.mxu0 0.0
          %2125 = vmatpush.msra.mxu0 0.0
          %2126 = vmatpush.msra.mxu0 0.0
          %2127 = vmatpush.msra.mxu0 0.0
          %2128 = vmatpush.msra.mxu0 0.0
          %2129 = vmatpush.msra.mxu0 0.0
          %2130 = vmatpush.msra.mxu0 0.0
          %2131 = vmatpush.msra.mxu0 0.0
          %2132 = vmatpush.msra.mxu0 0.0
          %2133 = vmatpush.msra.mxu0 0.0
          %2134 = vmatpush.msra.mxu0 0.0
          %2135 = vmatpush.msra.mxu0 %v2062
          %2136 = vmatpush.msra.mxu0 %v2059
          %2137 = vmatmul.f32.gmra.mxu0 %v2070
          %v2138 = vpop.f32.mrf.mxu0
          %v2139 = vadd.f32 0.0, %v2138
          %2140 = vmatmul.f32.gmra.mxu0 %v2073
          %v2141 = vpop.f32.mrf.mxu0
          %v2142 = vadd.f32 0.0, %v2141
          %2143 = vdwg.mxu0
          %v2144 = vadd.f32 %v2035, %v2093
          %v2145 = vadd.f32 %v2036, %v2116
          %v2146 = vadd.f32 %v2037, %v2139
          %v2147 = vadd.f32 %v2038, %v2096
          %v2148 = vadd.f32 %v2039, %v2119
          %v2149 = vadd.f32 %v2040, %v2142
          %v2151 = vsel %vm631, %v1697, 0
          %v2154 = vsel %vm631, %v1698, 0
          %2156 = vmatpush.msra.mxu0 0.0
          %2157 = vmatpush.msra.mxu0 0.0
          %2158 = vmatpush.msra.mxu0 0.0
          %2159 = vmatpush.msra.mxu0 0.0
          %2160 = vmatpush.msra.mxu0 0.0
          %2161 = vmatpush.msra.mxu0 0.0
          %2162 = vmatpush.msra.mxu0 0.0
          %2163 = vmatpush.msra.mxu0 0.0
          %2164 = vmatpush.msra.mxu0 0.0
          %2165 = vmatpush.msra.mxu0 0.0
          %2166 = vmatpush.msra.mxu0 0.0
          %2167 = vmatpush.msra.mxu0 0.0
          %2168 = vmatpush.msra.mxu0 0.0
          %2169 = vmatpush.msra.mxu0 0.0
          %2170 = vmatpush.msra.mxu0 %v1715
          %2171 = vmatpush.msra.mxu0 %v1711
          %2172 = vmatmul.f32.gmra.mxu0 %v2151
          %v2173 = vpop.f32.mrf.mxu0
          %v2174 = vadd.f32 0.0, %v2173
          %2175 = vmatmul.f32.gmra.mxu0 %v2154
          %v2176 = vpop.f32.mrf.mxu0
          %v2177 = vadd.f32 0.0, %v2176
          %2178 = vdwg.mxu0
          %2179 = vmatpush.msra.mxu0 0.0
          %2180 = vmatpush.msra.mxu0 0.0
          %2181 = vmatpush.msra.mxu0 0.0
          %2182 = vmatpush.msra.mxu0 0.0
          %2183 = vmatpush.msra.mxu0 0.0
          %2184 = vmatpush.msra.mxu0 0.0
          %2185 = vmatpush.msra.mxu0 0.0
          %2186 = vmatpush.msra.mxu0 0.0
          %2187 = vmatpush.msra.mxu0 0.0
          %2188 = vmatpush.msra.mxu0 0.0
          %2189 = vmatpush.msra.mxu0 0.0
          %2190 = vmatpush.msra.mxu0 0.0
          %2191 = vmatpush.msra.mxu0 0.0
          %2192 = vmatpush.msra.mxu0 0.0
          %2193 = vmatpush.msra.mxu0 %v1716
          %2194 = vmatpush.msra.mxu0 %v1712
          %2195 = vmatmul.f32.gmra.mxu0 %v2151
          %v2196 = vpop.f32.mrf.mxu0
          %v2197 = vadd.f32 0.0, %v2196
          %2198 = vmatmul.f32.gmra.mxu0 %v2154
          %v2199 = vpop.f32.mrf.mxu0
          %v2200 = vadd.f32 0.0, %v2199
          %2201 = vdwg.mxu0
          %2202 = vmatpush.msra.mxu0 0.0
          %2203 = vmatpush.msra.mxu0 0.0
          %2204 = vmatpush.msra.mxu0 0.0
          %2205 = vmatpush.msra.mxu0 0.0
          %2206 = vmatpush.msra.mxu0 0.0
          %2207 = vmatpush.msra.mxu0 0.0
          %2208 = vmatpush.msra.mxu0 0.0
          %2209 = vmatpush.msra.mxu0 0.0
          %2210 = vmatpush.msra.mxu0 0.0
          %2211 = vmatpush.msra.mxu0 0.0
          %2212 = vmatpush.msra.mxu0 0.0
          %2213 = vmatpush.msra.mxu0 0.0
          %2214 = vmatpush.msra.mxu0 0.0
          %2215 = vmatpush.msra.mxu0 0.0
          %2216 = vmatpush.msra.mxu0 %v1717
          %2217 = vmatpush.msra.mxu0 %v1713
          %2218 = vmatmul.f32.gmra.mxu0 %v2151
          %v2219 = vpop.f32.mrf.mxu0
          %v2220 = vadd.f32 0.0, %v2219
          %2221 = vmatmul.f32.gmra.mxu0 %v2154
          %v2222 = vpop.f32.mrf.mxu0
          %v2223 = vadd.f32 0.0, %v2222
          %2224 = vdwg.mxu0
          %v2225 = vadd.f32 %v2144, %v2174
          %v2226 = vadd.f32 %v2145, %v2197
          %v2227 = vadd.f32 %v2146, %v2220
          %v2228 = vadd.f32 %v2147, %v2177
          %v2229 = vadd.f32 %v2148, %v2200
          %v2230 = vadd.f32 %v2149, %v2223
          %2231 = vrot.lane.b32.xlu0 %v1711, 127
          %v2232 = vpop.permute.xlu0 %2231
          %2233 = vrot.lane.b32.xlu0 %v1712, 127
          %v2234 = vpop.permute.xlu0 %2233
          %2235 = vrot.lane.b32.xlu0 %v1713, 127
          %v2236 = vpop.permute.xlu0 %2235
          %2237 = vrot.lane.b32.xlu0 %v1715, 127
          %v2238 = vpop.permute.xlu0 %2237
          %2239 = vrot.lane.b32.xlu0 %v1716, 127
          %v2240 = vpop.permute.xlu0 %2239
          %2241 = vrot.lane.b32.xlu0 %v1717, 127
          %v2242 = vpop.permute.xlu0 %2241
          %v2243 = vsel %vm1124, %v2232, %v2234
          %v2244 = vsel %vm1124, %v2234, %v2236
          %v2245 = vsel %vm1124, %v2238, %v2240
          %v2246 = vsel %vm1124, %v2240, %v2242
          %v2254 = vsel %vm631, %v1699, 0
          %v2257 = vsel %vm631, %v1700, 0
          %2259 = vmatpush.msra.mxu0 0.0
          %2260 = vmatpush.msra.mxu0 0.0
          %2261 = vmatpush.msra.mxu0 0.0
          %2262 = vmatpush.msra.mxu0 0.0
          %2263 = vmatpush.msra.mxu0 0.0
          %2264 = vmatpush.msra.mxu0 0.0
          %2265 = vmatpush.msra.mxu0 0.0
          %2266 = vmatpush.msra.mxu0 0.0
          %2267 = vmatpush.msra.mxu0 0.0
          %2268 = vmatpush.msra.mxu0 0.0
          %2269 = vmatpush.msra.mxu0 0.0
          %2270 = vmatpush.msra.mxu0 0.0
          %2271 = vmatpush.msra.mxu0 0.0
          %2272 = vmatpush.msra.mxu0 0.0
          %2273 = vmatpush.msra.mxu0 %v2245
          %2274 = vmatpush.msra.mxu0 %v2243
          %2275 = vmatmul.f32.gmra.mxu0 %v2254
          %v2276 = vpop.f32.mrf.mxu0
          %v2277 = vadd.f32 0.0, %v2276
          %2278 = vmatmul.f32.gmra.mxu0 %v2257
          %v2279 = vpop.f32.mrf.mxu0
          %v2280 = vadd.f32 0.0, %v2279
          %2281 = vdwg.mxu0
          %2282 = vmatpush.msra.mxu0 0.0
          %2283 = vmatpush.msra.mxu0 0.0
          %2284 = vmatpush.msra.mxu0 0.0
          %2285 = vmatpush.msra.mxu0 0.0
          %2286 = vmatpush.msra.mxu0 0.0
          %2287 = vmatpush.msra.mxu0 0.0
          %2288 = vmatpush.msra.mxu0 0.0
          %2289 = vmatpush.msra.mxu0 0.0
          %2290 = vmatpush.msra.mxu0 0.0
          %2291 = vmatpush.msra.mxu0 0.0
          %2292 = vmatpush.msra.mxu0 0.0
          %2293 = vmatpush.msra.mxu0 0.0
          %2294 = vmatpush.msra.mxu0 0.0
          %2295 = vmatpush.msra.mxu0 0.0
          %2296 = vmatpush.msra.mxu0 %v2246
          %2297 = vmatpush.msra.mxu0 %v2244
          %2298 = vmatmul.f32.gmra.mxu0 %v2254
          %v2299 = vpop.f32.mrf.mxu0
          %v2300 = vadd.f32 0.0, %v2299
          %2301 = vmatmul.f32.gmra.mxu0 %v2257
          %v2302 = vpop.f32.mrf.mxu0
          %v2303 = vadd.f32 0.0, %v2302
          %2304 = vdwg.mxu0
          %2305 = vmatpush.msra.mxu0 0.0
          %2306 = vmatpush.msra.mxu0 0.0
          %2307 = vmatpush.msra.mxu0 0.0
          %2308 = vmatpush.msra.mxu0 0.0
          %2309 = vmatpush.msra.mxu0 0.0
          %2310 = vmatpush.msra.mxu0 0.0
          %2311 = vmatpush.msra.mxu0 0.0
          %2312 = vmatpush.msra.mxu0 0.0
          %2313 = vmatpush.msra.mxu0 0.0
          %2314 = vmatpush.msra.mxu0 0.0
          %2315 = vmatpush.msra.mxu0 0.0
          %2316 = vmatpush.msra.mxu0 0.0
          %2317 = vmatpush.msra.mxu0 0.0
          %2318 = vmatpush.msra.mxu0 0.0
          %2319 = vmatpush.msra.mxu0 %v2242
          %2320 = vmatpush.msra.mxu0 %v2236
          %2321 = vmatmul.f32.gmra.mxu0 %v2254
          %v2322 = vpop.f32.mrf.mxu0
          %v2323 = vadd.f32 0.0, %v2322
          %2324 = vmatmul.f32.gmra.mxu0 %v2257
          %v2325 = vpop.f32.mrf.mxu0
          %v2326 = vadd.f32 0.0, %v2325
          %2327 = vdwg.mxu0
          %v2328 = vadd.f32 %v2225, %v2277
          %v2329 = vadd.f32 %v2226, %v2300
          %v2330 = vadd.f32 %v2227, %v2323
          %v2331 = vadd.f32 %v2228, %v2280
          %v2332 = vadd.f32 %v2229, %v2303
          %v2333 = vadd.f32 %v2230, %v2326
          %2334 = vrot.lane.b32.xlu0 %v1711, 111
          %v2335 = vpop.permute.xlu0 %2334
          %2336 = vrot.lane.b32.xlu0 %v1712, 111
          %v2337 = vpop.permute.xlu0 %2336
          %2338 = vrot.lane.b32.xlu0 %v1713, 111
          %v2339 = vpop.permute.xlu0 %2338
          %2340 = vrot.lane.b32.xlu0 %v1715, 111
          %v2341 = vpop.permute.xlu0 %2340
          %2342 = vrot.lane.b32.xlu0 %v1716, 111
          %v2343 = vpop.permute.xlu0 %2342
          %2344 = vrot.lane.b32.xlu0 %v1717, 111
          %v2345 = vpop.permute.xlu0 %2344
          %v2346 = vsel %vm1228, %v2335, %v2337
          %v2347 = vsel %vm1228, %v2337, %v2339
          %v2348 = vsel %vm1228, %v2341, %v2343
          %v2349 = vsel %vm1228, %v2343, %v2345
          %v2357 = vsel %vm631, %v1701, 0
          %v2360 = vsel %vm631, %v1702, 0
          %2362 = vmatpush.msra.mxu0 0.0
          %2363 = vmatpush.msra.mxu0 0.0
          %2364 = vmatpush.msra.mxu0 0.0
          %2365 = vmatpush.msra.mxu0 0.0
          %2366 = vmatpush.msra.mxu0 0.0
          %2367 = vmatpush.msra.mxu0 0.0
          %2368 = vmatpush.msra.mxu0 0.0
          %2369 = vmatpush.msra.mxu0 0.0
          %2370 = vmatpush.msra.mxu0 0.0
          %2371 = vmatpush.msra.mxu0 0.0
          %2372 = vmatpush.msra.mxu0 0.0
          %2373 = vmatpush.msra.mxu0 0.0
          %2374 = vmatpush.msra.mxu0 0.0
          %2375 = vmatpush.msra.mxu0 0.0
          %2376 = vmatpush.msra.mxu0 %v2348
          %2377 = vmatpush.msra.mxu0 %v2346
          %2378 = vmatmul.f32.gmra.mxu0 %v2357
          %v2379 = vpop.f32.mrf.mxu0
          %v2380 = vadd.f32 0.0, %v2379
          %2381 = vmatmul.f32.gmra.mxu0 %v2360
          %v2382 = vpop.f32.mrf.mxu0
          %v2383 = vadd.f32 0.0, %v2382
          %2384 = vdwg.mxu0
          %2385 = vmatpush.msra.mxu0 0.0
          %2386 = vmatpush.msra.mxu0 0.0
          %2387 = vmatpush.msra.mxu0 0.0
          %2388 = vmatpush.msra.mxu0 0.0
          %2389 = vmatpush.msra.mxu0 0.0
          %2390 = vmatpush.msra.mxu0 0.0
          %2391 = vmatpush.msra.mxu0 0.0
          %2392 = vmatpush.msra.mxu0 0.0
          %2393 = vmatpush.msra.mxu0 0.0
          %2394 = vmatpush.msra.mxu0 0.0
          %2395 = vmatpush.msra.mxu0 0.0
          %2396 = vmatpush.msra.mxu0 0.0
          %2397 = vmatpush.msra.mxu0 0.0
          %2398 = vmatpush.msra.mxu0 0.0
          %2399 = vmatpush.msra.mxu0 %v2349
          %2400 = vmatpush.msra.mxu0 %v2347
          %2401 = vmatmul.f32.gmra.mxu0 %v2357
          %v2402 = vpop.f32.mrf.mxu0
          %v2403 = vadd.f32 0.0, %v2402
          %2404 = vmatmul.f32.gmra.mxu0 %v2360
          %v2405 = vpop.f32.mrf.mxu0
          %v2406 = vadd.f32 0.0, %v2405
          %2407 = vdwg.mxu0
          %2408 = vmatpush.msra.mxu0 0.0
          %2409 = vmatpush.msra.mxu0 0.0
          %2410 = vmatpush.msra.mxu0 0.0
          %2411 = vmatpush.msra.mxu0 0.0
          %2412 = vmatpush.msra.mxu0 0.0
          %2413 = vmatpush.msra.mxu0 0.0
          %2414 = vmatpush.msra.mxu0 0.0
          %2415 = vmatpush.msra.mxu0 0.0
          %2416 = vmatpush.msra.mxu0 0.0
          %2417 = vmatpush.msra.mxu0 0.0
          %2418 = vmatpush.msra.mxu0 0.0
          %2419 = vmatpush.msra.mxu0 0.0
          %2420 = vmatpush.msra.mxu0 0.0
          %2421 = vmatpush.msra.mxu0 0.0
          %2422 = vmatpush.msra.mxu0 %v2345
          %2423 = vmatpush.msra.mxu0 %v2339
          %2424 = vmatmul.f32.gmra.mxu0 %v2357
          %v2425 = vpop.f32.mrf.mxu0
          %v2426 = vadd.f32 0.0, %v2425
          %2427 = vmatmul.f32.gmra.mxu0 %v2360
          %v2428 = vpop.f32.mrf.mxu0
          %v2429 = vadd.f32 0.0, %v2428
          %2430 = vdwg.mxu0
          %v2431 = vadd.f32 %v2328, %v2380
          %v2432 = vadd.f32 %v2329, %v2403
          %v2433 = vadd.f32 %v2330, %v2426
          %v2434 = vadd.f32 %v2331, %v2383
          %v2435 = vadd.f32 %v2332, %v2406
          %v2436 = vadd.f32 %v2333, %v2429
          %2437 = vrot.lane.b32.xlu0 %v1711, 110
          %v2438 = vpop.permute.xlu0 %2437
          %2439 = vrot.lane.b32.xlu0 %v1712, 110
          %v2440 = vpop.permute.xlu0 %2439
          %2441 = vrot.lane.b32.xlu0 %v1713, 110
          %v2442 = vpop.permute.xlu0 %2441
          %2443 = vrot.lane.b32.xlu0 %v1715, 110
          %v2444 = vpop.permute.xlu0 %2443
          %2445 = vrot.lane.b32.xlu0 %v1716, 110
          %v2446 = vpop.permute.xlu0 %2445
          %2447 = vrot.lane.b32.xlu0 %v1717, 110
          %v2448 = vpop.permute.xlu0 %2447
          %v2449 = vsel %vm1332, %v2438, %v2440
          %v2450 = vsel %vm1332, %v2440, %v2442
          %v2451 = vsel %vm1332, %v2444, %v2446
          %v2452 = vsel %vm1332, %v2446, %v2448
          %v2460 = vsel %vm631, %v1703, 0
          %v2463 = vsel %vm631, %v1704, 0
          %2465 = vmatpush.msra.mxu0 0.0
          %2466 = vmatpush.msra.mxu0 0.0
          %2467 = vmatpush.msra.mxu0 0.0
          %2468 = vmatpush.msra.mxu0 0.0
          %2469 = vmatpush.msra.mxu0 0.0
          %2470 = vmatpush.msra.mxu0 0.0
          %2471 = vmatpush.msra.mxu0 0.0
          %2472 = vmatpush.msra.mxu0 0.0
          %2473 = vmatpush.msra.mxu0 0.0
          %2474 = vmatpush.msra.mxu0 0.0
          %2475 = vmatpush.msra.mxu0 0.0
          %2476 = vmatpush.msra.mxu0 0.0
          %2477 = vmatpush.msra.mxu0 0.0
          %2478 = vmatpush.msra.mxu0 0.0
          %2479 = vmatpush.msra.mxu0 %v2451
          %2480 = vmatpush.msra.mxu0 %v2449
          %2481 = vmatmul.f32.gmra.mxu0 %v2460
          %v2482 = vpop.f32.mrf.mxu0
          %v2483 = vadd.f32 0.0, %v2482
          %2484 = vmatmul.f32.gmra.mxu0 %v2463
          %v2485 = vpop.f32.mrf.mxu0
          %v2486 = vadd.f32 0.0, %v2485
          %2487 = vdwg.mxu0
          %2488 = vmatpush.msra.mxu0 0.0
          %2489 = vmatpush.msra.mxu0 0.0
          %2490 = vmatpush.msra.mxu0 0.0
          %2491 = vmatpush.msra.mxu0 0.0
          %2492 = vmatpush.msra.mxu0 0.0
          %2493 = vmatpush.msra.mxu0 0.0
          %2494 = vmatpush.msra.mxu0 0.0
          %2495 = vmatpush.msra.mxu0 0.0
          %2496 = vmatpush.msra.mxu0 0.0
          %2497 = vmatpush.msra.mxu0 0.0
          %2498 = vmatpush.msra.mxu0 0.0
          %2499 = vmatpush.msra.mxu0 0.0
          %2500 = vmatpush.msra.mxu0 0.0
          %2501 = vmatpush.msra.mxu0 0.0
          %2502 = vmatpush.msra.mxu0 %v2452
          %2503 = vmatpush.msra.mxu0 %v2450
          %2504 = vmatmul.f32.gmra.mxu0 %v2460
          %v2505 = vpop.f32.mrf.mxu0
          %v2506 = vadd.f32 0.0, %v2505
          %2507 = vmatmul.f32.gmra.mxu0 %v2463
          %v2508 = vpop.f32.mrf.mxu0
          %v2509 = vadd.f32 0.0, %v2508
          %2510 = vdwg.mxu0
          %2511 = vmatpush.msra.mxu0 0.0
          %2512 = vmatpush.msra.mxu0 0.0
          %2513 = vmatpush.msra.mxu0 0.0
          %2514 = vmatpush.msra.mxu0 0.0
          %2515 = vmatpush.msra.mxu0 0.0
          %2516 = vmatpush.msra.mxu0 0.0
          %2517 = vmatpush.msra.mxu0 0.0
          %2518 = vmatpush.msra.mxu0 0.0
          %2519 = vmatpush.msra.mxu0 0.0
          %2520 = vmatpush.msra.mxu0 0.0
          %2521 = vmatpush.msra.mxu0 0.0
          %2522 = vmatpush.msra.mxu0 0.0
          %2523 = vmatpush.msra.mxu0 0.0
          %2524 = vmatpush.msra.mxu0 0.0
          %2525 = vmatpush.msra.mxu0 %v2448
          %2526 = vmatpush.msra.mxu0 %v2442
          %2527 = vmatmul.f32.gmra.mxu0 %v2460
          %v2528 = vpop.f32.mrf.mxu0
          %v2529 = vadd.f32 0.0, %v2528
          %2530 = vmatmul.f32.gmra.mxu0 %v2463
          %v2531 = vpop.f32.mrf.mxu0
          %v2532 = vadd.f32 0.0, %v2531
          %2533 = vdwg.mxu0
          %v2534 = vadd.f32 %v2431, %v2483
          %v2535 = vadd.f32 %v2432, %v2506
          %v2536 = vadd.f32 %v2433, %v2529
          %v2537 = vadd.f32 %v2434, %v2486
          %v2538 = vadd.f32 %v2435, %v2509
          %v2539 = vadd.f32 %v2436, %v2532
          %2540 = vrot.lane.b32.xlu0 %v1711, 109
          %v2541 = vpop.permute.xlu0 %2540
          %2542 = vrot.lane.b32.xlu0 %v1712, 109
          %v2543 = vpop.permute.xlu0 %2542
          %2544 = vrot.lane.b32.xlu0 %v1713, 109
          %v2545 = vpop.permute.xlu0 %2544
          %2546 = vrot.lane.b32.xlu0 %v1715, 109
          %v2547 = vpop.permute.xlu0 %2546
          %2548 = vrot.lane.b32.xlu0 %v1716, 109
          %v2549 = vpop.permute.xlu0 %2548
          %2550 = vrot.lane.b32.xlu0 %v1717, 109
          %v2551 = vpop.permute.xlu0 %2550
          %v2552 = vsel %vm1436, %v2541, %v2543
          %v2553 = vsel %vm1436, %v2543, %v2545
          %v2554 = vsel %vm1436, %v2547, %v2549
          %v2555 = vsel %vm1436, %v2549, %v2551
          %v2563 = vsel %vm631, %v1705, 0
          %v2566 = vsel %vm631, %v1706, 0
          %2568 = vmatpush.msra.mxu0 0.0
          %2569 = vmatpush.msra.mxu0 0.0
          %2570 = vmatpush.msra.mxu0 0.0
          %2571 = vmatpush.msra.mxu0 0.0
          %2572 = vmatpush.msra.mxu0 0.0
          %2573 = vmatpush.msra.mxu0 0.0
          %2574 = vmatpush.msra.mxu0 0.0
          %2575 = vmatpush.msra.mxu0 0.0
          %2576 = vmatpush.msra.mxu0 0.0
          %2577 = vmatpush.msra.mxu0 0.0
          %2578 = vmatpush.msra.mxu0 0.0
          %2579 = vmatpush.msra.mxu0 0.0
          %2580 = vmatpush.msra.mxu0 0.0
          %2581 = vmatpush.msra.mxu0 0.0
          %2582 = vmatpush.msra.mxu0 %v2554
          %2583 = vmatpush.msra.mxu0 %v2552
          %2584 = vmatmul.f32.gmra.mxu0 %v2563
          %v2585 = vpop.f32.mrf.mxu0
          %v2586 = vadd.f32 0.0, %v2585
          %2587 = vmatmul.f32.gmra.mxu0 %v2566
          %v2588 = vpop.f32.mrf.mxu0
          %v2589 = vadd.f32 0.0, %v2588
          %2590 = vdwg.mxu0
          %2591 = vmatpush.msra.mxu0 0.0
          %2592 = vmatpush.msra.mxu0 0.0
          %2593 = vmatpush.msra.mxu0 0.0
          %2594 = vmatpush.msra.mxu0 0.0
          %2595 = vmatpush.msra.mxu0 0.0
          %2596 = vmatpush.msra.mxu0 0.0
          %2597 = vmatpush.msra.mxu0 0.0
          %2598 = vmatpush.msra.mxu0 0.0
          %2599 = vmatpush.msra.mxu0 0.0
          %2600 = vmatpush.msra.mxu0 0.0
          %2601 = vmatpush.msra.mxu0 0.0
          %2602 = vmatpush.msra.mxu0 0.0
          %2603 = vmatpush.msra.mxu0 0.0
          %2604 = vmatpush.msra.mxu0 0.0
          %2605 = vmatpush.msra.mxu0 %v2555
          %2606 = vmatpush.msra.mxu0 %v2553
          %2607 = vmatmul.f32.gmra.mxu0 %v2563
          %v2608 = vpop.f32.mrf.mxu0
          %v2609 = vadd.f32 0.0, %v2608
          %2610 = vmatmul.f32.gmra.mxu0 %v2566
          %v2611 = vpop.f32.mrf.mxu0
          %v2612 = vadd.f32 0.0, %v2611
          %2613 = vdwg.mxu0
          %2614 = vmatpush.msra.mxu0 0.0
          %2615 = vmatpush.msra.mxu0 0.0
          %2616 = vmatpush.msra.mxu0 0.0
          %2617 = vmatpush.msra.mxu0 0.0
          %2618 = vmatpush.msra.mxu0 0.0
          %2619 = vmatpush.msra.mxu0 0.0
          %2620 = vmatpush.msra.mxu0 0.0
          %2621 = vmatpush.msra.mxu0 0.0
          %2622 = vmatpush.msra.mxu0 0.0
          %2623 = vmatpush.msra.mxu0 0.0
          %2624 = vmatpush.msra.mxu0 0.0
          %2625 = vmatpush.msra.mxu0 0.0
          %2626 = vmatpush.msra.mxu0 0.0
          %2627 = vmatpush.msra.mxu0 0.0
          %2628 = vmatpush.msra.mxu0 %v2551
          %2629 = vmatpush.msra.mxu0 %v2545
          %2630 = vmatmul.f32.gmra.mxu0 %v2563
          %v2631 = vpop.f32.mrf.mxu0
          %v2632 = vadd.f32 0.0, %v2631
          %2633 = vmatmul.f32.gmra.mxu0 %v2566
          %v2634 = vpop.f32.mrf.mxu0
          %v2635 = vadd.f32 0.0, %v2634
          %2636 = vdwg.mxu0
          %v2637 = vadd.f32 %v2534, %v2586
          %v2638 = vadd.f32 %v2535, %v2609
          %v2639 = vadd.f32 %v2536, %v2632
          %v2640 = vadd.f32 %v2537, %v2589
          %v2641 = vadd.f32 %v2538, %v2612
          %v2642 = vadd.f32 %v2539, %v2635
          %2644 = vset.pattern.permute.xlu0 0
          %2645 = vperm.xlu0 %2644, %v1708
          %v2646 = vpop.permute.xlu0 %2645
          %2649 = vset.pattern.permute.xlu0 0
          %2650 = vperm.xlu0 %2649, %v1709
          %v2651 = vpop.permute.xlu0 %2650
          %v2653 = vadd.f32 %v2637, %v2646
          %v2654 = vadd.f32 %v2638, %v2646
          %v2655 = vadd.f32 %v2639, %v2646
          %v2656 = vadd.f32 %v2640, %v2651
          %v2657 = vadd.f32 %v2641, %v2651
          %v2658 = vadd.f32 %v2642, %v2651
          %v2659 = vmul.f32 %v2653, %v543
          %v2660 = vmul.f32 %v2654, %v544
          %v2661 = vmul.f32 %v2655, %v545
          %v2662 = vmul.f32 %v2656, %v543
          %v2663 = vmul.f32 %v2657, %v544
          %v2664 = vmul.f32 %v2658, %v545
          %v2665 = vadd.f32 %v2659, %v2660
          %v2666 = vsel %vm557, %v2661, 0.0
          %v2667 = vadd.f32 %v2665, %v2666
          %2668 = vadd.xlane.f32.xlu0 %v2667
          %v2669 = vpop.xlane.xlu0 %2668
          %v2670 = vadd.f32 %v2662, %v2663
          %v2671 = vsel %vm557, %v2664, 0.0
          %v2672 = vadd.f32 %v2670, %v2671
          %2673 = vadd.xlane.f32.xlu0 %v2672
          %v2674 = vpop.xlane.xlu0 %2673
          %v2675 = vmul.f32 %v2669, 0.00390625
          %v2676 = vmul.f32 %v2674, 0.00390625
          %s2677 = scalar_lea.vmem %s6, %s582
          %v2678 = vld [vmem:[%s2677] sm:$0xff]
          %v2679 = vld [vmem:[%s2677 + $0x8] sm:$0xff]
          %v2680 = vmul.f32 %v2678, %v2675
          %v2681 = vmul.f32 %v2679, %v2676
          %v2682 = vsel %vm937, %v2680, 0.0
          %v2683 = vsel %vm937, %v2681, 0.0
          %v2684 = vadd.f32 %v2682, %v2683
          %v2685 = vrot.slane %v2684, 4
          %v2686 = vadd.f32 %v2684, %v2685
          %v2687 = vrot.slane %v2686, 2
          %v2688 = vadd.f32 %v2686, %v2687
          %v2689 = vrot.slane %v2688, 1
          %v2690 = vadd.f32 %v2688, %v2689
          %s2691 = scalar_lea.vmem %s7, %s531
          %v2692 = vld [vmem:[%s2691] sm:$0x1]
          %v2693 = vadd.f32 %v2690, %v2692
          %v2694 = vmax.f32 %v2693, 0.0
          %s2695 = scalar_lea.vmem %s8, %s582
          %v2696 = vld [vmem:[%s2695] sm:$0xff]
          %v2697 = vld [vmem:[%s2695 + $0x8] sm:$0xff]
          %v2698 = vperm.slane %v2694, 0
          %v2699 = vmul.f32 %v2696, %v2698
          %v2700 = vmul.f32 %v2697, %v2698
          %v2701 = vadd.f32 %v2699, 0.0
          %v2702 = vadd.f32 %v2700, 0.0
          %s2703 = scalar_lea.vmem %s9, %s582
          %v2704 = vld [vmem:[%s2703] sm:$0xff]
          %v2705 = vld [vmem:[%s2703 + $0x8] sm:$0xff]
          %v2706 = vadd.f32 %v2701, %v2704
          %v2707 = vadd.f32 %v2702, %v2705
          %v2708 = vsub.f32 0.0, %v2706
          %v2709 = vsub.f32 0.0, %v2707
          %v2710 = vmul.f32 %v2708, 1.442695
          %v2711 = vpow.pop %v2710
          %v2712 = vmul.f32 %v2709, 1.442695
          %v2713 = vpow.pop %v2712
          %v2714 = vadd.f32 %v2711, 1.0
          %v2715 = vadd.f32 %v2713, 1.0
          %v2716 = vrcp.pop %v2714
          %v2717 = vmul.f32 %v2714, %v2716
          %v2718 = vsub.f32 1.0, %v2717
          %v2719 = vmul.f32 %v2716, %v2718
          %v2720 = vadd.f32 %v2716, %v2719
          %vm2721 = vweird.f32 %v2714
          %vm2722 = vweird.f32 %v2716
          %vm2723 = vmor %vm2721, %vm2722
          %v2724 = vsel %vm2723, %v2716, %v2720
          %v2725 = vand.u32 2147483647, %v2714
          %vm2726 = vcmp.eq.f32.partialorder %v2725, 8.507059e+37
          %v2727 = vand.u32 %v2714, 2147483648
          %v2728 = vor.u32 1.1754944e-38, %v2727
          %v2729 = vsel %vm2726, %v2728, %v2724
          %v2730 = vmul.f32 1.0, %v2729
          %v2731 = vrcp.pop %v2715
          %v2732 = vmul.f32 %v2715, %v2731
          %v2733 = vsub.f32 1.0, %v2732
          %v2734 = vmul.f32 %v2731, %v2733
          %v2735 = vadd.f32 %v2731, %v2734
          %vm2736 = vweird.f32 %v2715
          %vm2737 = vweird.f32 %v2731
          %vm2738 = vmor %vm2736, %vm2737
          %v2739 = vsel %vm2738, %v2731, %v2735
          %v2740 = vand.u32 2147483647, %v2715
          %vm2741 = vcmp.eq.f32.partialorder %v2740, 8.507059e+37
          %v2742 = vand.u32 %v2715, 2147483648
          %v2743 = vor.u32 1.1754944e-38, %v2742
          %v2744 = vsel %vm2741, %v2743, %v2739
          %v2745 = vmul.f32 1.0, %v2744
          %2747 = vset.pattern.permute.xlu0 0
          %2748 = vperm.xlu0 %2747, %v2730
          %v2749 = vpop.permute.xlu0 %2748
          %2752 = vset.pattern.permute.xlu0 0
          %2753 = vperm.xlu0 %2752, %v2745
          %v2754 = vpop.permute.xlu0 %2753
          %v2756 = vmul.f32 %v2659, %v2749
          %v2757 = vmul.f32 %v2660, %v2749
          %v2758 = vmul.f32 %v2661, %v2749
          %v2759 = vmul.f32 %v2662, %v2754
          %v2760 = vmul.f32 %v2663, %v2754
          %v2761 = vmul.f32 %v2664, %v2754
          %v2762 = vadd.f32 %v2756, %v2759
          %v2763 = vrot.slane %v2762, 4
          %v2764 = vadd.f32 %v2762, %v2763
          %v2765 = vrot.slane %v2764, 2
          %v2766 = vadd.f32 %v2764, %v2765
          %v2767 = vrot.slane %v2766, 1
          %v2768 = vadd.f32 %v2766, %v2767
          %v2769 = vadd.f32 %v2757, %v2760
          %v2770 = vrot.slane %v2769, 4
          %v2771 = vadd.f32 %v2769, %v2770
          %v2772 = vrot.slane %v2771, 2
          %v2773 = vadd.f32 %v2771, %v2772
          %v2774 = vrot.slane %v2773, 1
          %v2775 = vadd.f32 %v2773, %v2774
          %v2776 = vsel %vm557, %v2758, 0.0
          %v2777 = vsel %vm557, %v2761, 0.0
          %v2778 = vadd.f32 %v2776, %v2777
          %v2779 = vrot.slane %v2778, 4
          %v2780 = vadd.f32 %v2778, %v2779
          %v2781 = vrot.slane %v2780, 2
          %v2782 = vadd.f32 %v2780, %v2781
          %v2783 = vrot.slane %v2782, 1
          %v2784 = vadd.f32 %v2782, %v2783
          %v2785 = vrcp.pop 16.0
          %v2786 = vmul.f32 16.0, %v2785
          %v2787 = vsub.f32 1.0, %v2786
          %v2788 = vmul.f32 %v2785, %v2787
          %v2789 = vadd.f32 %v2785, %v2788
          %vm2790 = vweird.f32 %v2785
          %v2791 = vsel %vm2790, %v2785, %v2789
          %v2792 = vmul.f32 %v2768, %v2791
          %v2793 = vmul.f32 %v2775, %v2791
          %v2794 = vmul.f32 %v2784, %v2791
          %v2798 = vrot.slane %v2793, 7
          %v2799 = vrot.slane %v2794, 6
          %vm2800 = vcmask 1040384
          %v2801 = vsel %vm2800, %v2792, %v2798
          %vm2802 = vcmask 1041408
          %v2803 = vsel %vm2802, %v2801, %v2799
          %v2805 = vlaneseq
          %vm2806 = vcmp.ge.s32.totalorder %v2805, 0
          %vm2807 = vcmp.lt.s32.totalorder %v2805, 288
          %vm2808 = vmand %vm2806, %vm2807
          %s2809 = scalar_lea.vmem [#allocation4], 2
          %2810 = vst.msk [vmem:[%s2809] ss:$2 sm:$0x7] %vm2808, %v2803
          %v2811 = vmax.f32 %v2756, %v2759
          %v2812 = vrot.slane %v2811, 4
          %v2813 = vmax.f32 %v2811, %v2812
          %v2814 = vrot.slane %v2813, 2
          %v2815 = vmax.f32 %v2813, %v2814
          %v2816 = vrot.slane %v2815, 1
          %v2817 = vmax.f32 %v2815, %v2816
          %v2818 = vmax.f32 %v2757, %v2760
          %v2819 = vrot.slane %v2818, 4
          %v2820 = vmax.f32 %v2818, %v2819
          %v2821 = vrot.slane %v2820, 2
          %v2822 = vmax.f32 %v2820, %v2821
          %v2823 = vrot.slane %v2822, 1
          %v2824 = vmax.f32 %v2822, %v2823
          %v2825 = vsel %vm557, %v2758, -inf
          %v2826 = vsel %vm557, %v2761, -inf
          %v2827 = vmax.f32 %v2825, %v2826
          %v2828 = vrot.slane %v2827, 4
          %v2829 = vmax.f32 %v2827, %v2828
          %v2830 = vrot.slane %v2829, 2
          %v2831 = vmax.f32 %v2829, %v2830
          %v2832 = vrot.slane %v2831, 1
          %v2833 = vmax.f32 %v2831, %v2832
          %v2837 = vrot.slane %v2824, 7
          %v2838 = vrot.slane %v2833, 6
          %v2839 = vsel %vm2800, %v2817, %v2837
          %v2840 = vsel %vm2802, %v2839, %v2838
          %s2842 = scalar_lea.vmem [#allocation4], 3
          %2843 = vst.msk [vmem:[%s2842] ss:$2 sm:$0x7] %vm2808, %v2840
          %s2844 = smul.u32 %s531, 18
          %s2845 = scalar_lea.vmem %s10, %s2844
          %v2846 = vld [vmem:[%s2845] sm:$0x3]
          %v2847 = vld [vmem:[%s2845 + $0x2] sm:$0x3]
          %v2848 = vld [vmem:[%s2845 + $0x4] sm:$0x3]
          %v2849 = vld [vmem:[%s2845 + $0x6] sm:$0x3]
          %v2850 = vld [vmem:[%s2845 + $0x8] sm:$0x3]
          %v2851 = vld [vmem:[%s2845 + $0xa] sm:$0x3]
          %v2852 = vld [vmem:[%s2845 + $0xc] sm:$0x3]
          %v2853 = vld [vmem:[%s2845 + $0xe] sm:$0x3]
          %v2854 = vld [vmem:[%s2845 + $0x10] sm:$0x3]
          %v2855 = vld [vmem:[#allocation4] sm:$0xff]
          %2857 = vset.pattern.permute.xlu0 0
          %2858 = vperm.xlu0 %2857, %v2846
          %v2859 = vpop.permute.xlu0 %2858
          %2862 = vst [vmem:[#allocation1] ss:$4 sm:$0xff] %v2855
          %v2863 = vld.sshfl [vmem:[#allocation1] sm:$0xff pattern:$0x73625140]
          %v2864 = vld.sshfl [vmem:[#allocation1 + $0x8] sm:$0xff pattern:$0x73625140]
          %v2865 = vld.sshfl [vmem:[#allocation1 + $0x10] sm:$0xff pattern:$0x73625140]
          %v2866 = vld.sshfl [vmem:[#allocation1 + $0x18] sm:$0xff pattern:$0x73625140]
          %2867 = vrot.lane.b32.xlu0 %v2863, 19
          %v2868 = vpop.permute.xlu0 %2867
          %2869 = vrot.lane.b32.xlu0 %v2864, 19
          %v2870 = vpop.permute.xlu0 %2869
          %2871 = vrot.lane.b32.xlu0 %v2865, 19
          %v2872 = vpop.permute.xlu0 %2871
          %2873 = vrot.lane.b32.xlu0 %v2866, 19
          %v2874 = vpop.permute.xlu0 %2873
          %v2875 = vsel %vm723, %v2868, %v2870
          %v2876 = vsel %vm723, %v2870, %v2872
          %v2877 = vsel %vm723, %v2872, %v2874
          %v2881 = vmul.f32 %v2859, %v2875
          %v2882 = vmul.f32 %v2859, %v2876
          %v2883 = vmul.f32 %v2859, %v2877
          %v2884 = vld [vmem:[#allocation4] sm:$0xff]
          %2886 = vset.pattern.permute.xlu0 0
          %2887 = vperm.xlu0 %2886, %v2847
          %v2888 = vpop.permute.xlu0 %2887
          %2891 = vst [vmem:[#allocation1] ss:$4 sm:$0xff] %v2884
          %v2892 = vld.sshfl [vmem:[#allocation1] sm:$0xff pattern:$0x73625140]
          %v2893 = vld.sshfl [vmem:[#allocation1 + $0x8] sm:$0xff pattern:$0x73625140]
          %v2894 = vld.sshfl [vmem:[#allocation1 + $0x10] sm:$0xff pattern:$0x73625140]
          %v2895 = vld.sshfl [vmem:[#allocation1 + $0x18] sm:$0xff pattern:$0x73625140]
          %2896 = vrot.lane.b32.xlu0 %v2892, 18
          %v2897 = vpop.permute.xlu0 %2896
          %2898 = vrot.lane.b32.xlu0 %v2893, 18
          %v2899 = vpop.permute.xlu0 %2898
          %2900 = vrot.lane.b32.xlu0 %v2894, 18
          %v2901 = vpop.permute.xlu0 %2900
          %2902 = vrot.lane.b32.xlu0 %v2895, 18
          %v2903 = vpop.permute.xlu0 %2902
          %v2904 = vsel %vm618, %v2897, %v2899
          %v2905 = vsel %vm618, %v2899, %v2901
          %v2906 = vsel %vm618, %v2901, %v2903
          %v2910 = vmul.f32 %v2888, %v2904
          %v2911 = vmul.f32 %v2888, %v2905
          %v2912 = vmul.f32 %v2888, %v2906
          %v2913 = vadd.f32 %v2881, %v2910
          %v2914 = vadd.f32 %v2882, %v2911
          %v2915 = vadd.f32 %v2883, %v2912
          %v2916 = vld [vmem:[#allocation4] sm:$0xff]
          %2918 = vset.pattern.permute.xlu0 0
          %2919 = vperm.xlu0 %2918, %v2848
          %v2920 = vpop.permute.xlu0 %2919
          %2923 = vst [vmem:[#allocation1] ss:$4 sm:$0xff] %v2916
          %v2924 = vld.sshfl [vmem:[#allocation1] sm:$0xff pattern:$0x73625140]
          %v2925 = vld.sshfl [vmem:[#allocation1 + $0x8] sm:$0xff pattern:$0x73625140]
          %v2926 = vld.sshfl [vmem:[#allocation1 + $0x10] sm:$0xff pattern:$0x73625140]
          %v2927 = vld.sshfl [vmem:[#allocation1 + $0x18] sm:$0xff pattern:$0x73625140]
          %2928 = vrot.lane.b32.xlu0 %v2924, 17
          %v2929 = vpop.permute.xlu0 %2928
          %2930 = vrot.lane.b32.xlu0 %v2925, 17
          %v2931 = vpop.permute.xlu0 %2930
          %2932 = vrot.lane.b32.xlu0 %v2926, 17
          %v2933 = vpop.permute.xlu0 %2932
          %2934 = vrot.lane.b32.xlu0 %v2927, 17
          %v2935 = vpop.permute.xlu0 %2934
          %v2936 = vsel %vm827, %v2929, %v2931
          %v2937 = vsel %vm827, %v2931, %v2933
          %v2938 = vsel %vm827, %v2933, %v2935
          %v2942 = vmul.f32 %v2920, %v2936
          %v2943 = vmul.f32 %v2920, %v2937
          %v2944 = vmul.f32 %v2920, %v2938
          %v2945 = vadd.f32 %v2913, %v2942
          %v2946 = vadd.f32 %v2914, %v2943
          %v2947 = vadd.f32 %v2915, %v2944
          %v2948 = vld [vmem:[#allocation4] sm:$0xff]
          %2950 = vset.pattern.permute.xlu0 0
          %2951 = vperm.xlu0 %2950, %v2849
          %v2952 = vpop.permute.xlu0 %2951
          %2955 = vst [vmem:[#allocation1] ss:$4 sm:$0xff] %v2948
          %v2956 = vld.sshfl [vmem:[#allocation1] sm:$0xff pattern:$0x73625140]
          %v2957 = vld.sshfl [vmem:[#allocation1 + $0x8] sm:$0xff pattern:$0x73625140]
          %v2958 = vld.sshfl [vmem:[#allocation1 + $0x10] sm:$0xff pattern:$0x73625140]
          %v2959 = vld.sshfl [vmem:[#allocation1 + $0x18] sm:$0xff pattern:$0x73625140]
          %2960 = vrot.lane.b32.xlu0 %v2956, 1
          %v2961 = vpop.permute.xlu0 %2960
          %2962 = vrot.lane.b32.xlu0 %v2957, 1
          %v2963 = vpop.permute.xlu0 %2962
          %2964 = vrot.lane.b32.xlu0 %v2958, 1
          %v2965 = vpop.permute.xlu0 %2964
          %2966 = vrot.lane.b32.xlu0 %v2959, 1
          %v2967 = vpop.permute.xlu0 %2966
          %v2968 = vsel %vm937, %v2961, %v2963
          %v2969 = vsel %vm937, %v2963, %v2965
          %v2970 = vsel %vm937, %v2965, %v2967
          %v2974 = vmul.f32 %v2952, %v2968
          %v2975 = vmul.f32 %v2952, %v2969
          %v2976 = vmul.f32 %v2952, %v2970
          %v2977 = vadd.f32 %v2945, %v2974
          %v2978 = vadd.f32 %v2946, %v2975
          %v2979 = vadd.f32 %v2947, %v2976
          %v2980 = vld [vmem:[#allocation4 + $0x2] sm:$0x3f]
          %2982 = vset.pattern.permute.xlu0 0
          %2983 = vperm.xlu0 %2982, %v2850
          %v2984 = vpop.permute.xlu0 %2983
          %2987 = vst [vmem:[#allocation1] ss:$4 sm:$0xff] %v2980
          %v2988 = vld.sshfl [vmem:[#allocation1] sm:$0xff pattern:$0x73625140]
          %v2989 = vld.sshfl [vmem:[#allocation1 + $0x8] sm:$0xff pattern:$0x73625140]
          %v2990 = vld.sshfl [vmem:[#allocation1 + $0x10] sm:$0xff pattern:$0x73625140]
          %v2994 = vmul.f32 %v2984, %v2988
          %v2995 = vmul.f32 %v2984, %v2989
          %v2996 = vmul.f32 %v2984, %v2990
          %v2997 = vadd.f32 %v2977, %v2994
          %v2998 = vadd.f32 %v2978, %v2995
          %v2999 = vadd.f32 %v2979, %v2996
          %v3000 = vld [vmem:[#allocation4 + $0x2] sm:$0x3f]
          %3002 = vset.pattern.permute.xlu0 0
          %3003 = vperm.xlu0 %3002, %v2851
          %v3004 = vpop.permute.xlu0 %3003
          %3007 = vst [vmem:[#allocation1] ss:$4 sm:$0xff] %v3000
          %v3008 = vld.sshfl [vmem:[#allocation1] sm:$0xff pattern:$0x73625140]
          %v3009 = vld.sshfl [vmem:[#allocation1 + $0x8] sm:$0xff pattern:$0x73625140]
          %v3010 = vld.sshfl [vmem:[#allocation1 + $0x10] sm:$0xff pattern:$0x73625140]
          %3011 = vrot.lane.b32.xlu0 %v3008, 127
          %v3012 = vpop.permute.xlu0 %3011
          %3013 = vrot.lane.b32.xlu0 %v3009, 127
          %v3014 = vpop.permute.xlu0 %3013
          %3015 = vrot.lane.b32.xlu0 %v3010, 127
          %v3016 = vpop.permute.xlu0 %3015
          %v3017 = vsel %vm1124, %v3012, %v3014
          %v3018 = vsel %vm1124, %v3014, %v3016
          %v3022 = vmul.f32 %v3004, %v3017
          %v3023 = vmul.f32 %v3004, %v3018
          %v3024 = vmul.f32 %v3004, %v3016
          %v3025 = vadd.f32 %v2997, %v3022
          %v3026 = vadd.f32 %v2998, %v3023
          %v3027 = vadd.f32 %v2999, %v3024
          %v3028 = vld [vmem:[#allocation4 + $0x2] sm:$0x3f]
          %3030 = vset.pattern.permute.xlu0 0
          %3031 = vperm.xlu0 %3030, %v2852
          %v3032 = vpop.permute.xlu0 %3031
          %3035 = vst [vmem:[#allocation1] ss:$4 sm:$0xff] %v3028
          %v3036 = vld.sshfl [vmem:[#allocation1] sm:$0xff pattern:$0x73625140]
          %v3037 = vld.sshfl [vmem:[#allocation1 + $0x8] sm:$0xff pattern:$0x73625140]
          %v3038 = vld.sshfl [vmem:[#allocation1 + $0x10] sm:$0xff pattern:$0x73625140]
          %3039 = vrot.lane.b32.xlu0 %v3036, 111
          %v3040 = vpop.permute.xlu0 %3039
          %3041 = vrot.lane.b32.xlu0 %v3037, 111
          %v3042 = vpop.permute.xlu0 %3041
          %3043 = vrot.lane.b32.xlu0 %v3038, 111
          %v3044 = vpop.permute.xlu0 %3043
          %v3045 = vsel %vm1228, %v3040, %v3042
          %v3046 = vsel %vm1228, %v3042, %v3044
          %v3050 = vmul.f32 %v3032, %v3045
          %v3051 = vmul.f32 %v3032, %v3046
          %v3052 = vmul.f32 %v3032, %v3044
          %v3053 = vadd.f32 %v3025, %v3050
          %v3054 = vadd.f32 %v3026, %v3051
          %v3055 = vadd.f32 %v3027, %v3052
          %v3056 = vld [vmem:[#allocation4 + $0x2] sm:$0x3f]
          %3058 = vset.pattern.permute.xlu0 0
          %3059 = vperm.xlu0 %3058, %v2853
          %v3060 = vpop.permute.xlu0 %3059
          %3063 = vst [vmem:[#allocation1] ss:$4 sm:$0xff] %v3056
          %v3064 = vld.sshfl [vmem:[#allocation1] sm:$0xff pattern:$0x73625140]
          %v3065 = vld.sshfl [vmem:[#allocation1 + $0x8] sm:$0xff pattern:$0x73625140]
          %v3066 = vld.sshfl [vmem:[#allocation1 + $0x10] sm:$0xff pattern:$0x73625140]
          %3067 = vrot.lane.b32.xlu0 %v3064, 110
          %v3068 = vpop.permute.xlu0 %3067
          %3069 = vrot.lane.b32.xlu0 %v3065, 110
          %v3070 = vpop.permute.xlu0 %3069
          %3071 = vrot.lane.b32.xlu0 %v3066, 110
          %v3072 = vpop.permute.xlu0 %3071
          %v3073 = vsel %vm1332, %v3068, %v3070
          %v3074 = vsel %vm1332, %v3070, %v3072
          %v3078 = vmul.f32 %v3060, %v3073
          %v3079 = vmul.f32 %v3060, %v3074
          %v3080 = vmul.f32 %v3060, %v3072
          %v3081 = vadd.f32 %v3053, %v3078
          %v3082 = vadd.f32 %v3054, %v3079
          %v3083 = vadd.f32 %v3055, %v3080
          %v3084 = vld [vmem:[#allocation4 + $0x2] sm:$0x3f]
          %3086 = vset.pattern.permute.xlu0 0
          %3087 = vperm.xlu0 %3086, %v2854
          %v3088 = vpop.permute.xlu0 %3087
          %3091 = vst [vmem:[#allocation1] ss:$4 sm:$0xff] %v3084
          %v3092 = vld.sshfl [vmem:[#allocation1] sm:$0xff pattern:$0x73625140]
          %v3093 = vld.sshfl [vmem:[#allocation1 + $0x8] sm:$0xff pattern:$0x73625140]
          %v3094 = vld.sshfl [vmem:[#allocation1 + $0x10] sm:$0xff pattern:$0x73625140]
          %3095 = vrot.lane.b32.xlu0 %v3092, 109
          %v3096 = vpop.permute.xlu0 %3095
          %3097 = vrot.lane.b32.xlu0 %v3093, 109
          %v3098 = vpop.permute.xlu0 %3097
          %3099 = vrot.lane.b32.xlu0 %v3094, 109
          %v3100 = vpop.permute.xlu0 %3099
          %v3101 = vsel %vm1436, %v3096, %v3098
          %v3102 = vsel %vm1436, %v3098, %v3100
          %v3106 = vmul.f32 %v3088, %v3101
          %v3107 = vmul.f32 %v3088, %v3102
          %v3108 = vmul.f32 %v3088, %v3100
          %v3109 = vadd.f32 %v3081, %v3106
          %v3110 = vadd.f32 %v3082, %v3107
          %v3111 = vadd.f32 %v3083, %v3108
          %v3112 = vsel %vm2802, %v3109, 0.0
          %v3113 = vrot.slane %v3112, 4
          %v3114 = vadd.f32 %v3112, %v3113
          %v3115 = vrot.slane %v3114, 2
          %v3116 = vadd.f32 %v3114, %v3115
          %v3117 = vrot.slane %v3116, 1
          %v3118 = vadd.f32 %v3116, %v3117
          %v3119 = vsel %vm2802, %v3110, 0.0
          %v3120 = vrot.slane %v3119, 4
          %v3121 = vadd.f32 %v3119, %v3120
          %v3122 = vrot.slane %v3121, 2
          %v3123 = vadd.f32 %v3121, %v3122
          %v3124 = vrot.slane %v3123, 1
          %v3125 = vadd.f32 %v3123, %v3124
          %vm3126 = vcmask 254976
          %v3127 = vsel %vm3126, %v3111, 0.0
          %v3128 = vrot.slane %v3127, 4
          %v3129 = vadd.f32 %v3127, %v3128
          %v3130 = vrot.slane %v3129, 2
          %v3131 = vadd.f32 %v3129, %v3130
          %v3132 = vrot.slane %v3131, 1
          %v3133 = vadd.f32 %v3131, %v3132
          %v3134 = vsub.f32 0.0, %v3118
          %v3135 = vsub.f32 0.0, %v3125
          %v3136 = vsub.f32 0.0, %v3133
          %v3137 = vmul.f32 %v3134, 1.442695
          %v3138 = vpow.pop %v3137
          %v3139 = vmul.f32 %v3135, 1.442695
          %v3140 = vpow.pop %v3139
          %v3141 = vmul.f32 %v3136, 1.442695
          %v3142 = vpow.pop %v3141
          %v3143 = vadd.f32 %v3138, 1.0
          %v3144 = vadd.f32 %v3140, 1.0
          %v3145 = vadd.f32 %v3142, 1.0
          %v3146 = vrcp.pop %v3143
          %v3147 = vmul.f32 %v3143, %v3146
          %v3148 = vsub.f32 1.0, %v3147
          %v3149 = vmul.f32 %v3146, %v3148
          %v3150 = vadd.f32 %v3146, %v3149
          %vm3151 = vweird.f32 %v3143
          %vm3152 = vweird.f32 %v3146
          %vm3153 = vmor %vm3151, %vm3152
          %v3154 = vsel %vm3153, %v3146, %v3150
          %v3155 = vand.u32 2147483647, %v3143
          %vm3156 = vcmp.eq.f32.partialorder %v3155, 8.507059e+37
          %v3157 = vand.u32 %v3143, 2147483648
          %v3158 = vor.u32 1.1754944e-38, %v3157
          %v3159 = vsel %vm3156, %v3158, %v3154
          %v3160 = vmul.f32 1.0, %v3159
          %v3161 = vrcp.pop %v3144
          %v3162 = vmul.f32 %v3144, %v3161
          %v3163 = vsub.f32 1.0, %v3162
          %v3164 = vmul.f32 %v3161, %v3163
          %v3165 = vadd.f32 %v3161, %v3164
          %vm3166 = vweird.f32 %v3144
          %vm3167 = vweird.f32 %v3161
          %vm3168 = vmor %vm3166, %vm3167
          %v3169 = vsel %vm3168, %v3161, %v3165
          %v3170 = vand.u32 2147483647, %v3144
          %vm3171 = vcmp.eq.f32.partialorder %v3170, 8.507059e+37
          %v3172 = vand.u32 %v3144, 2147483648
          %v3173 = vor.u32 1.1754944e-38, %v3172
          %v3174 = vsel %vm3171, %v3173, %v3169
          %v3175 = vmul.f32 1.0, %v3174
          %v3176 = vrcp.pop %v3145
          %v3177 = vmul.f32 %v3145, %v3176
          %v3178 = vsub.f32 1.0, %v3177
          %v3179 = vmul.f32 %v3176, %v3178
          %v3180 = vadd.f32 %v3176, %v3179
          %vm3181 = vweird.f32 %v3145
          %vm3182 = vweird.f32 %v3176
          %vm3183 = vmor %vm3181, %vm3182
          %v3184 = vsel %vm3183, %v3176, %v3180
          %v3185 = vand.u32 2147483647, %v3145
          %vm3186 = vcmp.eq.f32.partialorder %v3185, 8.507059e+37
          %v3187 = vand.u32 %v3145, 2147483648
          %v3188 = vor.u32 1.1754944e-38, %v3187
          %v3189 = vsel %vm3186, %v3188, %v3184
          %v3190 = vmul.f32 1.0, %v3189
          %v3191 = vmul.f32 %v2756, %v3160
          %v3192 = vmul.f32 %v2757, %v3175
          %v3193 = vmul.f32 %v2758, %v3190
          %v3194 = vmul.f32 %v2759, %v3160
          %v3195 = vmul.f32 %v2760, %v3175
          %v3196 = vmul.f32 %v2761, %v3190
          %v3197 = vadd.f32 %v3191, %v536
          %v3198 = vadd.f32 %v3192, %v537
          %v3199 = vadd.f32 %v3193, %v538
          %v3200 = vadd.f32 %v3194, %v539
          %v3201 = vadd.f32 %v3195, %v540
          %v3202 = vadd.f32 %v3196, %v541
        $region93: #{tpu_custom_call.1} parent=71 // loop_footer
          %s535 = sadd.s32 1, %s531
        $region94: #{tpu_custom_call.1} parent=71 // loop_footer_branch
          %530 = sbr.rel target = $region90
        $region95: #{tpu_custom_call.1} parent=71 // loop_exit
          _
        %v3204 = vperm.slane %v523, 0
        %v3205 = vperm.slane %v523, 1
        %v3206 = vperm.slane %v523, 2
        %v3210 = vmul.f32 %v536, %v3204
        %v3211 = vmul.f32 %v537, %v3205
        %v3212 = vmul.f32 %v538, %v3206
        %v3213 = vmul.f32 %v539, %v3204
        %v3214 = vmul.f32 %v540, %v3205
        %v3215 = vmul.f32 %v541, %v3206
        %3216 = vst [vmem:[#allocation2 + $0x8] sm:$0xff] %v3210
        %3217 = vst [vmem:[#allocation2 + $0x10] sm:$0xff] %v3211
        %vm3218 = vcmask 261120
        %3219 = vst.msk [vmem:[#allocation2 + $0x18] sm:$0xff] %vm3218, %v3212
        %3220 = vst [vmem:[#allocation2 + $0x28] sm:$0xff] %v3213
        %3221 = vst [vmem:[#allocation2 + $0x30] sm:$0xff] %v3214
        %3222 = vst.msk [vmem:[#allocation2 + $0x38] sm:$0xff] %vm3218, %v3215
        %v3223 = vld [vmem:[#allocation11] sm:$0xff]
        %v3224 = vld [vmem:[#allocation11 + $0x8] sm:$0xff]
        %v3225 = vld [vmem:[#allocation11 + $0x10] sm:$0xff]
        %v3226 = vld [vmem:[#allocation11 + $0x18] sm:$0xff]
        %v3227 = vld [vmem:[#allocation11 + $0x20] sm:$0xff]
        %v3228 = vld [vmem:[#allocation11 + $0x28] sm:$0xff]
        %v3229 = vld [vmem:[#allocation11 + $0x30] sm:$0xff]
        %v3230 = vld [vmem:[#allocation11 + $0x38] sm:$0xff]
        %v3231 = vld [vmem:[#allocation11 + $0x40] sm:$0xff]
        %v3232 = vld [vmem:[#allocation11 + $0x48] sm:$0xff]
        %v3233 = vld [vmem:[#allocation11 + $0x50] sm:$0xff]
        %v3234 = vld [vmem:[#allocation11 + $0x58] sm:$0xff]
        %v3235 = vld [vmem:[#allocation11 + $0x60] sm:$0xff]
        %v3236 = vld [vmem:[#allocation11 + $0x68] sm:$0xff]
        %v3237 = vld [vmem:[#allocation11 + $0x70] sm:$0xff]
        %v3238 = vld [vmem:[#allocation11 + $0x78] sm:$0xff]
        %v3239 = vld [vmem:[#allocation11 + $0x80] sm:$0xff]
        %v3240 = vld [vmem:[#allocation11 + $0x88] sm:$0xff]
        %v3241 = vld [vmem:[%s12] sm:$0xff]
        %v3242 = vld [vmem:[%s12 + $0x8] sm:$0xff]
        %v3243 = vld [vmem:[#allocation2] sm:$0xff]
        %v3244 = vld [vmem:[#allocation2 + $0x8] sm:$0xff]
        %v3245 = vld [vmem:[#allocation2 + $0x10] sm:$0xff]
        %v3246 = vld [vmem:[#allocation2 + $0x18] sm:$0xff]
        %v3247 = vld [vmem:[#allocation2 + $0x20] sm:$0xff]
        %v3248 = vld [vmem:[#allocation2 + $0x28] sm:$0xff]
        %v3249 = vld [vmem:[#allocation2 + $0x30] sm:$0xff]
        %v3250 = vld [vmem:[#allocation2 + $0x38] sm:$0xff]
        %3259 = vrot.lane.b32.xlu0 %v3243, 18
        %v3260 = vpop.permute.xlu0 %3259
        %3261 = vrot.lane.b32.xlu0 %v3244, 18
        %v3262 = vpop.permute.xlu0 %3261
        %3263 = vrot.lane.b32.xlu0 %v3245, 18
        %v3264 = vpop.permute.xlu0 %3263
        %3265 = vrot.lane.b32.xlu0 %v3246, 18
        %v3266 = vpop.permute.xlu0 %3265
        %3267 = vrot.lane.b32.xlu0 %v3247, 18
        %v3268 = vpop.permute.xlu0 %3267
        %3269 = vrot.lane.b32.xlu0 %v3248, 18
        %v3270 = vpop.permute.xlu0 %3269
        %3271 = vrot.lane.b32.xlu0 %v3249, 18
        %v3272 = vpop.permute.xlu0 %3271
        %3273 = vrot.lane.b32.xlu0 %v3250, 18
        %v3274 = vpop.permute.xlu0 %3273
        %vm3275 = vcmask 146432
        %v3276 = vsel %vm3275, %v3260, %v3262
        %v3277 = vsel %vm3275, %v3262, %v3264
        %v3278 = vsel %vm3275, %v3264, %v3266
        %v3279 = vsel %vm3275, %v3268, %v3270
        %v3280 = vsel %vm3275, %v3270, %v3272
        %v3281 = vsel %vm3275, %v3272, %v3274
        %vm3288 = vcmask 130048
        %v3290 = vsel %vm3288, %v3225, 0
        %v3293 = vsel %vm3288, %v3226, 0
        %3295 = vmatpush.msra.mxu0 0.0
        %3296 = vmatpush.msra.mxu0 0.0
        %3297 = vmatpush.msra.mxu0 0.0
        %3298 = vmatpush.msra.mxu0 0.0
        %3299 = vmatpush.msra.mxu0 0.0
        %3300 = vmatpush.msra.mxu0 0.0
        %3301 = vmatpush.msra.mxu0 0.0
        %3302 = vmatpush.msra.mxu0 0.0
        %3303 = vmatpush.msra.mxu0 0.0
        %3304 = vmatpush.msra.mxu0 0.0
        %3305 = vmatpush.msra.mxu0 0.0
        %3306 = vmatpush.msra.mxu0 0.0
        %3307 = vmatpush.msra.mxu0 0.0
        %3308 = vmatpush.msra.mxu0 0.0
        %3309 = vmatpush.msra.mxu0 %v3279
        %3310 = vmatpush.msra.mxu0 %v3276
        %3311 = vmatmul.f32.gmra.mxu0 %v3290
        %v3312 = vpop.f32.mrf.mxu0
        %v3313 = vadd.f32 0.0, %v3312
        %3314 = vmatmul.f32.gmra.mxu0 %v3293
        %v3315 = vpop.f32.mrf.mxu0
        %v3316 = vadd.f32 0.0, %v3315
        %3317 = vdwg.mxu0
        %3318 = vmatpush.msra.mxu0 0.0
        %3319 = vmatpush.msra.mxu0 0.0
        %3320 = vmatpush.msra.mxu0 0.0
        %3321 = vmatpush.msra.mxu0 0.0
        %3322 = vmatpush.msra.mxu0 0.0
        %3323 = vmatpush.msra.mxu0 0.0
        %3324 = vmatpush.msra.mxu0 0.0
        %3325 = vmatpush.msra.mxu0 0.0
        %3326 = vmatpush.msra.mxu0 0.0
        %3327 = vmatpush.msra.mxu0 0.0
        %3328 = vmatpush.msra.mxu0 0.0
        %3329 = vmatpush.msra.mxu0 0.0
        %3330 = vmatpush.msra.mxu0 0.0
        %3331 = vmatpush.msra.mxu0 0.0
        %3332 = vmatpush.msra.mxu0 %v3280
        %3333 = vmatpush.msra.mxu0 %v3277
        %3334 = vmatmul.f32.gmra.mxu0 %v3290
        %v3335 = vpop.f32.mrf.mxu0
        %v3336 = vadd.f32 0.0, %v3335
        %3337 = vmatmul.f32.gmra.mxu0 %v3293
        %v3338 = vpop.f32.mrf.mxu0
        %v3339 = vadd.f32 0.0, %v3338
        %3340 = vdwg.mxu0
        %3341 = vmatpush.msra.mxu0 0.0
        %3342 = vmatpush.msra.mxu0 0.0
        %3343 = vmatpush.msra.mxu0 0.0
        %3344 = vmatpush.msra.mxu0 0.0
        %3345 = vmatpush.msra.mxu0 0.0
        %3346 = vmatpush.msra.mxu0 0.0
        %3347 = vmatpush.msra.mxu0 0.0
        %3348 = vmatpush.msra.mxu0 0.0
        %3349 = vmatpush.msra.mxu0 0.0
        %3350 = vmatpush.msra.mxu0 0.0
        %3351 = vmatpush.msra.mxu0 0.0
        %3352 = vmatpush.msra.mxu0 0.0
        %3353 = vmatpush.msra.mxu0 0.0
        %3354 = vmatpush.msra.mxu0 0.0
        %3355 = vmatpush.msra.mxu0 %v3281
        %3356 = vmatpush.msra.mxu0 %v3278
        %3357 = vmatmul.f32.gmra.mxu0 %v3290
        %v3358 = vpop.f32.mrf.mxu0
        %v3359 = vadd.f32 0.0, %v3358
        %3360 = vmatmul.f32.gmra.mxu0 %v3293
        %v3361 = vpop.f32.mrf.mxu0
        %v3362 = vadd.f32 0.0, %v3361
        %3363 = vdwg.mxu0
        %3364 = vrot.lane.b32.xlu0 %v3243, 19
        %v3365 = vpop.permute.xlu0 %3364
        %3366 = vrot.lane.b32.xlu0 %v3244, 19
        %v3367 = vpop.permute.xlu0 %3366
        %3368 = vrot.lane.b32.xlu0 %v3245, 19
        %v3369 = vpop.permute.xlu0 %3368
        %3370 = vrot.lane.b32.xlu0 %v3246, 19
        %v3371 = vpop.permute.xlu0 %3370
        %3372 = vrot.lane.b32.xlu0 %v3247, 19
        %v3373 = vpop.permute.xlu0 %3372
        %3374 = vrot.lane.b32.xlu0 %v3248, 19
        %v3375 = vpop.permute.xlu0 %3374
        %3376 = vrot.lane.b32.xlu0 %v3249, 19
        %v3377 = vpop.permute.xlu0 %3376
        %3378 = vrot.lane.b32.xlu0 %v3250, 19
        %v3379 = vpop.permute.xlu0 %3378
        %vm3380 = vcmask 154624
        %v3381 = vsel %vm3380, %v3365, %v3367
        %v3382 = vsel %vm3380, %v3367, %v3369
        %v3383 = vsel %vm3380, %v3369, %v3371
        %v3384 = vsel %vm3380, %v3373, %v3375
        %v3385 = vsel %vm3380, %v3375, %v3377
        %v3386 = vsel %vm3380, %v3377, %v3379
        %v3394 = vsel %vm3288, %v3223, 0
        %v3397 = vsel %vm3288, %v3224, 0
        %3399 = vmatpush.msra.mxu0 0.0
        %3400 = vmatpush.msra.mxu0 0.0
        %3401 = vmatpush.msra.mxu0 0.0
        %3402 = vmatpush.msra.mxu0 0.0
        %3403 = vmatpush.msra.mxu0 0.0
        %3404 = vmatpush.msra.mxu0 0.0
        %3405 = vmatpush.msra.mxu0 0.0
        %3406 = vmatpush.msra.mxu0 0.0
        %3407 = vmatpush.msra.mxu0 0.0
        %3408 = vmatpush.msra.mxu0 0.0
        %3409 = vmatpush.msra.mxu0 0.0
        %3410 = vmatpush.msra.mxu0 0.0
        %3411 = vmatpush.msra.mxu0 0.0
        %3412 = vmatpush.msra.mxu0 0.0
        %3413 = vmatpush.msra.mxu0 %v3384
        %3414 = vmatpush.msra.mxu0 %v3381
        %3415 = vmatmul.f32.gmra.mxu0 %v3394
        %v3416 = vpop.f32.mrf.mxu0
        %v3417 = vadd.f32 %v3313, %v3416
        %3418 = vmatmul.f32.gmra.mxu0 %v3397
        %v3419 = vpop.f32.mrf.mxu0
        %v3420 = vadd.f32 %v3316, %v3419
        %3421 = vdwg.mxu0
        %3422 = vmatpush.msra.mxu0 0.0
        %3423 = vmatpush.msra.mxu0 0.0
        %3424 = vmatpush.msra.mxu0 0.0
        %3425 = vmatpush.msra.mxu0 0.0
        %3426 = vmatpush.msra.mxu0 0.0
        %3427 = vmatpush.msra.mxu0 0.0
        %3428 = vmatpush.msra.mxu0 0.0
        %3429 = vmatpush.msra.mxu0 0.0
        %3430 = vmatpush.msra.mxu0 0.0
        %3431 = vmatpush.msra.mxu0 0.0
        %3432 = vmatpush.msra.mxu0 0.0
        %3433 = vmatpush.msra.mxu0 0.0
        %3434 = vmatpush.msra.mxu0 0.0
        %3435 = vmatpush.msra.mxu0 0.0
        %3436 = vmatpush.msra.mxu0 %v3385
        %3437 = vmatpush.msra.mxu0 %v3382
        %3438 = vmatmul.f32.gmra.mxu0 %v3394
        %v3439 = vpop.f32.mrf.mxu0
        %v3440 = vadd.f32 %v3336, %v3439
        %3441 = vmatmul.f32.gmra.mxu0 %v3397
        %v3442 = vpop.f32.mrf.mxu0
        %v3443 = vadd.f32 %v3339, %v3442
        %3444 = vdwg.mxu0
        %3445 = vmatpush.msra.mxu0 0.0
        %3446 = vmatpush.msra.mxu0 0.0
        %3447 = vmatpush.msra.mxu0 0.0
        %3448 = vmatpush.msra.mxu0 0.0
        %3449 = vmatpush.msra.mxu0 0.0
        %3450 = vmatpush.msra.mxu0 0.0
        %3451 = vmatpush.msra.mxu0 0.0
        %3452 = vmatpush.msra.mxu0 0.0
        %3453 = vmatpush.msra.mxu0 0.0
        %3454 = vmatpush.msra.mxu0 0.0
        %3455 = vmatpush.msra.mxu0 0.0
        %3456 = vmatpush.msra.mxu0 0.0
        %3457 = vmatpush.msra.mxu0 0.0
        %3458 = vmatpush.msra.mxu0 0.0
        %3459 = vmatpush.msra.mxu0 %v3386
        %3460 = vmatpush.msra.mxu0 %v3383
        %3461 = vmatmul.f32.gmra.mxu0 %v3394
        %v3462 = vpop.f32.mrf.mxu0
        %v3463 = vadd.f32 %v3359, %v3462
        %3464 = vmatmul.f32.gmra.mxu0 %v3397
        %v3465 = vpop.f32.mrf.mxu0
        %v3466 = vadd.f32 %v3362, %v3465
        %3467 = vdwg.mxu0
        %3468 = vrot.lane.b32.xlu0 %v3243, 17
        %v3469 = vpop.permute.xlu0 %3468
        %3470 = vrot.lane.b32.xlu0 %v3244, 17
        %v3471 = vpop.permute.xlu0 %3470
        %3472 = vrot.lane.b32.xlu0 %v3245, 17
        %v3473 = vpop.permute.xlu0 %3472
        %3474 = vrot.lane.b32.xlu0 %v3246, 17
        %v3475 = vpop.permute.xlu0 %3474
        %3476 = vrot.lane.b32.xlu0 %v3247, 17
        %v3477 = vpop.permute.xlu0 %3476
        %3478 = vrot.lane.b32.xlu0 %v3248, 17
        %v3479 = vpop.permute.xlu0 %3478
        %3480 = vrot.lane.b32.xlu0 %v3249, 17
        %v3481 = vpop.permute.xlu0 %3480
        %3482 = vrot.lane.b32.xlu0 %v3250, 17
        %v3483 = vpop.permute.xlu0 %3482
        %vm3484 = vcmask 138240
        %v3485 = vsel %vm3484, %v3469, %v3471
        %v3486 = vsel %vm3484, %v3471, %v3473
        %v3487 = vsel %vm3484, %v3473, %v3475
        %v3488 = vsel %vm3484, %v3477, %v3479
        %v3489 = vsel %vm3484, %v3479, %v3481
        %v3490 = vsel %vm3484, %v3481, %v3483
        %v3498 = vsel %vm3288, %v3227, 0
        %v3501 = vsel %vm3288, %v3228, 0
        %3503 = vmatpush.msra.mxu0 0.0
        %3504 = vmatpush.msra.mxu0 0.0
        %3505 = vmatpush.msra.mxu0 0.0
        %3506 = vmatpush.msra.mxu0 0.0
        %3507 = vmatpush.msra.mxu0 0.0
        %3508 = vmatpush.msra.mxu0 0.0
        %3509 = vmatpush.msra.mxu0 0.0
        %3510 = vmatpush.msra.mxu0 0.0
        %3511 = vmatpush.msra.mxu0 0.0
        %3512 = vmatpush.msra.mxu0 0.0
        %3513 = vmatpush.msra.mxu0 0.0
        %3514 = vmatpush.msra.mxu0 0.0
        %3515 = vmatpush.msra.mxu0 0.0
        %3516 = vmatpush.msra.mxu0 0.0
        %3517 = vmatpush.msra.mxu0 %v3488
        %3518 = vmatpush.msra.mxu0 %v3485
        %3519 = vmatmul.f32.gmra.mxu0 %v3498
        %v3520 = vpop.f32.mrf.mxu0
        %v3521 = vadd.f32 0.0, %v3520
        %3522 = vmatmul.f32.gmra.mxu0 %v3501
        %v3523 = vpop.f32.mrf.mxu0
        %v3524 = vadd.f32 0.0, %v3523
        %3525 = vdwg.mxu0
        %3526 = vmatpush.msra.mxu0 0.0
        %3527 = vmatpush.msra.mxu0 0.0
        %3528 = vmatpush.msra.mxu0 0.0
        %3529 = vmatpush.msra.mxu0 0.0
        %3530 = vmatpush.msra.mxu0 0.0
        %3531 = vmatpush.msra.mxu0 0.0
        %3532 = vmatpush.msra.mxu0 0.0
        %3533 = vmatpush.msra.mxu0 0.0
        %3534 = vmatpush.msra.mxu0 0.0
        %3535 = vmatpush.msra.mxu0 0.0
        %3536 = vmatpush.msra.mxu0 0.0
        %3537 = vmatpush.msra.mxu0 0.0
        %3538 = vmatpush.msra.mxu0 0.0
        %3539 = vmatpush.msra.mxu0 0.0
        %3540 = vmatpush.msra.mxu0 %v3489
        %3541 = vmatpush.msra.mxu0 %v3486
        %3542 = vmatmul.f32.gmra.mxu0 %v3498
        %v3543 = vpop.f32.mrf.mxu0
        %v3544 = vadd.f32 0.0, %v3543
        %3545 = vmatmul.f32.gmra.mxu0 %v3501
        %v3546 = vpop.f32.mrf.mxu0
        %v3547 = vadd.f32 0.0, %v3546
        %3548 = vdwg.mxu0
        %3549 = vmatpush.msra.mxu0 0.0
        %3550 = vmatpush.msra.mxu0 0.0
        %3551 = vmatpush.msra.mxu0 0.0
        %3552 = vmatpush.msra.mxu0 0.0
        %3553 = vmatpush.msra.mxu0 0.0
        %3554 = vmatpush.msra.mxu0 0.0
        %3555 = vmatpush.msra.mxu0 0.0
        %3556 = vmatpush.msra.mxu0 0.0
        %3557 = vmatpush.msra.mxu0 0.0
        %3558 = vmatpush.msra.mxu0 0.0
        %3559 = vmatpush.msra.mxu0 0.0
        %3560 = vmatpush.msra.mxu0 0.0
        %3561 = vmatpush.msra.mxu0 0.0
        %3562 = vmatpush.msra.mxu0 0.0
        %3563 = vmatpush.msra.mxu0 %v3490
        %3564 = vmatpush.msra.mxu0 %v3487
        %3565 = vmatmul.f32.gmra.mxu0 %v3498
        %v3566 = vpop.f32.mrf.mxu0
        %v3567 = vadd.f32 0.0, %v3566
        %3568 = vmatmul.f32.gmra.mxu0 %v3501
        %v3569 = vpop.f32.mrf.mxu0
        %v3570 = vadd.f32 0.0, %v3569
        %3571 = vdwg.mxu0
        %v3572 = vadd.f32 %v3417, %v3521
        %v3573 = vadd.f32 %v3440, %v3544
        %v3574 = vadd.f32 %v3463, %v3567
        %v3575 = vadd.f32 %v3420, %v3524
        %v3576 = vadd.f32 %v3443, %v3547
        %v3577 = vadd.f32 %v3466, %v3570
        %3578 = vrot.lane.b32.xlu0 %v3243, 1
        %v3579 = vpop.permute.xlu0 %3578
        %3580 = vrot.lane.b32.xlu0 %v3244, 1
        %v3581 = vpop.permute.xlu0 %3580
        %3582 = vrot.lane.b32.xlu0 %v3245, 1
        %v3583 = vpop.permute.xlu0 %3582
        %3584 = vrot.lane.b32.xlu0 %v3246, 1
        %v3585 = vpop.permute.xlu0 %3584
        %3586 = vrot.lane.b32.xlu0 %v3247, 1
        %v3587 = vpop.permute.xlu0 %3586
        %3588 = vrot.lane.b32.xlu0 %v3248, 1
        %v3589 = vpop.permute.xlu0 %3588
        %3590 = vrot.lane.b32.xlu0 %v3249, 1
        %v3591 = vpop.permute.xlu0 %3590
        %3592 = vrot.lane.b32.xlu0 %v3250, 1
        %v3593 = vpop.permute.xlu0 %3592
        %vm3594 = vcmask 7168
        %v3595 = vsel %vm3594, %v3579, %v3581
        %v3596 = vsel %vm3594, %v3581, %v3583
        %v3597 = vsel %vm3594, %v3583, %v3585
        %v3598 = vsel %vm3594, %v3587, %v3589
        %v3599 = vsel %vm3594, %v3589, %v3591
        %v3600 = vsel %vm3594, %v3591, %v3593
        %v3608 = vsel %vm3288, %v3229, 0
        %v3611 = vsel %vm3288, %v3230, 0
        %3613 = vmatpush.msra.mxu0 0.0
        %3614 = vmatpush.msra.mxu0 0.0
        %3615 = vmatpush.msra.mxu0 0.0
        %3616 = vmatpush.msra.mxu0 0.0
        %3617 = vmatpush.msra.mxu0 0.0
        %3618 = vmatpush.msra.mxu0 0.0
        %3619 = vmatpush.msra.mxu0 0.0
        %3620 = vmatpush.msra.mxu0 0.0
        %3621 = vmatpush.msra.mxu0 0.0
        %3622 = vmatpush.msra.mxu0 0.0
        %3623 = vmatpush.msra.mxu0 0.0
        %3624 = vmatpush.msra.mxu0 0.0
        %3625 = vmatpush.msra.mxu0 0.0
        %3626 = vmatpush.msra.mxu0 0.0
        %3627 = vmatpush.msra.mxu0 %v3598
        %3628 = vmatpush.msra.mxu0 %v3595
        %3629 = vmatmul.f32.gmra.mxu0 %v3608
        %v3630 = vpop.f32.mrf.mxu0
        %v3631 = vadd.f32 0.0, %v3630
        %3632 = vmatmul.f32.gmra.mxu0 %v3611
        %v3633 = vpop.f32.mrf.mxu0
        %v3634 = vadd.f32 0.0, %v3633
        %3635 = vdwg.mxu0
        %3636 = vmatpush.msra.mxu0 0.0
        %3637 = vmatpush.msra.mxu0 0.0
        %3638 = vmatpush.msra.mxu0 0.0
        %3639 = vmatpush.msra.mxu0 0.0
        %3640 = vmatpush.msra.mxu0 0.0
        %3641 = vmatpush.msra.mxu0 0.0
        %3642 = vmatpush.msra.mxu0 0.0
        %3643 = vmatpush.msra.mxu0 0.0
        %3644 = vmatpush.msra.mxu0 0.0
        %3645 = vmatpush.msra.mxu0 0.0
        %3646 = vmatpush.msra.mxu0 0.0
        %3647 = vmatpush.msra.mxu0 0.0
        %3648 = vmatpush.msra.mxu0 0.0
        %3649 = vmatpush.msra.mxu0 0.0
        %3650 = vmatpush.msra.mxu0 %v3599
        %3651 = vmatpush.msra.mxu0 %v3596
        %3652 = vmatmul.f32.gmra.mxu0 %v3608
        %v3653 = vpop.f32.mrf.mxu0
        %v3654 = vadd.f32 0.0, %v3653
        %3655 = vmatmul.f32.gmra.mxu0 %v3611
        %v3656 = vpop.f32.mrf.mxu0
        %v3657 = vadd.f32 0.0, %v3656
        %3658 = vdwg.mxu0
        %3659 = vmatpush.msra.mxu0 0.0
        %3660 = vmatpush.msra.mxu0 0.0
        %3661 = vmatpush.msra.mxu0 0.0
        %3662 = vmatpush.msra.mxu0 0.0
        %3663 = vmatpush.msra.mxu0 0.0
        %3664 = vmatpush.msra.mxu0 0.0
        %3665 = vmatpush.msra.mxu0 0.0
        %3666 = vmatpush.msra.mxu0 0.0
        %3667 = vmatpush.msra.mxu0 0.0
        %3668 = vmatpush.msra.mxu0 0.0
        %3669 = vmatpush.msra.mxu0 0.0
        %3670 = vmatpush.msra.mxu0 0.0
        %3671 = vmatpush.msra.mxu0 0.0
        %3672 = vmatpush.msra.mxu0 0.0
        %3673 = vmatpush.msra.mxu0 %v3600
        %3674 = vmatpush.msra.mxu0 %v3597
        %3675 = vmatmul.f32.gmra.mxu0 %v3608
        %v3676 = vpop.f32.mrf.mxu0
        %v3677 = vadd.f32 0.0, %v3676
        %3678 = vmatmul.f32.gmra.mxu0 %v3611
        %v3679 = vpop.f32.mrf.mxu0
        %v3680 = vadd.f32 0.0, %v3679
        %3681 = vdwg.mxu0
        %v3682 = vadd.f32 %v3572, %v3631
        %v3683 = vadd.f32 %v3573, %v3654
        %v3684 = vadd.f32 %v3574, %v3677
        %v3685 = vadd.f32 %v3575, %v3634
        %v3686 = vadd.f32 %v3576, %v3657
        %v3687 = vadd.f32 %v3577, %v3680
        %v3689 = vsel %vm3288, %v3231, 0
        %v3692 = vsel %vm3288, %v3232, 0
        %3694 = vmatpush.msra.mxu0 0.0
        %3695 = vmatpush.msra.mxu0 0.0
        %3696 = vmatpush.msra.mxu0 0.0
        %3697 = vmatpush.msra.mxu0 0.0
        %3698 = vmatpush.msra.mxu0 0.0
        %3699 = vmatpush.msra.mxu0 0.0
        %3700 = vmatpush.msra.mxu0 0.0
        %3701 = vmatpush.msra.mxu0 0.0
        %3702 = vmatpush.msra.mxu0 0.0
        %3703 = vmatpush.msra.mxu0 0.0
        %3704 = vmatpush.msra.mxu0 0.0
        %3705 = vmatpush.msra.mxu0 0.0
        %3706 = vmatpush.msra.mxu0 0.0
        %3707 = vmatpush.msra.mxu0 0.0
        %3708 = vmatpush.msra.mxu0 %v3248
        %3709 = vmatpush.msra.mxu0 %v3244
        %3710 = vmatmul.f32.gmra.mxu0 %v3689
        %v3711 = vpop.f32.mrf.mxu0
        %v3712 = vadd.f32 0.0, %v3711
        %3713 = vmatmul.f32.gmra.mxu0 %v3692
        %v3714 = vpop.f32.mrf.mxu0
        %v3715 = vadd.f32 0.0, %v3714
        %3716 = vdwg.mxu0
        %3717 = vmatpush.msra.mxu0 0.0
        %3718 = vmatpush.msra.mxu0 0.0
        %3719 = vmatpush.msra.mxu0 0.0
        %3720 = vmatpush.msra.mxu0 0.0
        %3721 = vmatpush.msra.mxu0 0.0
        %3722 = vmatpush.msra.mxu0 0.0
        %3723 = vmatpush.msra.mxu0 0.0
        %3724 = vmatpush.msra.mxu0 0.0
        %3725 = vmatpush.msra.mxu0 0.0
        %3726 = vmatpush.msra.mxu0 0.0
        %3727 = vmatpush.msra.mxu0 0.0
        %3728 = vmatpush.msra.mxu0 0.0
        %3729 = vmatpush.msra.mxu0 0.0
        %3730 = vmatpush.msra.mxu0 0.0
        %3731 = vmatpush.msra.mxu0 %v3249
        %3732 = vmatpush.msra.mxu0 %v3245
        %3733 = vmatmul.f32.gmra.mxu0 %v3689
        %v3734 = vpop.f32.mrf.mxu0
        %v3735 = vadd.f32 0.0, %v3734
        %3736 = vmatmul.f32.gmra.mxu0 %v3692
        %v3737 = vpop.f32.mrf.mxu0
        %v3738 = vadd.f32 0.0, %v3737
        %3739 = vdwg.mxu0
        %3740 = vmatpush.msra.mxu0 0.0
        %3741 = vmatpush.msra.mxu0 0.0
        %3742 = vmatpush.msra.mxu0 0.0
        %3743 = vmatpush.msra.mxu0 0.0
        %3744 = vmatpush.msra.mxu0 0.0
        %3745 = vmatpush.msra.mxu0 0.0
        %3746 = vmatpush.msra.mxu0 0.0
        %3747 = vmatpush.msra.mxu0 0.0
        %3748 = vmatpush.msra.mxu0 0.0
        %3749 = vmatpush.msra.mxu0 0.0
        %3750 = vmatpush.msra.mxu0 0.0
        %3751 = vmatpush.msra.mxu0 0.0
        %3752 = vmatpush.msra.mxu0 0.0
        %3753 = vmatpush.msra.mxu0 0.0
        %3754 = vmatpush.msra.mxu0 %v3250
        %3755 = vmatpush.msra.mxu0 %v3246
        %3756 = vmatmul.f32.gmra.mxu0 %v3689
        %v3757 = vpop.f32.mrf.mxu0
        %v3758 = vadd.f32 0.0, %v3757
        %3759 = vmatmul.f32.gmra.mxu0 %v3692
        %v3760 = vpop.f32.mrf.mxu0
        %v3761 = vadd.f32 0.0, %v3760
        %3762 = vdwg.mxu0
        %v3763 = vadd.f32 %v3682, %v3712
        %v3764 = vadd.f32 %v3683, %v3735
        %v3765 = vadd.f32 %v3684, %v3758
        %v3766 = vadd.f32 %v3685, %v3715
        %v3767 = vadd.f32 %v3686, %v3738
        %v3768 = vadd.f32 %v3687, %v3761
        %3769 = vrot.lane.b32.xlu0 %v3244, 127
        %v3770 = vpop.permute.xlu0 %3769
        %3771 = vrot.lane.b32.xlu0 %v3245, 127
        %v3772 = vpop.permute.xlu0 %3771
        %3773 = vrot.lane.b32.xlu0 %v3246, 127
        %v3774 = vpop.permute.xlu0 %3773
        %3775 = vrot.lane.b32.xlu0 %v3248, 127
        %v3776 = vpop.permute.xlu0 %3775
        %3777 = vrot.lane.b32.xlu0 %v3249, 127
        %v3778 = vpop.permute.xlu0 %3777
        %3779 = vrot.lane.b32.xlu0 %v3250, 127
        %v3780 = vpop.permute.xlu0 %3779
        %vm3781 = vcmask 1039360
        %v3782 = vsel %vm3781, %v3770, %v3772
        %v3783 = vsel %vm3781, %v3772, %v3774
        %v3784 = vsel %vm3781, %v3776, %v3778
        %v3785 = vsel %vm3781, %v3778, %v3780
        %v3793 = vsel %vm3288, %v3233, 0
        %v3796 = vsel %vm3288, %v3234, 0
        %3798 = vmatpush.msra.mxu0 0.0
        %3799 = vmatpush.msra.mxu0 0.0
        %3800 = vmatpush.msra.mxu0 0.0
        %3801 = vmatpush.msra.mxu0 0.0
        %3802 = vmatpush.msra.mxu0 0.0
        %3803 = vmatpush.msra.mxu0 0.0
        %3804 = vmatpush.msra.mxu0 0.0
        %3805 = vmatpush.msra.mxu0 0.0
        %3806 = vmatpush.msra.mxu0 0.0
        %3807 = vmatpush.msra.mxu0 0.0
        %3808 = vmatpush.msra.mxu0 0.0
        %3809 = vmatpush.msra.mxu0 0.0
        %3810 = vmatpush.msra.mxu0 0.0
        %3811 = vmatpush.msra.mxu0 0.0
        %3812 = vmatpush.msra.mxu0 %v3784
        %3813 = vmatpush.msra.mxu0 %v3782
        %3814 = vmatmul.f32.gmra.mxu0 %v3793
        %v3815 = vpop.f32.mrf.mxu0
        %v3816 = vadd.f32 0.0, %v3815
        %3817 = vmatmul.f32.gmra.mxu0 %v3796
        %v3818 = vpop.f32.mrf.mxu0
        %v3819 = vadd.f32 0.0, %v3818
        %3820 = vdwg.mxu0
        %3821 = vmatpush.msra.mxu0 0.0
        %3822 = vmatpush.msra.mxu0 0.0
        %3823 = vmatpush.msra.mxu0 0.0
        %3824 = vmatpush.msra.mxu0 0.0
        %3825 = vmatpush.msra.mxu0 0.0
        %3826 = vmatpush.msra.mxu0 0.0
        %3827 = vmatpush.msra.mxu0 0.0
        %3828 = vmatpush.msra.mxu0 0.0
        %3829 = vmatpush.msra.mxu0 0.0
        %3830 = vmatpush.msra.mxu0 0.0
        %3831 = vmatpush.msra.mxu0 0.0
        %3832 = vmatpush.msra.mxu0 0.0
        %3833 = vmatpush.msra.mxu0 0.0
        %3834 = vmatpush.msra.mxu0 0.0
        %3835 = vmatpush.msra.mxu0 %v3785
        %3836 = vmatpush.msra.mxu0 %v3783
        %3837 = vmatmul.f32.gmra.mxu0 %v3793
        %v3838 = vpop.f32.mrf.mxu0
        %v3839 = vadd.f32 0.0, %v3838
        %3840 = vmatmul.f32.gmra.mxu0 %v3796
        %v3841 = vpop.f32.mrf.mxu0
        %v3842 = vadd.f32 0.0, %v3841
        %3843 = vdwg.mxu0
        %3844 = vmatpush.msra.mxu0 0.0
        %3845 = vmatpush.msra.mxu0 0.0
        %3846 = vmatpush.msra.mxu0 0.0
        %3847 = vmatpush.msra.mxu0 0.0
        %3848 = vmatpush.msra.mxu0 0.0
        %3849 = vmatpush.msra.mxu0 0.0
        %3850 = vmatpush.msra.mxu0 0.0
        %3851 = vmatpush.msra.mxu0 0.0
        %3852 = vmatpush.msra.mxu0 0.0
        %3853 = vmatpush.msra.mxu0 0.0
        %3854 = vmatpush.msra.mxu0 0.0
        %3855 = vmatpush.msra.mxu0 0.0
        %3856 = vmatpush.msra.mxu0 0.0
        %3857 = vmatpush.msra.mxu0 0.0
        %3858 = vmatpush.msra.mxu0 %v3780
        %3859 = vmatpush.msra.mxu0 %v3774
        %3860 = vmatmul.f32.gmra.mxu0 %v3793
        %v3861 = vpop.f32.mrf.mxu0
        %v3862 = vadd.f32 0.0, %v3861
        %3863 = vmatmul.f32.gmra.mxu0 %v3796
        %v3864 = vpop.f32.mrf.mxu0
        %v3865 = vadd.f32 0.0, %v3864
        %3866 = vdwg.mxu0
        %v3867 = vadd.f32 %v3763, %v3816
        %v3868 = vadd.f32 %v3764, %v3839
        %v3869 = vadd.f32 %v3765, %v3862
        %v3870 = vadd.f32 %v3766, %v3819
        %v3871 = vadd.f32 %v3767, %v3842
        %v3872 = vadd.f32 %v3768, %v3865
        %3873 = vrot.lane.b32.xlu0 %v3244, 111
        %v3874 = vpop.permute.xlu0 %3873
        %3875 = vrot.lane.b32.xlu0 %v3245, 111
        %v3876 = vpop.permute.xlu0 %3875
        %3877 = vrot.lane.b32.xlu0 %v3246, 111
        %v3878 = vpop.permute.xlu0 %3877
        %3879 = vrot.lane.b32.xlu0 %v3248, 111
        %v3880 = vpop.permute.xlu0 %3879
        %3881 = vrot.lane.b32.xlu0 %v3249, 111
        %v3882 = vpop.permute.xlu0 %3881
        %3883 = vrot.lane.b32.xlu0 %v3250, 111
        %v3884 = vpop.permute.xlu0 %3883
        %vm3885 = vcmask 908288
        %v3886 = vsel %vm3885, %v3874, %v3876
        %v3887 = vsel %vm3885, %v3876, %v3878
        %v3888 = vsel %vm3885, %v3880, %v3882
        %v3889 = vsel %vm3885, %v3882, %v3884
        %v3897 = vsel %vm3288, %v3235, 0
        %v3900 = vsel %vm3288, %v3236, 0
        %3902 = vmatpush.msra.mxu0 0.0
        %3903 = vmatpush.msra.mxu0 0.0
        %3904 = vmatpush.msra.mxu0 0.0
        %3905 = vmatpush.msra.mxu0 0.0
        %3906 = vmatpush.msra.mxu0 0.0
        %3907 = vmatpush.msra.mxu0 0.0
        %3908 = vmatpush.msra.mxu0 0.0
        %3909 = vmatpush.msra.mxu0 0.0
        %3910 = vmatpush.msra.mxu0 0.0
        %3911 = vmatpush.msra.mxu0 0.0
        %3912 = vmatpush.msra.mxu0 0.0
        %3913 = vmatpush.msra.mxu0 0.0
        %3914 = vmatpush.msra.mxu0 0.0
        %3915 = vmatpush.msra.mxu0 0.0
        %3916 = vmatpush.msra.mxu0 %v3888
        %3917 = vmatpush.msra.mxu0 %v3886
        %3918 = vmatmul.f32.gmra.mxu0 %v3897
        %v3919 = vpop.f32.mrf.mxu0
        %v3920 = vadd.f32 0.0, %v3919
        %3921 = vmatmul.f32.gmra.mxu0 %v3900
        %v3922 = vpop.f32.mrf.mxu0
        %v3923 = vadd.f32 0.0, %v3922
        %3924 = vdwg.mxu0
        %3925 = vmatpush.msra.mxu0 0.0
        %3926 = vmatpush.msra.mxu0 0.0
        %3927 = vmatpush.msra.mxu0 0.0
        %3928 = vmatpush.msra.mxu0 0.0
        %3929 = vmatpush.msra.mxu0 0.0
        %3930 = vmatpush.msra.mxu0 0.0
        %3931 = vmatpush.msra.mxu0 0.0
        %3932 = vmatpush.msra.mxu0 0.0
        %3933 = vmatpush.msra.mxu0 0.0
        %3934 = vmatpush.msra.mxu0 0.0
        %3935 = vmatpush.msra.mxu0 0.0
        %3936 = vmatpush.msra.mxu0 0.0
        %3937 = vmatpush.msra.mxu0 0.0
        %3938 = vmatpush.msra.mxu0 0.0
        %3939 = vmatpush.msra.mxu0 %v3889
        %3940 = vmatpush.msra.mxu0 %v3887
        %3941 = vmatmul.f32.gmra.mxu0 %v3897
        %v3942 = vpop.f32.mrf.mxu0
        %v3943 = vadd.f32 0.0, %v3942
        %3944 = vmatmul.f32.gmra.mxu0 %v3900
        %v3945 = vpop.f32.mrf.mxu0
        %v3946 = vadd.f32 0.0, %v3945
        %3947 = vdwg.mxu0
        %3948 = vmatpush.msra.mxu0 0.0
        %3949 = vmatpush.msra.mxu0 0.0
        %3950 = vmatpush.msra.mxu0 0.0
        %3951 = vmatpush.msra.mxu0 0.0
        %3952 = vmatpush.msra.mxu0 0.0
        %3953 = vmatpush.msra.mxu0 0.0
        %3954 = vmatpush.msra.mxu0 0.0
        %3955 = vmatpush.msra.mxu0 0.0
        %3956 = vmatpush.msra.mxu0 0.0
        %3957 = vmatpush.msra.mxu0 0.0
        %3958 = vmatpush.msra.mxu0 0.0
        %3959 = vmatpush.msra.mxu0 0.0
        %3960 = vmatpush.msra.mxu0 0.0
        %3961 = vmatpush.msra.mxu0 0.0
        %3962 = vmatpush.msra.mxu0 %v3884
        %3963 = vmatpush.msra.mxu0 %v3878
        %3964 = vmatmul.f32.gmra.mxu0 %v3897
        %v3965 = vpop.f32.mrf.mxu0
        %v3966 = vadd.f32 0.0, %v3965
        %3967 = vmatmul.f32.gmra.mxu0 %v3900
        %v3968 = vpop.f32.mrf.mxu0
        %v3969 = vadd.f32 0.0, %v3968
        %3970 = vdwg.mxu0
        %v3971 = vadd.f32 %v3867, %v3920
        %v3972 = vadd.f32 %v3868, %v3943
        %v3973 = vadd.f32 %v3869, %v3966
        %v3974 = vadd.f32 %v3870, %v3923
        %v3975 = vadd.f32 %v3871, %v3946
        %v3976 = vadd.f32 %v3872, %v3969
        %3977 = vrot.lane.b32.xlu0 %v3244, 110
        %v3978 = vpop.permute.xlu0 %3977
        %3979 = vrot.lane.b32.xlu0 %v3245, 110
        %v3980 = vpop.permute.xlu0 %3979
        %3981 = vrot.lane.b32.xlu0 %v3246, 110
        %v3982 = vpop.permute.xlu0 %3981
        %3983 = vrot.lane.b32.xlu0 %v3248, 110
        %v3984 = vpop.permute.xlu0 %3983
        %3985 = vrot.lane.b32.xlu0 %v3249, 110
        %v3986 = vpop.permute.xlu0 %3985
        %3987 = vrot.lane.b32.xlu0 %v3250, 110
        %v3988 = vpop.permute.xlu0 %3987
        %vm3989 = vcmask 900096
        %v3990 = vsel %vm3989, %v3978, %v3980
        %v3991 = vsel %vm3989, %v3980, %v3982
        %v3992 = vsel %vm3989, %v3984, %v3986
        %v3993 = vsel %vm3989, %v3986, %v3988
        %v4001 = vsel %vm3288, %v3237, 0
        %v4004 = vsel %vm3288, %v3238, 0
        %4006 = vmatpush.msra.mxu0 0.0
        %4007 = vmatpush.msra.mxu0 0.0
        %4008 = vmatpush.msra.mxu0 0.0
        %4009 = vmatpush.msra.mxu0 0.0
        %4010 = vmatpush.msra.mxu0 0.0
        %4011 = vmatpush.msra.mxu0 0.0
        %4012 = vmatpush.msra.mxu0 0.0
        %4013 = vmatpush.msra.mxu0 0.0
        %4014 = vmatpush.msra.mxu0 0.0
        %4015 = vmatpush.msra.mxu0 0.0
        %4016 = vmatpush.msra.mxu0 0.0
        %4017 = vmatpush.msra.mxu0 0.0
        %4018 = vmatpush.msra.mxu0 0.0
        %4019 = vmatpush.msra.mxu0 0.0
        %4020 = vmatpush.msra.mxu0 %v3992
        %4021 = vmatpush.msra.mxu0 %v3990
        %4022 = vmatmul.f32.gmra.mxu0 %v4001
        %v4023 = vpop.f32.mrf.mxu0
        %v4024 = vadd.f32 0.0, %v4023
        %4025 = vmatmul.f32.gmra.mxu0 %v4004
        %v4026 = vpop.f32.mrf.mxu0
        %v4027 = vadd.f32 0.0, %v4026
        %4028 = vdwg.mxu0
        %4029 = vmatpush.msra.mxu0 0.0
        %4030 = vmatpush.msra.mxu0 0.0
        %4031 = vmatpush.msra.mxu0 0.0
        %4032 = vmatpush.msra.mxu0 0.0
        %4033 = vmatpush.msra.mxu0 0.0
        %4034 = vmatpush.msra.mxu0 0.0
        %4035 = vmatpush.msra.mxu0 0.0
        %4036 = vmatpush.msra.mxu0 0.0
        %4037 = vmatpush.msra.mxu0 0.0
        %4038 = vmatpush.msra.mxu0 0.0
        %4039 = vmatpush.msra.mxu0 0.0
        %4040 = vmatpush.msra.mxu0 0.0
        %4041 = vmatpush.msra.mxu0 0.0
        %4042 = vmatpush.msra.mxu0 0.0
        %4043 = vmatpush.msra.mxu0 %v3993
        %4044 = vmatpush.msra.mxu0 %v3991
        %4045 = vmatmul.f32.gmra.mxu0 %v4001
        %v4046 = vpop.f32.mrf.mxu0
        %v4047 = vadd.f32 0.0, %v4046
        %4048 = vmatmul.f32.gmra.mxu0 %v4004
        %v4049 = vpop.f32.mrf.mxu0
        %v4050 = vadd.f32 0.0, %v4049
        %4051 = vdwg.mxu0
        %4052 = vmatpush.msra.mxu0 0.0
        %4053 = vmatpush.msra.mxu0 0.0
        %4054 = vmatpush.msra.mxu0 0.0
        %4055 = vmatpush.msra.mxu0 0.0
        %4056 = vmatpush.msra.mxu0 0.0
        %4057 = vmatpush.msra.mxu0 0.0
        %4058 = vmatpush.msra.mxu0 0.0
        %4059 = vmatpush.msra.mxu0 0.0
        %4060 = vmatpush.msra.mxu0 0.0
        %4061 = vmatpush.msra.mxu0 0.0
        %4062 = vmatpush.msra.mxu0 0.0
        %4063 = vmatpush.msra.mxu0 0.0
        %4064 = vmatpush.msra.mxu0 0.0
        %4065 = vmatpush.msra.mxu0 0.0
        %4066 = vmatpush.msra.mxu0 %v3988
        %4067 = vmatpush.msra.mxu0 %v3982
        %4068 = vmatmul.f32.gmra.mxu0 %v4001
        %v4069 = vpop.f32.mrf.mxu0
        %v4070 = vadd.f32 0.0, %v4069
        %4071 = vmatmul.f32.gmra.mxu0 %v4004
        %v4072 = vpop.f32.mrf.mxu0
        %v4073 = vadd.f32 0.0, %v4072
        %4074 = vdwg.mxu0
        %v4075 = vadd.f32 %v3971, %v4024
        %v4076 = vadd.f32 %v3972, %v4047
        %v4077 = vadd.f32 %v3973, %v4070
        %v4078 = vadd.f32 %v3974, %v4027
        %v4079 = vadd.f32 %v3975, %v4050
        %v4080 = vadd.f32 %v3976, %v4073
        %4081 = vrot.lane.b32.xlu0 %v3244, 109
        %v4082 = vpop.permute.xlu0 %4081
        %4083 = vrot.lane.b32.xlu0 %v3245, 109
        %v4084 = vpop.permute.xlu0 %4083
        %4085 = vrot.lane.b32.xlu0 %v3246, 109
        %v4086 = vpop.permute.xlu0 %4085
        %4087 = vrot.lane.b32.xlu0 %v3248, 109
        %v4088 = vpop.permute.xlu0 %4087
        %4089 = vrot.lane.b32.xlu0 %v3249, 109
        %v4090 = vpop.permute.xlu0 %4089
        %4091 = vrot.lane.b32.xlu0 %v3250, 109
        %v4092 = vpop.permute.xlu0 %4091
        %vm4093 = vcmask 891904
        %v4094 = vsel %vm4093, %v4082, %v4084
        %v4095 = vsel %vm4093, %v4084, %v4086
        %v4096 = vsel %vm4093, %v4088, %v4090
        %v4097 = vsel %vm4093, %v4090, %v4092
        %v4105 = vsel %vm3288, %v3239, 0
        %v4108 = vsel %vm3288, %v3240, 0
        %4110 = vmatpush.msra.mxu0 0.0
        %4111 = vmatpush.msra.mxu0 0.0
        %4112 = vmatpush.msra.mxu0 0.0
        %4113 = vmatpush.msra.mxu0 0.0
        %4114 = vmatpush.msra.mxu0 0.0
        %4115 = vmatpush.msra.mxu0 0.0
        %4116 = vmatpush.msra.mxu0 0.0
        %4117 = vmatpush.msra.mxu0 0.0
        %4118 = vmatpush.msra.mxu0 0.0
        %4119 = vmatpush.msra.mxu0 0.0
        %4120 = vmatpush.msra.mxu0 0.0
        %4121 = vmatpush.msra.mxu0 0.0
        %4122 = vmatpush.msra.mxu0 0.0
        %4123 = vmatpush.msra.mxu0 0.0
        %4124 = vmatpush.msra.mxu0 %v4096
        %4125 = vmatpush.msra.mxu0 %v4094
        %4126 = vmatmul.f32.gmra.mxu0 %v4105
        %v4127 = vpop.f32.mrf.mxu0
        %v4128 = vadd.f32 0.0, %v4127
        %4129 = vmatmul.f32.gmra.mxu0 %v4108
        %v4130 = vpop.f32.mrf.mxu0
        %v4131 = vadd.f32 0.0, %v4130
        %4132 = vdwg.mxu0
        %4133 = vmatpush.msra.mxu0 0.0
        %4134 = vmatpush.msra.mxu0 0.0
        %4135 = vmatpush.msra.mxu0 0.0
        %4136 = vmatpush.msra.mxu0 0.0
        %4137 = vmatpush.msra.mxu0 0.0
        %4138 = vmatpush.msra.mxu0 0.0
        %4139 = vmatpush.msra.mxu0 0.0
        %4140 = vmatpush.msra.mxu0 0.0
        %4141 = vmatpush.msra.mxu0 0.0
        %4142 = vmatpush.msra.mxu0 0.0
        %4143 = vmatpush.msra.mxu0 0.0
        %4144 = vmatpush.msra.mxu0 0.0
        %4145 = vmatpush.msra.mxu0 0.0
        %4146 = vmatpush.msra.mxu0 0.0
        %4147 = vmatpush.msra.mxu0 %v4097
        %4148 = vmatpush.msra.mxu0 %v4095
        %4149 = vmatmul.f32.gmra.mxu0 %v4105
        %v4150 = vpop.f32.mrf.mxu0
        %v4151 = vadd.f32 0.0, %v4150
        %4152 = vmatmul.f32.gmra.mxu0 %v4108
        %v4153 = vpop.f32.mrf.mxu0
        %v4154 = vadd.f32 0.0, %v4153
        %4155 = vdwg.mxu0
        %4156 = vmatpush.msra.mxu0 0.0
        %4157 = vmatpush.msra.mxu0 0.0
        %4158 = vmatpush.msra.mxu0 0.0
        %4159 = vmatpush.msra.mxu0 0.0
        %4160 = vmatpush.msra.mxu0 0.0
        %4161 = vmatpush.msra.mxu0 0.0
        %4162 = vmatpush.msra.mxu0 0.0
        %4163 = vmatpush.msra.mxu0 0.0
        %4164 = vmatpush.msra.mxu0 0.0
        %4165 = vmatpush.msra.mxu0 0.0
        %4166 = vmatpush.msra.mxu0 0.0
        %4167 = vmatpush.msra.mxu0 0.0
        %4168 = vmatpush.msra.mxu0 0.0
        %4169 = vmatpush.msra.mxu0 0.0
        %4170 = vmatpush.msra.mxu0 %v4092
        %4171 = vmatpush.msra.mxu0 %v4086
        %4172 = vmatmul.f32.gmra.mxu0 %v4105
        %v4173 = vpop.f32.mrf.mxu0
        %v4174 = vadd.f32 0.0, %v4173
        %4175 = vmatmul.f32.gmra.mxu0 %v4108
        %v4176 = vpop.f32.mrf.mxu0
        %v4177 = vadd.f32 0.0, %v4176
        %4178 = vdwg.mxu0
        %v4179 = vadd.f32 %v4075, %v4128
        %v4180 = vadd.f32 %v4076, %v4151
        %v4181 = vadd.f32 %v4077, %v4174
        %v4182 = vadd.f32 %v4078, %v4131
        %v4183 = vadd.f32 %v4079, %v4154
        %v4184 = vadd.f32 %v4080, %v4177
        %4186 = vset.pattern.permute.xlu0 0
        %4187 = vperm.xlu0 %4186, %v3241
        %v4188 = vpop.permute.xlu0 %4187
        %4191 = vset.pattern.permute.xlu0 0
        %4192 = vperm.xlu0 %4191, %v3242
        %v4193 = vpop.permute.xlu0 %4192
        %v4195 = vadd.f32 %v4179, %v4188
        %v4196 = vadd.f32 %v4180, %v4188
        %v4197 = vadd.f32 %v4181, %v4188
        %v4198 = vadd.f32 %v4182, %v4193
        %v4199 = vadd.f32 %v4183, %v4193
        %v4200 = vadd.f32 %v4184, %v4193
        %v4201 = vmul.f32 %v4195, 1.442695
        %v4202 = vpow.pop %v4201
        %v4203 = vmul.f32 %v4196, 1.442695
        %v4204 = vpow.pop %v4203
        %v4205 = vmul.f32 %v4197, 1.442695
        %v4206 = vpow.pop %v4205
        %v4207 = vmul.f32 %v4198, 1.442695
        %v4208 = vpow.pop %v4207
        %v4209 = vmul.f32 %v4199, 1.442695
        %v4210 = vpow.pop %v4209
        %v4211 = vmul.f32 %v4200, 1.442695
        %v4212 = vpow.pop %v4211
        %v4213 = vmul.f32 %v4195, 2.0
        %v4214 = vmul.f32 %v4196, 2.0
        %v4215 = vmul.f32 %v4197, 2.0
        %v4216 = vmul.f32 %v4198, 2.0
        %v4217 = vmul.f32 %v4199, 2.0
        %v4218 = vmul.f32 %v4200, 2.0
        %v4219 = vadd.f32 %v4202, 2.0
        %v4220 = vadd.f32 %v4204, 2.0
        %v4221 = vadd.f32 %v4206, 2.0
        %v4222 = vadd.f32 %v4208, 2.0
        %v4223 = vadd.f32 %v4210, 2.0
        %v4224 = vadd.f32 %v4212, 2.0
        %v4225 = vmul.f32 %v4202, %v4219
        %v4226 = vmul.f32 %v4204, %v4220
        %v4227 = vmul.f32 %v4206, %v4221
        %v4228 = vmul.f32 %v4208, %v4222
        %v4229 = vmul.f32 %v4210, %v4223
        %v4230 = vmul.f32 %v4212, %v4224
        %v4231 = vadd.f32 %v4225, 2.0
        %v4232 = vadd.f32 %v4226, 2.0
        %v4233 = vadd.f32 %v4227, 2.0
        %v4234 = vadd.f32 %v4228, 2.0
        %v4235 = vadd.f32 %v4229, 2.0
        %v4236 = vadd.f32 %v4230, 2.0
        %v4237 = vrcp.pop %v4231
        %v4238 = vmul.f32 %v4231, %v4237
        %v4239 = vsub.f32 1.0, %v4238
        %v4240 = vmul.f32 %v4237, %v4239
        %v4241 = vadd.f32 %v4237, %v4240
        %vm4242 = vweird.f32 %v4231
        %vm4243 = vweird.f32 %v4237
        %vm4244 = vmor %vm4242, %vm4243
        %v4245 = vsel %vm4244, %v4237, %v4241
        %v4246 = vand.u32 2147483647, %v4231
        %vm4247 = vcmp.eq.f32.partialorder %v4246, 8.507059e+37
        %v4248 = vand.u32 %v4231, 2147483648
        %v4249 = vor.u32 1.1754944e-38, %v4248
        %v4250 = vsel %vm4247, %v4249, %v4245
        %v4251 = vmul.f32 %v4213, %v4250
        %v4252 = vrcp.pop %v4232
        %v4253 = vmul.f32 %v4232, %v4252
        %v4254 = vsub.f32 1.0, %v4253
        %v4255 = vmul.f32 %v4252, %v4254
        %v4256 = vadd.f32 %v4252, %v4255
        %vm4257 = vweird.f32 %v4232
        %vm4258 = vweird.f32 %v4252
        %vm4259 = vmor %vm4257, %vm4258
        %v4260 = vsel %vm4259, %v4252, %v4256
        %v4261 = vand.u32 2147483647, %v4232
        %vm4262 = vcmp.eq.f32.partialorder %v4261, 8.507059e+37
        %v4263 = vand.u32 %v4232, 2147483648
        %v4264 = vor.u32 1.1754944e-38, %v4263
        %v4265 = vsel %vm4262, %v4264, %v4260
        %v4266 = vmul.f32 %v4214, %v4265
        %v4267 = vrcp.pop %v4233
        %v4268 = vmul.f32 %v4233, %v4267
        %v4269 = vsub.f32 1.0, %v4268
        %v4270 = vmul.f32 %v4267, %v4269
        %v4271 = vadd.f32 %v4267, %v4270
        %vm4272 = vweird.f32 %v4233
        %vm4273 = vweird.f32 %v4267
        %vm4274 = vmor %vm4272, %vm4273
        %v4275 = vsel %vm4274, %v4267, %v4271
        %v4276 = vand.u32 2147483647, %v4233
        %vm4277 = vcmp.eq.f32.partialorder %v4276, 8.507059e+37
        %v4278 = vand.u32 %v4233, 2147483648
        %v4279 = vor.u32 1.1754944e-38, %v4278
        %v4280 = vsel %vm4277, %v4279, %v4275
        %v4281 = vmul.f32 %v4215, %v4280
        %v4282 = vrcp.pop %v4234
        %v4283 = vmul.f32 %v4234, %v4282
        %v4284 = vsub.f32 1.0, %v4283
        %v4285 = vmul.f32 %v4282, %v4284
        %v4286 = vadd.f32 %v4282, %v4285
        %vm4287 = vweird.f32 %v4234
        %vm4288 = vweird.f32 %v4282
        %vm4289 = vmor %vm4287, %vm4288
        %v4290 = vsel %vm4289, %v4282, %v4286
        %v4291 = vand.u32 2147483647, %v4234
        %vm4292 = vcmp.eq.f32.partialorder %v4291, 8.507059e+37
        %v4293 = vand.u32 %v4234, 2147483648
        %v4294 = vor.u32 1.1754944e-38, %v4293
        %v4295 = vsel %vm4292, %v4294, %v4290
        %v4296 = vmul.f32 %v4216, %v4295
        %v4297 = vrcp.pop %v4235
        %v4298 = vmul.f32 %v4235, %v4297
        %v4299 = vsub.f32 1.0, %v4298
        %v4300 = vmul.f32 %v4297, %v4299
        %v4301 = vadd.f32 %v4297, %v4300
        %vm4302 = vweird.f32 %v4235
        %vm4303 = vweird.f32 %v4297
        %vm4304 = vmor %vm4302, %vm4303
        %v4305 = vsel %vm4304, %v4297, %v4301
        %v4306 = vand.u32 2147483647, %v4235
        %vm4307 = vcmp.eq.f32.partialorder %v4306, 8.507059e+37
        %v4308 = vand.u32 %v4235, 2147483648
        %v4309 = vor.u32 1.1754944e-38, %v4308
        %v4310 = vsel %vm4307, %v4309, %v4305
        %v4311 = vmul.f32 %v4217, %v4310
        %v4312 = vrcp.pop %v4236
        %v4313 = vmul.f32 %v4236, %v4312
        %v4314 = vsub.f32 1.0, %v4313
        %v4315 = vmul.f32 %v4312, %v4314
        %v4316 = vadd.f32 %v4312, %v4315
        %vm4317 = vweird.f32 %v4236
        %vm4318 = vweird.f32 %v4312
        %vm4319 = vmor %vm4317, %vm4318
        %v4320 = vsel %vm4319, %v4312, %v4316
        %v4321 = vand.u32 2147483647, %v4236
        %vm4322 = vcmp.eq.f32.partialorder %v4321, 8.507059e+37
        %v4323 = vand.u32 %v4236, 2147483648
        %v4324 = vor.u32 1.1754944e-38, %v4323
        %v4325 = vsel %vm4322, %v4324, %v4320
        %v4326 = vmul.f32 %v4218, %v4325
        %v4327 = vsub.f32 %v4195, %v4251
        %v4328 = vsub.f32 %v4196, %v4266
        %v4329 = vsub.f32 %v4197, %v4281
        %v4330 = vsub.f32 %v4198, %v4296
        %v4331 = vsub.f32 %v4199, %v4311
        %v4332 = vsub.f32 %v4200, %v4326
        %v4333 = vadd.f32 %v4327, %v524
        %v4334 = vadd.f32 %v4328, %v525
        %v4335 = vadd.f32 %v4329, %v526
        %v4336 = vadd.f32 %v4330, %v527
        %v4337 = vadd.f32 %v4331, %v528
        %v4338 = vadd.f32 %v4332, %v529
        %v4339 = vmul.f32 %v4333, %v3204
        %v4340 = vmul.f32 %v4334, %v3205
        %v4341 = vmul.f32 %v4335, %v3206
        %v4342 = vmul.f32 %v4336, %v3204
        %v4343 = vmul.f32 %v4337, %v3205
        %v4344 = vmul.f32 %v4338, %v3206
        %4345 = vst [vmem:[%s510] sm:$0xff] %v4339
        %4346 = vst [vmem:[%s510 + $0x8] sm:$0xff] %v4340
        %4347 = vst.msk [vmem:[%s510 + $0x10] sm:$0xff] %vm3218, %v4341
        %4348 = vst [vmem:[%s510 + $0x18] sm:$0xff] %v4342
        %4349 = vst [vmem:[%s510 + $0x20] sm:$0xff] %v4343
        %4350 = vst.msk [vmem:[%s510 + $0x28] sm:$0xff] %vm3218, %v4344
        %s4351 = sand.u32 %s318, 1
        %s4352 = scalar_lea.sflag [#allocation7], %s4351
        %s4353 = sand.u32 %s318, 1
        %s4354 = smul.addr %s4353, 48
        %s4355 = scalar_lea.vmem [#allocation13], %s4354
        // Predicated region
        $region96: #{tpu_custom_call.1} parent=71 // pred_check
          %p4356 = pneg %p328
        $region97: #{tpu_custom_call.1} parent=71 // pred_check_branch
          %4358 = sbr.rel (%p4356) target = $region99
        $region98: #{tpu_custom_call.1} parent=71 // pred_region
          %4360 = vsyncadd %s4352, 0
          %s4361 = smul.addr %s32, 6
          %s4362 = smul.addr %s4361, 8
          %s4363 = scalar_lea.hbm %s13, %s4362
          %s4364 = sshll.u32 %s4355, 4
          %s4365 = int_to_ptr.vmem [resolvable:$true] %s4364
          %s4366 = sshll.u32 %s4363, 4
          %s4367 = int_to_ptr.hbm [resolvable:$true] %s4366
          %4372 = dma.vmem_to_hbm [thread:$0]  %s4365, 768, %s4367, %s4352, 384, 384, 24
        $region99: #{tpu_custom_call.1} parent=71 // pred_fallthru
          _
      $region72: #{tpu_custom_call.1} parent=5 // pred_fallthru
        _
      %p4373 = scmp.le.s32.totalorder 2, %s27
      // Predicated region
      $region100: #{tpu_custom_call.1} parent=5 // pred_check
        %p4374 = pneg %p4373
      $region101: #{tpu_custom_call.1} parent=5 // pred_check_branch
        %4376 = sbr.rel (%p4374) target = $region103
      $region102: #{tpu_custom_call.1} parent=5 // pred_region
        %s4377 = ssub.s32 %s27, 2
        // Predicated region
        $region104: #{tpu_custom_call.1} parent=102 // pred_check
          %p4378 = pneg %p334
        $region105: #{tpu_custom_call.1} parent=102 // pred_check_branch
          %4380 = sbr.rel (%p4378) target = $region107
        $region106: #{tpu_custom_call.1} parent=102 // pred_region
          %s4381 = sand.u32 %s319, 1
          %s4382 = scalar_lea.sflag [#allocation7], %s4381
          %s4383 = sand.u32 %s319, 1
          %s4384 = smul.addr %s4383, 48
          %s4385 = scalar_lea.vmem [#allocation13], %s4384
          %4387 = dma.done %s4382, 768
        $region107: #{tpu_custom_call.1} parent=102 // pred_fallthru
          _
      $region103: #{tpu_custom_call.1} parent=5 // pred_fallthru
        _
    $region6: #{tpu_custom_call.1} parent=1 // loop_footer
      %s31 = sadd.s32 1, %s27
    $region7: #{tpu_custom_call.1} parent=1 // loop_footer_branch
      %26 = sbr.rel target = $region3
    $region8: #{tpu_custom_call.1} parent=1 // loop_exit
      _
    %4388 = vsyncpa [#allocation6], 1
    %s4389 = scalar_lea.sflag [#allocation6], 1
    %4390 = vsyncpa %s4389, 1
    %4391 = vsyncpa [#allocation9], 1
    %4392 = vsyncpa [#allocation12], 1
    %4393 = vsyncpa [#allocation7], 1
    %s4394 = scalar_lea.sflag [#allocation7], 1
    %4395 = vsyncpa %s4394, 1

</llo_original>
